<compile_context>
chip_gen: v6e
topology: v6e:2x2x1
jax: 0.10.0
libtpu: 0.0.40
codegen_flags: <defaults>
</compile_context>

<pallas_src>
import functools

import jax
import jax.numpy as jnp
from jax import lax
from jax.experimental import pallas as pl
from jax.experimental.pallas import tpu as pltpu

# ----- tiny BERT config (synthetic; BertModel.from_pretrained not reproducible) -----
VOCAB = 100                       # ids sampled from [0, VOCAB)
VOCAB_PAD = 128                   # word-embedding rows padded to a lane-aligned count
HIDDEN = 32
HEADS = 2
HEAD_DIM = HIDDEN // HEADS
INTER = 64
LAYERS = 2
MAX_POS = 16
NUM_CLASSES = 3
PAD_N = 128                       # lane-dense classifier output width (sliced back to 3)
EPS = 1e-12
ATTN_SCALE = 1.0 / (HEAD_DIM ** 0.5)
NEG_INF = -1e9


# --------------------------- in-kernel helpers ---------------------------

def _layernorm(x, g, b):
    mu = jnp.mean(x, axis=-1, keepdims=True)
    var = jnp.mean(jnp.square(x - mu), axis=-1, keepdims=True)
    return (x - mu) * lax.rsqrt(var + EPS) * g + b


def _gelu_tanh(x):
    # TODO(synk): HF BERT's default is exact erf-GELU; tanh approximation keeps this on the EUP.
    c = 0.7978845608028654  # sqrt(2/pi)
    return 0.5 * x * (1.0 + jnp.tanh(c * (x + 0.044715 * x * x * x)))


# --------------------------- fused forward kernel ---------------------------

def _bert_kernel(ids_ref, mask_ref,
                 word_emb_ref, pos_emb_ref, type_emb_ref,
                 emb_ln_g_ref, emb_ln_b_ref,
                 qkv_w_ref, qkv_b_ref,
                 ao_w_ref, ao_b_ref,
                 attn_ln_g_ref, attn_ln_b_ref,
                 i_w_ref, i_b_ref,
                 o_w_ref, o_b_ref,
                 out_ln_g_ref, out_ln_b_ref,
                 pool_w_ref, pool_b_ref,
                 fc_w_ref, fc_b_ref,
                 out_ref, *, batch, seq):
    f32 = jnp.float32
    n = batch * seq

    # ---- embeddings: one-hot gather on the MXU (no JAX glue / HBM round trip) ----
    onehot = (ids_ref[...] ==
              lax.broadcasted_iota(jnp.int32, (n, VOCAB_PAD), 1)).astype(f32)
    emb = jnp.dot(onehot, word_emb_ref[...], preferred_element_type=f32)   # (N, HIDDEN)
    pos = pos_emb_ref[0:seq, :]                                            # (S, HIDDEN)
    emb = emb + jnp.concatenate([pos] * batch, axis=0)                     # positions per batch
    # TODO(synk): token_type_ids are assumed all-zero (reference call passes none).
    emb = emb + type_emb_ref[0:1, :]
    # TODO(synk): embedding / attention / hidden / classifier dropouts are identity in eval mode.
    x = _layernorm(emb, emb_ln_g_ref[...], emb_ln_b_ref[...])              # (N, HIDDEN)

    # additive attention mask, head-major (H*B, 1, S) for the batched score einsum
    add_mask = (1.0 - mask_ref[...]) * NEG_INF                             # (B, 1, S)
    mask_hb = jnp.concatenate([add_mask] * HEADS, axis=0)                  # (H*B, 1, S)

    for l in range(LAYERS):
        # ---- fused QKV projection: one (HIDDEN, 3*HIDDEN) matmul ----
        qkv = jnp.dot(x, qkv_w_ref[l], preferred_element_type=f32) + qkv_b_ref[l]

        # ---- head-major (H*B, S, D) views; attention batched over all (head, batch) pairs ----
        def heads(base):
            return jnp.concatenate(
                [qkv[:, base + h * HEAD_DIM: base + (h + 1) * HEAD_DIM]
                 .reshape(batch, seq, HEAD_DIM) for h in range(HEADS)], axis=0)

        q = heads(0)
        k = heads(HIDDEN)
        v = heads(2 * HIDDEN)

        s = jnp.einsum('bqd,bkd->bqk', q, k, preferred_element_type=f32)
        s = s * ATTN_SCALE + mask_hb
        s = s - jnp.max(s, axis=-1, keepdims=True)
        p = jnp.exp(s)
        p = p * pl.reciprocal(jnp.sum(p, axis=-1, keepdims=True), approx=True)
        ctx = jnp.einsum('bqk,bkd->bqd', p, v, preferred_element_type=f32)  # (H*B, S, D)

        # reassemble the (N, HIDDEN) context in registers (no scratch, no masked stores)
        ctx2 = jnp.concatenate(
            [ctx[h * batch:(h + 1) * batch].reshape(n, HEAD_DIM)
             for h in range(HEADS)], axis=-1)

        # ---- attention output projection + residual + layernorm ----
        attn_out = jnp.dot(ctx2, ao_w_ref[l], preferred_element_type=f32) + ao_b_ref[l]
        x = _layernorm(attn_out + x, attn_ln_g_ref[l], attn_ln_b_ref[l])

        # ---- feed forward + residual + layernorm ----
        inter = _gelu_tanh(jnp.dot(x, i_w_ref[l], preferred_element_type=f32) + i_b_ref[l])
        ffn_out = jnp.dot(inter, o_w_ref[l], preferred_element_type=f32) + o_b_ref[l]
        x = _layernorm(ffn_out + x, out_ln_g_ref[l], out_ln_b_ref[l])

    # ---- pooler + classifier on ALL rows (trivial MXU pass, lane-dense store);
    #      the CLS rows are selected with a strided slice outside the kernel.
    pooled = jnp.tanh(jnp.dot(x, pool_w_ref[...], preferred_element_type=f32)
                      + pool_b_ref[...])
    logits = jnp.dot(pooled, fc_w_ref[...], preferred_element_type=f32) + fc_b_ref[...]
    out_ref[...] = logits.astype(out_ref.dtype)


def _full_spec(shape):
    nd = len(shape)
    return pl.BlockSpec(shape, lambda *_: (0,) * nd)


# --------------------------- parameter init ---------------------------

def init_params(key):
    def nrm(k, shape, scale=0.02):
        return (scale * jax.random.normal(k, shape)).astype(jnp.float32)

    ks = jax.random.split(key, 9)
    fc_w = nrm(ks[8], (HIDDEN, NUM_CLASSES))
    fc_b = jnp.zeros((NUM_CLASSES,), jnp.float32)
    # padded lane-dense classifier weights built ONCE here (hoisted out of the forward)
    fc_w_pad = jnp.zeros((HIDDEN, PAD_N), jnp.float32).at[:, :NUM_CLASSES].set(fc_w)
    fc_b_pad = jnp.zeros((1, PAD_N), jnp.float32).at[0, :NUM_CLASSES].set(fc_b)
    return {
        "word_emb": nrm(ks[0], (VOCAB_PAD, HIDDEN)),   # rows >= VOCAB never addressed
        "pos_emb": nrm(ks[1], (MAX_POS, HIDDEN)),
        "type_emb": nrm(ks[2], (2, HIDDEN)),
        "emb_ln_g": jnp.ones((1, HIDDEN), jnp.float32),
        "emb_ln_b": jnp.zeros((1, HIDDEN), jnp.float32),
        # per-layer weights stacked with a leading LAYERS dim; q/k/v fused along columns
        "qkv_w": nrm(ks[3], (LAYERS, HIDDEN, 3 * HIDDEN)),
        "qkv_b": jnp.zeros((LAYERS, 1, 3 * HIDDEN), jnp.float32),
        "ao_w": nrm(ks[4], (LAYERS, HIDDEN, HIDDEN)),
        "ao_b": jnp.zeros((LAYERS, 1, HIDDEN), jnp.float32),
        "attn_ln_g": jnp.ones((LAYERS, 1, HIDDEN), jnp.float32),
        "attn_ln_b": jnp.zeros((LAYERS, 1, HIDDEN), jnp.float32),
        "i_w": nrm(ks[5], (LAYERS, HIDDEN, INTER)),
        "i_b": jnp.zeros((LAYERS, 1, INTER), jnp.float32),
        "o_w": nrm(ks[6], (LAYERS, INTER, HIDDEN)),
        "o_b": jnp.zeros((LAYERS, 1, HIDDEN), jnp.float32),
        "out_ln_g": jnp.ones((LAYERS, 1, HIDDEN), jnp.float32),
        "out_ln_b": jnp.zeros((LAYERS, 1, HIDDEN), jnp.float32),
        "pool_w": nrm(ks[7], (HIDDEN, HIDDEN)),
        "pool_b": jnp.zeros((1, HIDDEN), jnp.float32),
        "fc_w_pad": fc_w_pad,
        "fc_b_pad": fc_b_pad,
    }


# --------------------------- forward pass ---------------------------

def bert_classifier_forward(params, input_ids, attention_mask):
    B, S = input_ids.shape

    # the only per-step host glue: shape the integer inputs for the kernel
    ids = input_ids.reshape(B * S, 1).astype(jnp.int32)
    mask = attention_mask.reshape(B, 1, S).astype(jnp.float32)

    inputs = (ids, mask,
              params["word_emb"], params["pos_emb"], params["type_emb"],
              params["emb_ln_g"], params["emb_ln_b"],
              params["qkv_w"], params["qkv_b"],
              params["ao_w"], params["ao_b"],
              params["attn_ln_g"], params["attn_ln_b"],
              params["i_w"], params["i_b"],
              params["o_w"], params["o_b"],
              params["out_ln_g"], params["out_ln_b"],
              params["pool_w"], params["pool_b"],
              params["fc_w_pad"], params["fc_b_pad"])

    logits_all = pl.pallas_call(
        functools.partial(_bert_kernel, batch=B, seq=S),
        out_shape=jax.ShapeDtypeStruct((B * S, PAD_N), jnp.float32),
        grid=(1,),
        in_specs=[_full_spec(a.shape) for a in inputs],
        out_specs=_full_spec((B * S, PAD_N)),
        compiler_params=pltpu.CompilerParams(
            dimension_semantics=("arbitrary",)),
    )(*inputs)

    # CLS rows (stride = seq) and the real class columns
    return logits_all[0::S, :NUM_CLASSES]


# --------------------------- main ---------------------------

if __name__ == "__main__":
    key = jax.random.PRNGKey(0)
    k_param, k_ids = jax.random.split(key)

    params = init_params(k_param)

    B, S = 2, 8
    input_ids = jax.random.randint(k_ids, (B, S), 0, VOCAB, dtype=jnp.int32)
    # second sequence has padding on the last 3 positions
    attention_mask = jnp.array(
        [[1, 1, 1, 1, 1, 1, 1, 1],
         [1, 1, 1, 1, 1, 0, 0, 0]], dtype=jnp.int32)

    logits = jax.jit(bert_classifier_forward)(params, input_ids, attention_mask)
    logits = jax.block_until_ready(logits)

    assert logits.shape == (B, NUM_CLASSES)
    assert bool(jnp.all(jnp.isfinite(logits)))
    print("KERNEL_OK")
</pallas_src>

<mosaic_0001>
module attributes {stable_mosaic.version = 11 : i64} {
  func.func @_bert_kernel(%arg0: i32, %arg1: memref<16x1xi32, #tpu.memory_space<vmem>>, %arg2: memref<2x1x8xf32, #tpu.memory_space<vmem>>, %arg3: memref<128x32xf32, #tpu.memory_space<vmem>>, %arg4: memref<16x32xf32, #tpu.memory_space<vmem>>, %arg5: memref<2x32xf32, #tpu.memory_space<vmem>>, %arg6: memref<1x32xf32, #tpu.memory_space<vmem>>, %arg7: memref<1x32xf32, #tpu.memory_space<vmem>>, %arg8: memref<2x32x96xf32, #tpu.memory_space<vmem>>, %arg9: memref<2x1x96xf32, #tpu.memory_space<vmem>>, %arg10: memref<2x32x32xf32, #tpu.memory_space<vmem>>, %arg11: memref<2x1x32xf32, #tpu.memory_space<vmem>>, %arg12: memref<2x1x32xf32, #tpu.memory_space<vmem>>, %arg13: memref<2x1x32xf32, #tpu.memory_space<vmem>>, %arg14: memref<2x32x64xf32, #tpu.memory_space<vmem>>, %arg15: memref<2x1x64xf32, #tpu.memory_space<vmem>>, %arg16: memref<2x64x32xf32, #tpu.memory_space<vmem>>, %arg17: memref<2x1x32xf32, #tpu.memory_space<vmem>>, %arg18: memref<2x1x32xf32, #tpu.memory_space<vmem>>, %arg19: memref<2x1x32xf32, #tpu.memory_space<vmem>>, %arg20: memref<32x32xf32, #tpu.memory_space<vmem>>, %arg21: memref<1x32xf32, #tpu.memory_space<vmem>>, %arg22: memref<32x128xf32, #tpu.memory_space<vmem>>, %arg23: memref<1x128xf32, #tpu.memory_space<vmem>>, %arg24: memref<16x128xf32, #tpu.memory_space<vmem>>) attributes {dimension_semantics = [#tpu.dimension_semantics<arbitrary>], iteration_bounds = array<i64: 1>, scalar_prefetch = 0 : i64, scratch_operands = 0 : i64, tpu.core_type = #tpu.core_type<tc>, window_params = [{pipeline_mode = #tpu.pipeline_mode<synchronous>, transform_indices = @transform_0, window_bounds = array<i64: 16, 1>}, {pipeline_mode = #tpu.pipeline_mode<synchronous>, transform_indices = @transform_1, window_bounds = array<i64: 2, 1, 8>}, {pipeline_mode = #tpu.pipeline_mode<synchronous>, transform_indices = @transform_2, window_bounds = array<i64: 128, 32>}, {pipeline_mode = #tpu.pipeline_mode<synchronous>, transform_indices = @transform_3, window_bounds = array<i64: 16, 32>}, {pipeline_mode = #tpu.pipeline_mode<synchronous>, transform_indices = @transform_4, window_bounds = array<i64: 2, 32>}, {pipeline_mode = #tpu.pipeline_mode<synchronous>, transform_indices = @transform_5, window_bounds = array<i64: 1, 32>}, {pipeline_mode = #tpu.pipeline_mode<synchronous>, transform_indices = @transform_6, window_bounds = array<i64: 1, 32>}, {pipeline_mode = #tpu.pipeline_mode<synchronous>, transform_indices = @transform_7, window_bounds = array<i64: 2, 32, 96>}, {pipeline_mode = #tpu.pipeline_mode<synchronous>, transform_indices = @transform_8, window_bounds = array<i64: 2, 1, 96>}, {pipeline_mode = #tpu.pipeline_mode<synchronous>, transform_indices = @transform_9, window_bounds = array<i64: 2, 32, 32>}, {pipeline_mode = #tpu.pipeline_mode<synchronous>, transform_indices = @transform_10, window_bounds = array<i64: 2, 1, 32>}, {pipeline_mode = #tpu.pipeline_mode<synchronous>, transform_indices = @transform_11, window_bounds = array<i64: 2, 1, 32>}, {pipeline_mode = #tpu.pipeline_mode<synchronous>, transform_indices = @transform_12, window_bounds = array<i64: 2, 1, 32>}, {pipeline_mode = #tpu.pipeline_mode<synchronous>, transform_indices = @transform_13, window_bounds = array<i64: 2, 32, 64>}, {pipeline_mode = #tpu.pipeline_mode<synchronous>, transform_indices = @transform_14, window_bounds = array<i64: 2, 1, 64>}, {pipeline_mode = #tpu.pipeline_mode<synchronous>, transform_indices = @transform_15, window_bounds = array<i64: 2, 64, 32>}, {pipeline_mode = #tpu.pipeline_mode<synchronous>, transform_indices = @transform_16, window_bounds = array<i64: 2, 1, 32>}, {pipeline_mode = #tpu.pipeline_mode<synchronous>, transform_indices = @transform_17, window_bounds = array<i64: 2, 1, 32>}, {pipeline_mode = #tpu.pipeline_mode<synchronous>, transform_indices = @transform_18, window_bounds = array<i64: 2, 1, 32>}, {pipeline_mode = #tpu.pipeline_mode<synchronous>, transform_indices = @transform_19, window_bounds = array<i64: 32, 32>}, {pipeline_mode = #tpu.pipeline_mode<synchronous>, transform_indices = @transform_20, window_bounds = array<i64: 1, 32>}, {pipeline_mode = #tpu.pipeline_mode<synchronous>, transform_indices = @transform_21, window_bounds = array<i64: 32, 128>}, {pipeline_mode = #tpu.pipeline_mode<synchronous>, transform_indices = @transform_22, window_bounds = array<i64: 1, 128>}, {pipeline_mode = #tpu.pipeline_mode<synchronous>, transform_indices = @transform_23, window_bounds = array<i64: 16, 128>}]} {
    %c0 = arith.constant 0 : index
    %c0_0 = arith.constant 0 : index
    %0 = vector.load %arg1[%c0, %c0_0] : memref<16x1xi32, #tpu.memory_space<vmem>>, vector<16x1xi32>
    %1 = tpu.iota {dimensions = array<i32: 1>} : vector<16x128xi32>
    %2 = vector.broadcast %0 : vector<16x1xi32> to vector<16x128xi32>
    %3 = arith.cmpi eq, %2, %1 : vector<16x128xi32>
    %4 = arith.extui %3 : vector<16x128xi1> to vector<16x128xi32>
    %5 = arith.sitofp %4 : vector<16x128xi32> to vector<16x128xf32>
    %c0_1 = arith.constant 0 : index
    %c0_2 = arith.constant 0 : index
    %6 = vector.load %arg3[%c0_1, %c0_2] : memref<128x32xf32, #tpu.memory_space<vmem>>, vector<128x32xf32>
    %cst = arith.constant dense<0.000000e+00> : vector<16x32xf32>
    %7 = tpu.matmul %5, %6, %cst {dimension_numbers = #tpu.dot_dimension_numbers<[1], [0], [0], [1], [0, 0, 1, 1], [], []>} : vector<16x128xf32>, vector<128x32xf32>, vector<16x32xf32> -> vector<16x32xf32>
    %c0_3 = arith.constant 0 : index
    %c0_4 = arith.constant 0 : index
    %8 = vector.load %arg4[%c0_3, %c0_4] : memref<16x32xf32, #tpu.memory_space<vmem>>, vector<8x32xf32>
    %9 = tpu.concatenate %8, %8 in 0 : vector<8x32xf32>, vector<8x32xf32> -> vector<16x32xf32>
    %10 = arith.addf %7, %9 : vector<16x32xf32>
    %c0_5 = arith.constant 0 : index
    %c0_6 = arith.constant 0 : index
    %11 = vector.load %arg5[%c0_5, %c0_6] : memref<2x32xf32, #tpu.memory_space<vmem>>, vector<1x32xf32>
    %12 = vector.broadcast %11 : vector<1x32xf32> to vector<16x32xf32>
    %13 = arith.addf %10, %12 : vector<16x32xf32>
    %c0_7 = arith.constant 0 : index
    %c0_8 = arith.constant 0 : index
    %14 = vector.load %arg6[%c0_7, %c0_8] : memref<1x32xf32, #tpu.memory_space<vmem>>, vector<1x32xf32>
    %c0_9 = arith.constant 0 : index
    %c0_10 = arith.constant 0 : index
    %15 = vector.load %arg7[%c0_9, %c0_10] : memref<1x32xf32, #tpu.memory_space<vmem>>, vector<1x32xf32>
    %cst_11 = arith.constant dense<0.000000e+00> : vector<16xf32>
    %16 = vector.multi_reduction <add>, %13, %cst_11 [1] : vector<16x32xf32> to vector<16xf32>
    %17 = vector.shape_cast %16 : vector<16xf32> to vector<16x1xf32>
    %cst_12 = arith.constant 3.200000e+01 : f32
    %18 = vector.broadcast %cst_12 : f32 to vector<16x1xf32>
    %19 = arith.divf %17, %18 : vector<16x1xf32>
    %20 = vector.broadcast %19 : vector<16x1xf32> to vector<16x32xf32>
    %21 = arith.subf %13, %20 : vector<16x32xf32>
    %22 = arith.mulf %21, %21 : vector<16x32xf32>
    %cst_13 = arith.constant dense<0.000000e+00> : vector<16xf32>
    %23 = vector.multi_reduction <add>, %22, %cst_13 [1] : vector<16x32xf32> to vector<16xf32>
    %24 = vector.shape_cast %23 : vector<16xf32> to vector<16x1xf32>
    %cst_14 = arith.constant 3.200000e+01 : f32
    %25 = vector.broadcast %cst_14 : f32 to vector<16x1xf32>
    %26 = arith.divf %24, %25 : vector<16x1xf32>
    %27 = vector.broadcast %19 : vector<16x1xf32> to vector<16x32xf32>
    %28 = arith.subf %13, %27 : vector<16x32xf32>
    %cst_15 = arith.constant 9.99999996E-13 : f32
    %29 = vector.broadcast %cst_15 : f32 to vector<16x1xf32>
    %30 = arith.addf %26, %29 : vector<16x1xf32>
    %31 = math.rsqrt %30 : vector<16x1xf32>
    %32 = vector.broadcast %31 : vector<16x1xf32> to vector<16x32xf32>
    %33 = arith.mulf %28, %32 : vector<16x32xf32>
    %34 = vector.broadcast %14 : vector<1x32xf32> to vector<16x32xf32>
    %35 = arith.mulf %33, %34 : vector<16x32xf32>
    %36 = vector.broadcast %15 : vector<1x32xf32> to vector<16x32xf32>
    %37 = arith.addf %35, %36 : vector<16x32xf32>
    %c0_16 = arith.constant 0 : index
    %c0_17 = arith.constant 0 : index
    %c0_18 = arith.constant 0 : index
    %38 = vector.load %arg2[%c0_16, %c0_17, %c0_18] : memref<2x1x8xf32, #tpu.memory_space<vmem>>, vector<2x1x8xf32>
    %cst_19 = arith.constant 1.000000e+00 : f32
    %39 = vector.broadcast %cst_19 : f32 to vector<2x1x8xf32>
    %40 = arith.subf %39, %38 : vector<2x1x8xf32>
    %cst_20 = arith.constant -1.000000e+09 : f32
    %41 = vector.broadcast %cst_20 : f32 to vector<2x1x8xf32>
    %42 = arith.mulf %40, %41 : vector<2x1x8xf32>
    %43 = tpu.concatenate %42, %42 in 0 : vector<2x1x8xf32>, vector<2x1x8xf32> -> vector<4x1x8xf32>
    %c0_21 = arith.constant 0 : index
    %c0_22 = arith.constant 0 : index
    %c0_23 = arith.constant 0 : index
    %44 = vector.load %arg8[%c0_21, %c0_22, %c0_23] : memref<2x32x96xf32, #tpu.memory_space<vmem>>, vector<1x32x96xf32>
    %45 = vector.shape_cast %44 : vector<1x32x96xf32> to vector<32x96xf32>
    %cst_24 = arith.constant dense<0.000000e+00> : vector<16x96xf32>
    %46 = tpu.matmul %37, %45, %cst_24 {dimension_numbers = #tpu.dot_dimension_numbers<[1], [0], [0], [1], [0, 0, 1, 1], [], []>} : vector<16x32xf32>, vector<32x96xf32>, vector<16x96xf32> -> vector<16x96xf32>
    %c0_25 = arith.constant 0 : index
    %c0_26 = arith.constant 0 : index
    %c0_27 = arith.constant 0 : index
    %47 = vector.load %arg9[%c0_25, %c0_26, %c0_27] : memref<2x1x96xf32, #tpu.memory_space<vmem>>, vector<1x1x96xf32>
    %48 = vector.shape_cast %47 : vector<1x1x96xf32> to vector<1x96xf32>
    %49 = vector.broadcast %48 : vector<1x96xf32> to vector<16x96xf32>
    %50 = arith.addf %46, %49 : vector<16x96xf32>
    %51 = vector.extract_strided_slice %50 {offsets = [0, 0], sizes = [16, 16], strides = [1, 1]} : vector<16x96xf32> to vector<16x16xf32>
    %52 = vector.shape_cast %51 : vector<16x16xf32> to vector<2x8x16xf32>
    %53 = vector.extract_strided_slice %50 {offsets = [0, 16], sizes = [16, 16], strides = [1, 1]} : vector<16x96xf32> to vector<16x16xf32>
    %54 = vector.shape_cast %53 : vector<16x16xf32> to vector<2x8x16xf32>
    %55 = tpu.concatenate %52, %54 in 0 : vector<2x8x16xf32>, vector<2x8x16xf32> -> vector<4x8x16xf32>
    %56 = vector.extract_strided_slice %50 {offsets = [0, 32], sizes = [16, 16], strides = [1, 1]} : vector<16x96xf32> to vector<16x16xf32>
    %57 = vector.shape_cast %56 : vector<16x16xf32> to vector<2x8x16xf32>
    %58 = vector.extract_strided_slice %50 {offsets = [0, 48], sizes = [16, 16], strides = [1, 1]} : vector<16x96xf32> to vector<16x16xf32>
    %59 = vector.shape_cast %58 : vector<16x16xf32> to vector<2x8x16xf32>
    %60 = tpu.concatenate %57, %59 in 0 : vector<2x8x16xf32>, vector<2x8x16xf32> -> vector<4x8x16xf32>
    %61 = vector.extract_strided_slice %50 {offsets = [0, 64], sizes = [16, 16], strides = [1, 1]} : vector<16x96xf32> to vector<16x16xf32>
    %62 = vector.shape_cast %61 : vector<16x16xf32> to vector<2x8x16xf32>
    %63 = vector.extract_strided_slice %50 {offsets = [0, 80], sizes = [16, 16], strides = [1, 1]} : vector<16x96xf32> to vector<16x16xf32>
    %64 = vector.shape_cast %63 : vector<16x16xf32> to vector<2x8x16xf32>
    %65 = tpu.concatenate %62, %64 in 0 : vector<2x8x16xf32>, vector<2x8x16xf32> -> vector<4x8x16xf32>
    "tpu.trace_start"() <{level = 10 : i32, message = "bqd,bkd->bqk"}> : () -> ()
    %cst_28 = arith.constant dense<0.000000e+00> : vector<4x8x8xf32>
    %66 = tpu.matmul %55, %60, %cst_28 {dimension_numbers = #tpu.dot_dimension_numbers<[2], [2], [1], [1], [0, 0, 0, 1, 1, 1], [0], [0]>} : vector<4x8x16xf32>, vector<4x8x16xf32>, vector<4x8x8xf32> -> vector<4x8x8xf32>
    "tpu.trace_stop"() : () -> ()
    %cst_29 = arith.constant 2.500000e-01 : f32
    %67 = vector.broadcast %cst_29 : f32 to vector<4x8x8xf32>
    %68 = arith.mulf %66, %67 : vector<4x8x8xf32>
    %69 = vector.broadcast %43 : vector<4x1x8xf32> to vector<4x8x8xf32>
    %70 = arith.addf %68, %69 : vector<4x8x8xf32>
    %cst_30 = arith.constant dense<0xFF800000> : vector<4x8xf32>
    %71 = vector.multi_reduction <maximumf>, %70, %cst_30 [2] : vector<4x8x8xf32> to vector<4x8xf32>
    %72 = vector.shape_cast %71 : vector<4x8xf32> to vector<4x8x1xf32>
    %73 = vector.broadcast %72 : vector<4x8x1xf32> to vector<4x8x8xf32>
    %74 = arith.subf %70, %73 : vector<4x8x8xf32>
    %75 = math.exp %74 : vector<4x8x8xf32>
    %cst_31 = arith.constant dense<0.000000e+00> : vector<4x8xf32>
    %76 = vector.multi_reduction <add>, %75, %cst_31 [2] : vector<4x8x8xf32> to vector<4x8xf32>
    %77 = vector.shape_cast %76 : vector<4x8xf32> to vector<4x8x1xf32>
    %78 = tpu.reciprocal %77 {approx = true} : vector<4x8x1xf32> -> vector<4x8x1xf32>
    %79 = vector.broadcast %78 : vector<4x8x1xf32> to vector<4x8x8xf32>
    %80 = arith.mulf %75, %79 : vector<4x8x8xf32>
    "tpu.trace_start"() <{level = 10 : i32, message = "bqk,bkd->bqd"}> : () -> ()
    %cst_32 = arith.constant dense<0.000000e+00> : vector<4x8x16xf32>
    %81 = tpu.matmul %80, %65, %cst_32 {dimension_numbers = #tpu.dot_dimension_numbers<[2], [1], [1], [2], [0, 0, 0, 1, 1, 2], [0], [0]>} : vector<4x8x8xf32>, vector<4x8x16xf32>, vector<4x8x16xf32> -> vector<4x8x16xf32>
    "tpu.trace_stop"() : () -> ()
    %82 = vector.extract_strided_slice %81 {offsets = [0, 0, 0], sizes = [2, 8, 16], strides = [1, 1, 1]} : vector<4x8x16xf32> to vector<2x8x16xf32>
    %83 = vector.shape_cast %82 : vector<2x8x16xf32> to vector<16x16xf32>
    %84 = vector.extract_strided_slice %81 {offsets = [2, 0, 0], sizes = [2, 8, 16], strides = [1, 1, 1]} : vector<4x8x16xf32> to vector<2x8x16xf32>
    %85 = vector.shape_cast %84 : vector<2x8x16xf32> to vector<16x16xf32>
    %86 = tpu.concatenate %83, %85 in 1 : vector<16x16xf32>, vector<16x16xf32> -> vector<16x32xf32>
    %c0_33 = arith.constant 0 : index
    %c0_34 = arith.constant 0 : index
    %c0_35 = arith.constant 0 : index
    %87 = vector.load %arg10[%c0_33, %c0_34, %c0_35] : memref<2x32x32xf32, #tpu.memory_space<vmem>>, vector<1x32x32xf32>
    %88 = vector.shape_cast %87 : vector<1x32x32xf32> to vector<32x32xf32>
    %cst_36 = arith.constant dense<0.000000e+00> : vector<16x32xf32>
    %89 = tpu.matmul %86, %88, %cst_36 {dimension_numbers = #tpu.dot_dimension_numbers<[1], [0], [0], [1], [0, 0, 1, 1], [], []>} : vector<16x32xf32>, vector<32x32xf32>, vector<16x32xf32> -> vector<16x32xf32>
    %c0_37 = arith.constant 0 : index
    %c0_38 = arith.constant 0 : index
    %c0_39 = arith.constant 0 : index
    %90 = vector.load %arg11[%c0_37, %c0_38, %c0_39] : memref<2x1x32xf32, #tpu.memory_space<vmem>>, vector<1x1x32xf32>
    %91 = vector.shape_cast %90 : vector<1x1x32xf32> to vector<1x32xf32>
    %92 = vector.broadcast %91 : vector<1x32xf32> to vector<16x32xf32>
    %93 = arith.addf %89, %92 : vector<16x32xf32>
    %94 = arith.addf %93, %37 : vector<16x32xf32>
    %c0_40 = arith.constant 0 : index
    %c0_41 = arith.constant 0 : index
    %c0_42 = arith.constant 0 : index
    %95 = vector.load %arg12[%c0_40, %c0_41, %c0_42] : memref<2x1x32xf32, #tpu.memory_space<vmem>>, vector<1x1x32xf32>
    %96 = vector.shape_cast %95 : vector<1x1x32xf32> to vector<1x32xf32>
    %c0_43 = arith.constant 0 : index
    %c0_44 = arith.constant 0 : index
    %c0_45 = arith.constant 0 : index
    %97 = vector.load %arg13[%c0_43, %c0_44, %c0_45] : memref<2x1x32xf32, #tpu.memory_space<vmem>>, vector<1x1x32xf32>
    %98 = vector.shape_cast %97 : vector<1x1x32xf32> to vector<1x32xf32>
    %cst_46 = arith.constant dense<0.000000e+00> : vector<16xf32>
    %99 = vector.multi_reduction <add>, %94, %cst_46 [1] : vector<16x32xf32> to vector<16xf32>
    %100 = vector.shape_cast %99 : vector<16xf32> to vector<16x1xf32>
    %cst_47 = arith.constant 3.200000e+01 : f32
    %101 = vector.broadcast %cst_47 : f32 to vector<16x1xf32>
    %102 = arith.divf %100, %101 : vector<16x1xf32>
    %103 = vector.broadcast %102 : vector<16x1xf32> to vector<16x32xf32>
    %104 = arith.subf %94, %103 : vector<16x32xf32>
    %105 = arith.mulf %104, %104 : vector<16x32xf32>
    %cst_48 = arith.constant dense<0.000000e+00> : vector<16xf32>
    %106 = vector.multi_reduction <add>, %105, %cst_48 [1] : vector<16x32xf32> to vector<16xf32>
    %107 = vector.shape_cast %106 : vector<16xf32> to vector<16x1xf32>
    %cst_49 = arith.constant 3.200000e+01 : f32
    %108 = vector.broadcast %cst_49 : f32 to vector<16x1xf32>
    %109 = arith.divf %107, %108 : vector<16x1xf32>
    %110 = vector.broadcast %102 : vector<16x1xf32> to vector<16x32xf32>
    %111 = arith.subf %94, %110 : vector<16x32xf32>
    %cst_50 = arith.constant 9.99999996E-13 : f32
    %112 = vector.broadcast %cst_50 : f32 to vector<16x1xf32>
    %113 = arith.addf %109, %112 : vector<16x1xf32>
    %114 = math.rsqrt %113 : vector<16x1xf32>
    %115 = vector.broadcast %114 : vector<16x1xf32> to vector<16x32xf32>
    %116 = arith.mulf %111, %115 : vector<16x32xf32>
    %117 = vector.broadcast %96 : vector<1x32xf32> to vector<16x32xf32>
    %118 = arith.mulf %116, %117 : vector<16x32xf32>
    %119 = vector.broadcast %98 : vector<1x32xf32> to vector<16x32xf32>
    %120 = arith.addf %118, %119 : vector<16x32xf32>
    %c0_51 = arith.constant 0 : index
    %c0_52 = arith.constant 0 : index
    %c0_53 = arith.constant 0 : index
    %121 = vector.load %arg14[%c0_51, %c0_52, %c0_53] : memref<2x32x64xf32, #tpu.memory_space<vmem>>, vector<1x32x64xf32>
    %122 = vector.shape_cast %121 : vector<1x32x64xf32> to vector<32x64xf32>
    %cst_54 = arith.constant dense<0.000000e+00> : vector<16x64xf32>
    %123 = tpu.matmul %120, %122, %cst_54 {dimension_numbers = #tpu.dot_dimension_numbers<[1], [0], [0], [1], [0, 0, 1, 1], [], []>} : vector<16x32xf32>, vector<32x64xf32>, vector<16x64xf32> -> vector<16x64xf32>
    %c0_55 = arith.constant 0 : index
    %c0_56 = arith.constant 0 : index
    %c0_57 = arith.constant 0 : index
    %124 = vector.load %arg15[%c0_55, %c0_56, %c0_57] : memref<2x1x64xf32, #tpu.memory_space<vmem>>, vector<1x1x64xf32>
    %125 = vector.shape_cast %124 : vector<1x1x64xf32> to vector<1x64xf32>
    %126 = vector.broadcast %125 : vector<1x64xf32> to vector<16x64xf32>
    %127 = arith.addf %123, %126 : vector<16x64xf32>
    %cst_58 = arith.constant 5.000000e-01 : f32
    %128 = vector.broadcast %cst_58 : f32 to vector<16x64xf32>
    %129 = arith.mulf %128, %127 : vector<16x64xf32>
    %cst_59 = arith.constant 4.471500e-02 : f32
    %130 = vector.broadcast %cst_59 : f32 to vector<16x64xf32>
    %131 = arith.mulf %130, %127 : vector<16x64xf32>
    %132 = arith.mulf %131, %127 : vector<16x64xf32>
    %133 = arith.mulf %132, %127 : vector<16x64xf32>
    %134 = arith.addf %127, %133 : vector<16x64xf32>
    %cst_60 = arith.constant 0.797884583 : f32
    %135 = vector.broadcast %cst_60 : f32 to vector<16x64xf32>
    %136 = arith.mulf %135, %134 : vector<16x64xf32>
    %137 = math.tanh %136 : vector<16x64xf32>
    %cst_61 = arith.constant 1.000000e+00 : f32
    %138 = vector.broadcast %cst_61 : f32 to vector<16x64xf32>
    %139 = arith.addf %138, %137 : vector<16x64xf32>
    %140 = arith.mulf %129, %139 : vector<16x64xf32>
    %c0_62 = arith.constant 0 : index
    %c0_63 = arith.constant 0 : index
    %c0_64 = arith.constant 0 : index
    %141 = vector.load %arg16[%c0_62, %c0_63, %c0_64] : memref<2x64x32xf32, #tpu.memory_space<vmem>>, vector<1x64x32xf32>
    %142 = vector.shape_cast %141 : vector<1x64x32xf32> to vector<64x32xf32>
    %cst_65 = arith.constant dense<0.000000e+00> : vector<16x32xf32>
    %143 = tpu.matmul %140, %142, %cst_65 {dimension_numbers = #tpu.dot_dimension_numbers<[1], [0], [0], [1], [0, 0, 1, 1], [], []>} : vector<16x64xf32>, vector<64x32xf32>, vector<16x32xf32> -> vector<16x32xf32>
    %c0_66 = arith.constant 0 : index
    %c0_67 = arith.constant 0 : index
    %c0_68 = arith.constant 0 : index
    %144 = vector.load %arg17[%c0_66, %c0_67, %c0_68] : memref<2x1x32xf32, #tpu.memory_space<vmem>>, vector<1x1x32xf32>
    %145 = vector.shape_cast %144 : vector<1x1x32xf32> to vector<1x32xf32>
    %146 = vector.broadcast %145 : vector<1x32xf32> to vector<16x32xf32>
    %147 = arith.addf %143, %146 : vector<16x32xf32>
    %148 = arith.addf %147, %120 : vector<16x32xf32>
    %c0_69 = arith.constant 0 : index
    %c0_70 = arith.constant 0 : index
    %c0_71 = arith.constant 0 : index
    %149 = vector.load %arg18[%c0_69, %c0_70, %c0_71] : memref<2x1x32xf32, #tpu.memory_space<vmem>>, vector<1x1x32xf32>
    %150 = vector.shape_cast %149 : vector<1x1x32xf32> to vector<1x32xf32>
    %c0_72 = arith.constant 0 : index
    %c0_73 = arith.constant 0 : index
    %c0_74 = arith.constant 0 : index
    %151 = vector.load %arg19[%c0_72, %c0_73, %c0_74] : memref<2x1x32xf32, #tpu.memory_space<vmem>>, vector<1x1x32xf32>
    %152 = vector.shape_cast %151 : vector<1x1x32xf32> to vector<1x32xf32>
    %cst_75 = arith.constant dense<0.000000e+00> : vector<16xf32>
    %153 = vector.multi_reduction <add>, %148, %cst_75 [1] : vector<16x32xf32> to vector<16xf32>
    %154 = vector.shape_cast %153 : vector<16xf32> to vector<16x1xf32>
    %cst_76 = arith.constant 3.200000e+01 : f32
    %155 = vector.broadcast %cst_76 : f32 to vector<16x1xf32>
    %156 = arith.divf %154, %155 : vector<16x1xf32>
    %157 = vector.broadcast %156 : vector<16x1xf32> to vector<16x32xf32>
    %158 = arith.subf %148, %157 : vector<16x32xf32>
    %159 = arith.mulf %158, %158 : vector<16x32xf32>
    %cst_77 = arith.constant dense<0.000000e+00> : vector<16xf32>
    %160 = vector.multi_reduction <add>, %159, %cst_77 [1] : vector<16x32xf32> to vector<16xf32>
    %161 = vector.shape_cast %160 : vector<16xf32> to vector<16x1xf32>
    %cst_78 = arith.constant 3.200000e+01 : f32
    %162 = vector.broadcast %cst_78 : f32 to vector<16x1xf32>
    %163 = arith.divf %161, %162 : vector<16x1xf32>
    %164 = vector.broadcast %156 : vector<16x1xf32> to vector<16x32xf32>
    %165 = arith.subf %148, %164 : vector<16x32xf32>
    %cst_79 = arith.constant 9.99999996E-13 : f32
    %166 = vector.broadcast %cst_79 : f32 to vector<16x1xf32>
    %167 = arith.addf %163, %166 : vector<16x1xf32>
    %168 = math.rsqrt %167 : vector<16x1xf32>
    %169 = vector.broadcast %168 : vector<16x1xf32> to vector<16x32xf32>
    %170 = arith.mulf %165, %169 : vector<16x32xf32>
    %171 = vector.broadcast %150 : vector<1x32xf32> to vector<16x32xf32>
    %172 = arith.mulf %170, %171 : vector<16x32xf32>
    %173 = vector.broadcast %152 : vector<1x32xf32> to vector<16x32xf32>
    %174 = arith.addf %172, %173 : vector<16x32xf32>
    %c1 = arith.constant 1 : index
    %c0_80 = arith.constant 0 : index
    %c0_81 = arith.constant 0 : index
    %175 = vector.load %arg8[%c1, %c0_80, %c0_81] : memref<2x32x96xf32, #tpu.memory_space<vmem>>, vector<1x32x96xf32>
    %176 = vector.shape_cast %175 : vector<1x32x96xf32> to vector<32x96xf32>
    %cst_82 = arith.constant dense<0.000000e+00> : vector<16x96xf32>
    %177 = tpu.matmul %174, %176, %cst_82 {dimension_numbers = #tpu.dot_dimension_numbers<[1], [0], [0], [1], [0, 0, 1, 1], [], []>} : vector<16x32xf32>, vector<32x96xf32>, vector<16x96xf32> -> vector<16x96xf32>
    %c1_83 = arith.constant 1 : index
    %c0_84 = arith.constant 0 : index
    %c0_85 = arith.constant 0 : index
    %178 = vector.load %arg9[%c1_83, %c0_84, %c0_85] : memref<2x1x96xf32, #tpu.memory_space<vmem>>, vector<1x1x96xf32>
    %179 = vector.shape_cast %178 : vector<1x1x96xf32> to vector<1x96xf32>
    %180 = vector.broadcast %179 : vector<1x96xf32> to vector<16x96xf32>
    %181 = arith.addf %177, %180 : vector<16x96xf32>
    %182 = vector.extract_strided_slice %181 {offsets = [0, 0], sizes = [16, 16], strides = [1, 1]} : vector<16x96xf32> to vector<16x16xf32>
    %183 = vector.shape_cast %182 : vector<16x16xf32> to vector<2x8x16xf32>
    %184 = vector.extract_strided_slice %181 {offsets = [0, 16], sizes = [16, 16], strides = [1, 1]} : vector<16x96xf32> to vector<16x16xf32>
    %185 = vector.shape_cast %184 : vector<16x16xf32> to vector<2x8x16xf32>
    %186 = tpu.concatenate %183, %185 in 0 : vector<2x8x16xf32>, vector<2x8x16xf32> -> vector<4x8x16xf32>
    %187 = vector.extract_strided_slice %181 {offsets = [0, 32], sizes = [16, 16], strides = [1, 1]} : vector<16x96xf32> to vector<16x16xf32>
    %188 = vector.shape_cast %187 : vector<16x16xf32> to vector<2x8x16xf32>
    %189 = vector.extract_strided_slice %181 {offsets = [0, 48], sizes = [16, 16], strides = [1, 1]} : vector<16x96xf32> to vector<16x16xf32>
    %190 = vector.shape_cast %189 : vector<16x16xf32> to vector<2x8x16xf32>
    %191 = tpu.concatenate %188, %190 in 0 : vector<2x8x16xf32>, vector<2x8x16xf32> -> vector<4x8x16xf32>
    %192 = vector.extract_strided_slice %181 {offsets = [0, 64], sizes = [16, 16], strides = [1, 1]} : vector<16x96xf32> to vector<16x16xf32>
    %193 = vector.shape_cast %192 : vector<16x16xf32> to vector<2x8x16xf32>
    %194 = vector.extract_strided_slice %181 {offsets = [0, 80], sizes = [16, 16], strides = [1, 1]} : vector<16x96xf32> to vector<16x16xf32>
    %195 = vector.shape_cast %194 : vector<16x16xf32> to vector<2x8x16xf32>
    %196 = tpu.concatenate %193, %195 in 0 : vector<2x8x16xf32>, vector<2x8x16xf32> -> vector<4x8x16xf32>
    "tpu.trace_start"() <{level = 10 : i32, message = "bqd,bkd->bqk"}> : () -> ()
    %cst_86 = arith.constant dense<0.000000e+00> : vector<4x8x8xf32>
    %197 = tpu.matmul %186, %191, %cst_86 {dimension_numbers = #tpu.dot_dimension_numbers<[2], [2], [1], [1], [0, 0, 0, 1, 1, 1], [0], [0]>} : vector<4x8x16xf32>, vector<4x8x16xf32>, vector<4x8x8xf32> -> vector<4x8x8xf32>
    "tpu.trace_stop"() : () -> ()
    %cst_87 = arith.constant 2.500000e-01 : f32
    %198 = vector.broadcast %cst_87 : f32 to vector<4x8x8xf32>
    %199 = arith.mulf %197, %198 : vector<4x8x8xf32>
    %200 = vector.broadcast %43 : vector<4x1x8xf32> to vector<4x8x8xf32>
    %201 = arith.addf %199, %200 : vector<4x8x8xf32>
    %cst_88 = arith.constant dense<0xFF800000> : vector<4x8xf32>
    %202 = vector.multi_reduction <maximumf>, %201, %cst_88 [2] : vector<4x8x8xf32> to vector<4x8xf32>
    %203 = vector.shape_cast %202 : vector<4x8xf32> to vector<4x8x1xf32>
    %204 = vector.broadcast %203 : vector<4x8x1xf32> to vector<4x8x8xf32>
    %205 = arith.subf %201, %204 : vector<4x8x8xf32>
    %206 = math.exp %205 : vector<4x8x8xf32>
    %cst_89 = arith.constant dense<0.000000e+00> : vector<4x8xf32>
    %207 = vector.multi_reduction <add>, %206, %cst_89 [2] : vector<4x8x8xf32> to vector<4x8xf32>
    %208 = vector.shape_cast %207 : vector<4x8xf32> to vector<4x8x1xf32>
    %209 = tpu.reciprocal %208 {approx = true} : vector<4x8x1xf32> -> vector<4x8x1xf32>
    %210 = vector.broadcast %209 : vector<4x8x1xf32> to vector<4x8x8xf32>
    %211 = arith.mulf %206, %210 : vector<4x8x8xf32>
    "tpu.trace_start"() <{level = 10 : i32, message = "bqk,bkd->bqd"}> : () -> ()
    %cst_90 = arith.constant dense<0.000000e+00> : vector<4x8x16xf32>
    %212 = tpu.matmul %211, %196, %cst_90 {dimension_numbers = #tpu.dot_dimension_numbers<[2], [1], [1], [2], [0, 0, 0, 1, 1, 2], [0], [0]>} : vector<4x8x8xf32>, vector<4x8x16xf32>, vector<4x8x16xf32> -> vector<4x8x16xf32>
    "tpu.trace_stop"() : () -> ()
    %213 = vector.extract_strided_slice %212 {offsets = [0, 0, 0], sizes = [2, 8, 16], strides = [1, 1, 1]} : vector<4x8x16xf32> to vector<2x8x16xf32>
    %214 = vector.shape_cast %213 : vector<2x8x16xf32> to vector<16x16xf32>
    %215 = vector.extract_strided_slice %212 {offsets = [2, 0, 0], sizes = [2, 8, 16], strides = [1, 1, 1]} : vector<4x8x16xf32> to vector<2x8x16xf32>
    %216 = vector.shape_cast %215 : vector<2x8x16xf32> to vector<16x16xf32>
    %217 = tpu.concatenate %214, %216 in 1 : vector<16x16xf32>, vector<16x16xf32> -> vector<16x32xf32>
    %c1_91 = arith.constant 1 : index
    %c0_92 = arith.constant 0 : index
    %c0_93 = arith.constant 0 : index
    %218 = vector.load %arg10[%c1_91, %c0_92, %c0_93] : memref<2x32x32xf32, #tpu.memory_space<vmem>>, vector<1x32x32xf32>
    %219 = vector.shape_cast %218 : vector<1x32x32xf32> to vector<32x32xf32>
    %cst_94 = arith.constant dense<0.000000e+00> : vector<16x32xf32>
    %220 = tpu.matmul %217, %219, %cst_94 {dimension_numbers = #tpu.dot_dimension_numbers<[1], [0], [0], [1], [0, 0, 1, 1], [], []>} : vector<16x32xf32>, vector<32x32xf32>, vector<16x32xf32> -> vector<16x32xf32>
    %c1_95 = arith.constant 1 : index
    %c0_96 = arith.constant 0 : index
    %c0_97 = arith.constant 0 : index
    %221 = vector.load %arg11[%c1_95, %c0_96, %c0_97] : memref<2x1x32xf32, #tpu.memory_space<vmem>>, vector<1x1x32xf32>
    %222 = vector.shape_cast %221 : vector<1x1x32xf32> to vector<1x32xf32>
    %223 = vector.broadcast %222 : vector<1x32xf32> to vector<16x32xf32>
    %224 = arith.addf %220, %223 : vector<16x32xf32>
    %225 = arith.addf %224, %174 : vector<16x32xf32>
    %c1_98 = arith.constant 1 : index
    %c0_99 = arith.constant 0 : index
    %c0_100 = arith.constant 0 : index
    %226 = vector.load %arg12[%c1_98, %c0_99, %c0_100] : memref<2x1x32xf32, #tpu.memory_space<vmem>>, vector<1x1x32xf32>
    %227 = vector.shape_cast %226 : vector<1x1x32xf32> to vector<1x32xf32>
    %c1_101 = arith.constant 1 : index
    %c0_102 = arith.constant 0 : index
    %c0_103 = arith.constant 0 : index
    %228 = vector.load %arg13[%c1_101, %c0_102, %c0_103] : memref<2x1x32xf32, #tpu.memory_space<vmem>>, vector<1x1x32xf32>
    %229 = vector.shape_cast %228 : vector<1x1x32xf32> to vector<1x32xf32>
    %cst_104 = arith.constant dense<0.000000e+00> : vector<16xf32>
    %230 = vector.multi_reduction <add>, %225, %cst_104 [1] : vector<16x32xf32> to vector<16xf32>
    %231 = vector.shape_cast %230 : vector<16xf32> to vector<16x1xf32>
    %cst_105 = arith.constant 3.200000e+01 : f32
    %232 = vector.broadcast %cst_105 : f32 to vector<16x1xf32>
    %233 = arith.divf %231, %232 : vector<16x1xf32>
    %234 = vector.broadcast %233 : vector<16x1xf32> to vector<16x32xf32>
    %235 = arith.subf %225, %234 : vector<16x32xf32>
    %236 = arith.mulf %235, %235 : vector<16x32xf32>
    %cst_106 = arith.constant dense<0.000000e+00> : vector<16xf32>
    %237 = vector.multi_reduction <add>, %236, %cst_106 [1] : vector<16x32xf32> to vector<16xf32>
    %238 = vector.shape_cast %237 : vector<16xf32> to vector<16x1xf32>
    %cst_107 = arith.constant 3.200000e+01 : f32
    %239 = vector.broadcast %cst_107 : f32 to vector<16x1xf32>
    %240 = arith.divf %238, %239 : vector<16x1xf32>
    %241 = vector.broadcast %233 : vector<16x1xf32> to vector<16x32xf32>
    %242 = arith.subf %225, %241 : vector<16x32xf32>
    %cst_108 = arith.constant 9.99999996E-13 : f32
    %243 = vector.broadcast %cst_108 : f32 to vector<16x1xf32>
    %244 = arith.addf %240, %243 : vector<16x1xf32>
    %245 = math.rsqrt %244 : vector<16x1xf32>
    %246 = vector.broadcast %245 : vector<16x1xf32> to vector<16x32xf32>
    %247 = arith.mulf %242, %246 : vector<16x32xf32>
    %248 = vector.broadcast %227 : vector<1x32xf32> to vector<16x32xf32>
    %249 = arith.mulf %247, %248 : vector<16x32xf32>
    %250 = vector.broadcast %229 : vector<1x32xf32> to vector<16x32xf32>
    %251 = arith.addf %249, %250 : vector<16x32xf32>
    %c1_109 = arith.constant 1 : index
    %c0_110 = arith.constant 0 : index
    %c0_111 = arith.constant 0 : index
    %252 = vector.load %arg14[%c1_109, %c0_110, %c0_111] : memref<2x32x64xf32, #tpu.memory_space<vmem>>, vector<1x32x64xf32>
    %253 = vector.shape_cast %252 : vector<1x32x64xf32> to vector<32x64xf32>
    %cst_112 = arith.constant dense<0.000000e+00> : vector<16x64xf32>
    %254 = tpu.matmul %251, %253, %cst_112 {dimension_numbers = #tpu.dot_dimension_numbers<[1], [0], [0], [1], [0, 0, 1, 1], [], []>} : vector<16x32xf32>, vector<32x64xf32>, vector<16x64xf32> -> vector<16x64xf32>
    %c1_113 = arith.constant 1 : index
    %c0_114 = arith.constant 0 : index
    %c0_115 = arith.constant 0 : index
    %255 = vector.load %arg15[%c1_113, %c0_114, %c0_115] : memref<2x1x64xf32, #tpu.memory_space<vmem>>, vector<1x1x64xf32>
    %256 = vector.shape_cast %255 : vector<1x1x64xf32> to vector<1x64xf32>
    %257 = vector.broadcast %256 : vector<1x64xf32> to vector<16x64xf32>
    %258 = arith.addf %254, %257 : vector<16x64xf32>
    %cst_116 = arith.constant 5.000000e-01 : f32
    %259 = vector.broadcast %cst_116 : f32 to vector<16x64xf32>
    %260 = arith.mulf %259, %258 : vector<16x64xf32>
    %cst_117 = arith.constant 4.471500e-02 : f32
    %261 = vector.broadcast %cst_117 : f32 to vector<16x64xf32>
    %262 = arith.mulf %261, %258 : vector<16x64xf32>
    %263 = arith.mulf %262, %258 : vector<16x64xf32>
    %264 = arith.mulf %263, %258 : vector<16x64xf32>
    %265 = arith.addf %258, %264 : vector<16x64xf32>
    %cst_118 = arith.constant 0.797884583 : f32
    %266 = vector.broadcast %cst_118 : f32 to vector<16x64xf32>
    %267 = arith.mulf %266, %265 : vector<16x64xf32>
    %268 = math.tanh %267 : vector<16x64xf32>
    %cst_119 = arith.constant 1.000000e+00 : f32
    %269 = vector.broadcast %cst_119 : f32 to vector<16x64xf32>
    %270 = arith.addf %269, %268 : vector<16x64xf32>
    %271 = arith.mulf %260, %270 : vector<16x64xf32>
    %c1_120 = arith.constant 1 : index
    %c0_121 = arith.constant 0 : index
    %c0_122 = arith.constant 0 : index
    %272 = vector.load %arg16[%c1_120, %c0_121, %c0_122] : memref<2x64x32xf32, #tpu.memory_space<vmem>>, vector<1x64x32xf32>
    %273 = vector.shape_cast %272 : vector<1x64x32xf32> to vector<64x32xf32>
    %cst_123 = arith.constant dense<0.000000e+00> : vector<16x32xf32>
    %274 = tpu.matmul %271, %273, %cst_123 {dimension_numbers = #tpu.dot_dimension_numbers<[1], [0], [0], [1], [0, 0, 1, 1], [], []>} : vector<16x64xf32>, vector<64x32xf32>, vector<16x32xf32> -> vector<16x32xf32>
    %c1_124 = arith.constant 1 : index
    %c0_125 = arith.constant 0 : index
    %c0_126 = arith.constant 0 : index
    %275 = vector.load %arg17[%c1_124, %c0_125, %c0_126] : memref<2x1x32xf32, #tpu.memory_space<vmem>>, vector<1x1x32xf32>
    %276 = vector.shape_cast %275 : vector<1x1x32xf32> to vector<1x32xf32>
    %277 = vector.broadcast %276 : vector<1x32xf32> to vector<16x32xf32>
    %278 = arith.addf %274, %277 : vector<16x32xf32>
    %279 = arith.addf %278, %251 : vector<16x32xf32>
    %c1_127 = arith.constant 1 : index
    %c0_128 = arith.constant 0 : index
    %c0_129 = arith.constant 0 : index
    %280 = vector.load %arg18[%c1_127, %c0_128, %c0_129] : memref<2x1x32xf32, #tpu.memory_space<vmem>>, vector<1x1x32xf32>
    %281 = vector.shape_cast %280 : vector<1x1x32xf32> to vector<1x32xf32>
    %c1_130 = arith.constant 1 : index
    %c0_131 = arith.constant 0 : index
    %c0_132 = arith.constant 0 : index
    %282 = vector.load %arg19[%c1_130, %c0_131, %c0_132] : memref<2x1x32xf32, #tpu.memory_space<vmem>>, vector<1x1x32xf32>
    %283 = vector.shape_cast %282 : vector<1x1x32xf32> to vector<1x32xf32>
    %cst_133 = arith.constant dense<0.000000e+00> : vector<16xf32>
    %284 = vector.multi_reduction <add>, %279, %cst_133 [1] : vector<16x32xf32> to vector<16xf32>
    %285 = vector.shape_cast %284 : vector<16xf32> to vector<16x1xf32>
    %cst_134 = arith.constant 3.200000e+01 : f32
    %286 = vector.broadcast %cst_134 : f32 to vector<16x1xf32>
    %287 = arith.divf %285, %286 : vector<16x1xf32>
    %288 = vector.broadcast %287 : vector<16x1xf32> to vector<16x32xf32>
    %289 = arith.subf %279, %288 : vector<16x32xf32>
    %290 = arith.mulf %289, %289 : vector<16x32xf32>
    %cst_135 = arith.constant dense<0.000000e+00> : vector<16xf32>
    %291 = vector.multi_reduction <add>, %290, %cst_135 [1] : vector<16x32xf32> to vector<16xf32>
    %292 = vector.shape_cast %291 : vector<16xf32> to vector<16x1xf32>
    %cst_136 = arith.constant 3.200000e+01 : f32
    %293 = vector.broadcast %cst_136 : f32 to vector<16x1xf32>
    %294 = arith.divf %292, %293 : vector<16x1xf32>
    %295 = vector.broadcast %287 : vector<16x1xf32> to vector<16x32xf32>
    %296 = arith.subf %279, %295 : vector<16x32xf32>
    %cst_137 = arith.constant 9.99999996E-13 : f32
    %297 = vector.broadcast %cst_137 : f32 to vector<16x1xf32>
    %298 = arith.addf %294, %297 : vector<16x1xf32>
    %299 = math.rsqrt %298 : vector<16x1xf32>
    %300 = vector.broadcast %299 : vector<16x1xf32> to vector<16x32xf32>
    %301 = arith.mulf %296, %300 : vector<16x32xf32>
    %302 = vector.broadcast %281 : vector<1x32xf32> to vector<16x32xf32>
    %303 = arith.mulf %301, %302 : vector<16x32xf32>
    %304 = vector.broadcast %283 : vector<1x32xf32> to vector<16x32xf32>
    %305 = arith.addf %303, %304 : vector<16x32xf32>
    %c0_138 = arith.constant 0 : index
    %c0_139 = arith.constant 0 : index
    %306 = vector.load %arg20[%c0_138, %c0_139] : memref<32x32xf32, #tpu.memory_space<vmem>>, vector<32x32xf32>
    %cst_140 = arith.constant dense<0.000000e+00> : vector<16x32xf32>
    %307 = tpu.matmul %305, %306, %cst_140 {dimension_numbers = #tpu.dot_dimension_numbers<[1], [0], [0], [1], [0, 0, 1, 1], [], []>} : vector<16x32xf32>, vector<32x32xf32>, vector<16x32xf32> -> vector<16x32xf32>
    %c0_141 = arith.constant 0 : index
    %c0_142 = arith.constant 0 : index
    %308 = vector.load %arg21[%c0_141, %c0_142] : memref<1x32xf32, #tpu.memory_space<vmem>>, vector<1x32xf32>
    %309 = vector.broadcast %308 : vector<1x32xf32> to vector<16x32xf32>
    %310 = arith.addf %307, %309 : vector<16x32xf32>
    %311 = math.tanh %310 : vector<16x32xf32>
    %c0_143 = arith.constant 0 : index
    %c0_144 = arith.constant 0 : index
    %312 = vector.load %arg22[%c0_143, %c0_144] : memref<32x128xf32, #tpu.memory_space<vmem>>, vector<32x128xf32>
    %cst_145 = arith.constant dense<0.000000e+00> : vector<16x128xf32>
    %313 = tpu.matmul %311, %312, %cst_145 {dimension_numbers = #tpu.dot_dimension_numbers<[1], [0], [0], [1], [0, 0, 1, 1], [], []>} : vector<16x32xf32>, vector<32x128xf32>, vector<16x128xf32> -> vector<16x128xf32>
    %c0_146 = arith.constant 0 : index
    %c0_147 = arith.constant 0 : index
    %314 = vector.load %arg23[%c0_146, %c0_147] : memref<1x128xf32, #tpu.memory_space<vmem>>, vector<1x128xf32>
    %315 = vector.broadcast %314 : vector<1x128xf32> to vector<16x128xf32>
    %316 = arith.addf %313, %315 : vector<16x128xf32>
    %c0_148 = arith.constant 0 : index
    %c0_149 = arith.constant 0 : index
    %317 = vector.load %arg24[%c0_148, %c0_149] : memref<16x128xf32, #tpu.memory_space<vmem>>, vector<16x128xf32>
    tpu.vector_store %arg24[%c0_148, %c0_149], %316 {strides = array<i32>} : memref<16x128xf32, #tpu.memory_space<vmem>>, vector<16x128xf32>,
    return
  }
  func.func @transform_0(%arg0: i32) -> (i32, i32) {
    %c0_i32 = arith.constant 0 : i32
    %c0_i32_0 = arith.constant 0 : i32
    %c0_i32_1 = arith.constant 0 : i32
    return %c0_i32, %c0_i32_0 : i32, i32
  }
  func.func @transform_1(%arg0: i32) -> (i32, i32, i32) {
    %c0_i32 = arith.constant 0 : i32
    %c0_i32_0 = arith.constant 0 : i32
    %c0_i32_1 = arith.constant 0 : i32
    %c0_i32_2 = arith.constant 0 : i32
    return %c0_i32, %c0_i32_0, %c0_i32_1 : i32, i32, i32
  }
  func.func @transform_2(%arg0: i32) -> (i32, i32) {
    %c0_i32 = arith.constant 0 : i32
    %c0_i32_0 = arith.constant 0 : i32
    %c0_i32_1 = arith.constant 0 : i32
    return %c0_i32, %c0_i32_0 : i32, i32
  }
  func.func @transform_3(%arg0: i32) -> (i32, i32) {
    %c0_i32 = arith.constant 0 : i32
    %c0_i32_0 = arith.constant 0 : i32
    %c0_i32_1 = arith.constant 0 : i32
    return %c0_i32, %c0_i32_0 : i32, i32
  }
  func.func @transform_4(%arg0: i32) -> (i32, i32) {
    %c0_i32 = arith.constant 0 : i32
    %c0_i32_0 = arith.constant 0 : i32
    %c0_i32_1 = arith.constant 0 : i32
    return %c0_i32, %c0_i32_0 : i32, i32
  }
  func.func @transform_5(%arg0: i32) -> (i32, i32) {
    %c0_i32 = arith.constant 0 : i32
    %c0_i32_0 = arith.constant 0 : i32
    %c0_i32_1 = arith.constant 0 : i32
    return %c0_i32, %c0_i32_0 : i32, i32
  }
  func.func @transform_6(%arg0: i32) -> (i32, i32) {
    %c0_i32 = arith.constant 0 : i32
    %c0_i32_0 = arith.constant 0 : i32
    %c0_i32_1 = arith.constant 0 : i32
    return %c0_i32, %c0_i32_0 : i32, i32
  }
  func.func @transform_7(%arg0: i32) -> (i32, i32, i32) {
    %c0_i32 = arith.constant 0 : i32
    %c0_i32_0 = arith.constant 0 : i32
    %c0_i32_1 = arith.constant 0 : i32
    %c0_i32_2 = arith.constant 0 : i32
    return %c0_i32, %c0_i32_0, %c0_i32_1 : i32, i32, i32
  }
  func.func @transform_8(%arg0: i32) -> (i32, i32, i32) {
    %c0_i32 = arith.constant 0 : i32
    %c0_i32_0 = arith.constant 0 : i32
    %c0_i32_1 = arith.constant 0 : i32
    %c0_i32_2 = arith.constant 0 : i32
    return %c0_i32, %c0_i32_0, %c0_i32_1 : i32, i32, i32
  }
  func.func @transform_9(%arg0: i32) -> (i32, i32, i32) {
    %c0_i32 = arith.constant 0 : i32
    %c0_i32_0 = arith.constant 0 : i32
    %c0_i32_1 = arith.constant 0 : i32
    %c0_i32_2 = arith.constant 0 : i32
    return %c0_i32, %c0_i32_0, %c0_i32_1 : i32, i32, i32
  }
  func.func @transform_10(%arg0: i32) -> (i32, i32, i32) {
    %c0_i32 = arith.constant 0 : i32
    %c0_i32_0 = arith.constant 0 : i32
    %c0_i32_1 = arith.constant 0 : i32
    %c0_i32_2 = arith.constant 0 : i32
    return %c0_i32, %c0_i32_0, %c0_i32_1 : i32, i32, i32
  }
  func.func @transform_11(%arg0: i32) -> (i32, i32, i32) {
    %c0_i32 = arith.constant 0 : i32
    %c0_i32_0 = arith.constant 0 : i32
    %c0_i32_1 = arith.constant 0 : i32
    %c0_i32_2 = arith.constant 0 : i32
    return %c0_i32, %c0_i32_0, %c0_i32_1 : i32, i32, i32
  }
  func.func @transform_12(%arg0: i32) -> (i32, i32, i32) {
    %c0_i32 = arith.constant 0 : i32
    %c0_i32_0 = arith.constant 0 : i32
    %c0_i32_1 = arith.constant 0 : i32
    %c0_i32_2 = arith.constant 0 : i32
    return %c0_i32, %c0_i32_0, %c0_i32_1 : i32, i32, i32
  }
  func.func @transform_13(%arg0: i32) -> (i32, i32, i32) {
    %c0_i32 = arith.constant 0 : i32
    %c0_i32_0 = arith.constant 0 : i32
    %c0_i32_1 = arith.constant 0 : i32
    %c0_i32_2 = arith.constant 0 : i32
    return %c0_i32, %c0_i32_0, %c0_i32_1 : i32, i32, i32
  }
  func.func @transform_14(%arg0: i32) -> (i32, i32, i32) {
    %c0_i32 = arith.constant 0 : i32
    %c0_i32_0 = arith.constant 0 : i32
    %c0_i32_1 = arith.constant 0 : i32
    %c0_i32_2 = arith.constant 0 : i32
    return %c0_i32, %c0_i32_0, %c0_i32_1 : i32, i32, i32
  }
  func.func @transform_15(%arg0: i32) -> (i32, i32, i32) {
    %c0_i32 = arith.constant 0 : i32
    %c0_i32_0 = arith.constant 0 : i32
    %c0_i32_1 = arith.constant 0 : i32
    %c0_i32_2 = arith.constant 0 : i32
    return %c0_i32, %c0_i32_0, %c0_i32_1 : i32, i32, i32
  }
  func.func @transform_16(%arg0: i32) -> (i32, i32, i32) {
    %c0_i32 = arith.constant 0 : i32
    %c0_i32_0 = arith.constant 0 : i32
    %c0_i32_1 = arith.constant 0 : i32
    %c0_i32_2 = arith.constant 0 : i32
    return %c0_i32, %c0_i32_0, %c0_i32_1 : i32, i32, i32
  }
  func.func @transform_17(%arg0: i32) -> (i32, i32, i32) {
    %c0_i32 = arith.constant 0 : i32
    %c0_i32_0 = arith.constant 0 : i32
    %c0_i32_1 = arith.constant 0 : i32
    %c0_i32_2 = arith.constant 0 : i32
    return %c0_i32, %c0_i32_0, %c0_i32_1 : i32, i32, i32
  }
  func.func @transform_18(%arg0: i32) -> (i32, i32, i32) {
    %c0_i32 = arith.constant 0 : i32
    %c0_i32_0 = arith.constant 0 : i32
    %c0_i32_1 = arith.constant 0 : i32
    %c0_i32_2 = arith.constant 0 : i32
    return %c0_i32, %c0_i32_0, %c0_i32_1 : i32, i32, i32
  }
  func.func @transform_19(%arg0: i32) -> (i32, i32) {
    %c0_i32 = arith.constant 0 : i32
    %c0_i32_0 = arith.constant 0 : i32
    %c0_i32_1 = arith.constant 0 : i32
    return %c0_i32, %c0_i32_0 : i32, i32
  }
  func.func @transform_20(%arg0: i32) -> (i32, i32) {
    %c0_i32 = arith.constant 0 : i32
    %c0_i32_0 = arith.constant 0 : i32
    %c0_i32_1 = arith.constant 0 : i32
    return %c0_i32, %c0_i32_0 : i32, i32
  }
  func.func @transform_21(%arg0: i32) -> (i32, i32) {
    %c0_i32 = arith.constant 0 : i32
    %c0_i32_0 = arith.constant 0 : i32
    %c0_i32_1 = arith.constant 0 : i32
    return %c0_i32, %c0_i32_0 : i32, i32
  }
  func.func @transform_22(%arg0: i32) -> (i32, i32) {
    %c0_i32 = arith.constant 0 : i32
    %c0_i32_0 = arith.constant 0 : i32
    %c0_i32_1 = arith.constant 0 : i32
    return %c0_i32, %c0_i32_0 : i32, i32
  }
  func.func @transform_23(%arg0: i32) -> (i32, i32) {
    %c0_i32 = arith.constant 0 : i32
    %c0_i32_0 = arith.constant 0 : i32
    %c0_i32_1 = arith.constant 0 : i32
    return %c0_i32, %c0_i32_0 : i32, i32
  }
}

</mosaic_0001>

<llo_original>
// kernel: bert_classifier_forward.1
$region0: #{bert_classifier_forward.1}
  #allocation0 [shape = 'u32[]', space=smem, size = 0x4, offset = 0x4, fixed_abs, tag = 'smem constant byte address 0x4 - core index']
  #allocation1 [shape = 'u32[144,128]{1,0:T(1,128)}', space=vmem, size = 0x12000, scoped, tag = 'internal scratch']
  %s0 = inlined_call_operand.vmem [shape: s32[16,1], index: 0, kind: input, shape index: {}]
  %s1 = inlined_call_operand.vmem [shape: f32[2,1,8], index: 1, kind: input, shape index: {}]
  %s2 = inlined_call_operand.vmem [shape: f32[128,32], index: 2, kind: input, shape index: {}]
  %s3 = inlined_call_operand.vmem [shape: f32[16,32], index: 3, kind: input, shape index: {}]
  %s4 = inlined_call_operand.vmem [shape: f32[2,32], index: 4, kind: input, shape index: {}]
  %s5 = inlined_call_operand.vmem [shape: f32[1,32], index: 5, kind: input, shape index: {}]
  %s6 = inlined_call_operand.vmem [shape: f32[1,32], index: 6, kind: input, shape index: {}]
  %s7 = inlined_call_operand.vmem [shape: f32[2,32,96], index: 7, kind: input, shape index: {}]
  %s8 = inlined_call_operand.vmem [shape: f32[2,1,96], index: 8, kind: input, shape index: {}]
  %s9 = inlined_call_operand.vmem [shape: f32[2,32,32], index: 9, kind: input, shape index: {}]
  %s10 = inlined_call_operand.vmem [shape: f32[2,1,32], index: 10, kind: input, shape index: {}]
  %s11 = inlined_call_operand.vmem [shape: f32[2,1,32], index: 11, kind: input, shape index: {}]
  %s12 = inlined_call_operand.vmem [shape: f32[2,1,32], index: 12, kind: input, shape index: {}]
  %s13 = inlined_call_operand.vmem [shape: f32[2,32,64], index: 13, kind: input, shape index: {}]
  %s14 = inlined_call_operand.vmem [shape: f32[2,1,64], index: 14, kind: input, shape index: {}]
  %s15 = inlined_call_operand.vmem [shape: f32[2,64,32], index: 15, kind: input, shape index: {}]
  %s16 = inlined_call_operand.vmem [shape: f32[2,1,32], index: 16, kind: input, shape index: {}]
  %s17 = inlined_call_operand.vmem [shape: f32[2,1,32], index: 17, kind: input, shape index: {}]
  %s18 = inlined_call_operand.vmem [shape: f32[2,1,32], index: 18, kind: input, shape index: {}]
  %s19 = inlined_call_operand.vmem [shape: f32[32,32], index: 19, kind: input, shape index: {}]
  %s20 = inlined_call_operand.vmem [shape: f32[1,32], index: 20, kind: input, shape index: {}]
  %s21 = inlined_call_operand.vmem [shape: f32[32,128], index: 21, kind: input, shape index: {}]
  %s22 = inlined_call_operand.vmem [shape: f32[1,128], index: 22, kind: input, shape index: {}]
  %s23 = inlined_call_operand.vmem [shape: f32[16,128], index: 23, kind: output, shape index: {}]
  %s24 = sld [smem:[#allocation0]]
  $region102: #{bert_classifier_forward.1} parent=0
    _
  %s26 = ssub.s32 1, %s24
  %s27 = scalar_select 0, %s26, %s24
  // Predicated region
  $region2: #{bert_classifier_forward.1} parent=0 // pred_check
    _
  $region3: #{bert_classifier_forward.1} parent=0 // pred_check_branch
    %29 = sbr.rel (0) target = $region5
  $region4: #{bert_classifier_forward.1} parent=0 // pred_region
    _
  $region5: #{bert_classifier_forward.1} parent=0 // pred_fallthru
    _
  // Predicated region
  $region6: #{bert_classifier_forward.1} parent=0 // pred_check
    _
  $region7: #{bert_classifier_forward.1} parent=0 // pred_check_branch
    %31 = sbr.rel (0) target = $region9
  $region8: #{bert_classifier_forward.1} parent=0 // pred_region
    _
  $region9: #{bert_classifier_forward.1} parent=0 // pred_fallthru
    _
  // Predicated region
  $region10: #{bert_classifier_forward.1} parent=0 // pred_check
    _
  $region11: #{bert_classifier_forward.1} parent=0 // pred_check_branch
    %33 = sbr.rel (0) target = $region13
  $region12: #{bert_classifier_forward.1} parent=0 // pred_region
    _
  $region13: #{bert_classifier_forward.1} parent=0 // pred_fallthru
    _
  // Predicated region
  $region14: #{bert_classifier_forward.1} parent=0 // pred_check
    _
  $region15: #{bert_classifier_forward.1} parent=0 // pred_check_branch
    %35 = sbr.rel (0) target = $region17
  $region16: #{bert_classifier_forward.1} parent=0 // pred_region
    _
  $region17: #{bert_classifier_forward.1} parent=0 // pred_fallthru
    _
  // Predicated region
  $region18: #{bert_classifier_forward.1} parent=0 // pred_check
    _
  $region19: #{bert_classifier_forward.1} parent=0 // pred_check_branch
    %37 = sbr.rel (0) target = $region21
  $region20: #{bert_classifier_forward.1} parent=0 // pred_region
    _
  $region21: #{bert_classifier_forward.1} parent=0 // pred_fallthru
    _
  // Predicated region
  $region22: #{bert_classifier_forward.1} parent=0 // pred_check
    _
  $region23: #{bert_classifier_forward.1} parent=0 // pred_check_branch
    %39 = sbr.rel (0) target = $region25
  $region24: #{bert_classifier_forward.1} parent=0 // pred_region
    _
  $region25: #{bert_classifier_forward.1} parent=0 // pred_fallthru
    _
  // Predicated region
  $region26: #{bert_classifier_forward.1} parent=0 // pred_check
    _
  $region27: #{bert_classifier_forward.1} parent=0 // pred_check_branch
    %41 = sbr.rel (0) target = $region29
  $region28: #{bert_classifier_forward.1} parent=0 // pred_region
    _
  $region29: #{bert_classifier_forward.1} parent=0 // pred_fallthru
    _
  // Predicated region
  $region30: #{bert_classifier_forward.1} parent=0 // pred_check
    _
  $region31: #{bert_classifier_forward.1} parent=0 // pred_check_branch
    %43 = sbr.rel (0) target = $region33
  $region32: #{bert_classifier_forward.1} parent=0 // pred_region
    _
  $region33: #{bert_classifier_forward.1} parent=0 // pred_fallthru
    _
  // Predicated region
  $region34: #{bert_classifier_forward.1} parent=0 // pred_check
    _
  $region35: #{bert_classifier_forward.1} parent=0 // pred_check_branch
    %45 = sbr.rel (0) target = $region37
  $region36: #{bert_classifier_forward.1} parent=0 // pred_region
    _
  $region37: #{bert_classifier_forward.1} parent=0 // pred_fallthru
    _
  // Predicated region
  $region38: #{bert_classifier_forward.1} parent=0 // pred_check
    _
  $region39: #{bert_classifier_forward.1} parent=0 // pred_check_branch
    %47 = sbr.rel (0) target = $region41
  $region40: #{bert_classifier_forward.1} parent=0 // pred_region
    _
  $region41: #{bert_classifier_forward.1} parent=0 // pred_fallthru
    _
  // Predicated region
  $region42: #{bert_classifier_forward.1} parent=0 // pred_check
    _
  $region43: #{bert_classifier_forward.1} parent=0 // pred_check_branch
    %49 = sbr.rel (0) target = $region45
  $region44: #{bert_classifier_forward.1} parent=0 // pred_region
    _
  $region45: #{bert_classifier_forward.1} parent=0 // pred_fallthru
    _
  // Predicated region
  $region46: #{bert_classifier_forward.1} parent=0 // pred_check
    _
  $region47: #{bert_classifier_forward.1} parent=0 // pred_check_branch
    %51 = sbr.rel (0) target = $region49
  $region48: #{bert_classifier_forward.1} parent=0 // pred_region
    _
  $region49: #{bert_classifier_forward.1} parent=0 // pred_fallthru
    _
  // Predicated region
  $region50: #{bert_classifier_forward.1} parent=0 // pred_check
    _
  $region51: #{bert_classifier_forward.1} parent=0 // pred_check_branch
    %53 = sbr.rel (0) target = $region53
  $region52: #{bert_classifier_forward.1} parent=0 // pred_region
    _
  $region53: #{bert_classifier_forward.1} parent=0 // pred_fallthru
    _
  // Predicated region
  $region54: #{bert_classifier_forward.1} parent=0 // pred_check
    _
  $region55: #{bert_classifier_forward.1} parent=0 // pred_check_branch
    %55 = sbr.rel (0) target = $region57
  $region56: #{bert_classifier_forward.1} parent=0 // pred_region
    _
  $region57: #{bert_classifier_forward.1} parent=0 // pred_fallthru
    _
  // Predicated region
  $region58: #{bert_classifier_forward.1} parent=0 // pred_check
    _
  $region59: #{bert_classifier_forward.1} parent=0 // pred_check_branch
    %57 = sbr.rel (0) target = $region61
  $region60: #{bert_classifier_forward.1} parent=0 // pred_region
    _
  $region61: #{bert_classifier_forward.1} parent=0 // pred_fallthru
    _
  // Predicated region
  $region62: #{bert_classifier_forward.1} parent=0 // pred_check
    _
  $region63: #{bert_classifier_forward.1} parent=0 // pred_check_branch
    %59 = sbr.rel (0) target = $region65
  $region64: #{bert_classifier_forward.1} parent=0 // pred_region
    _
  $region65: #{bert_classifier_forward.1} parent=0 // pred_fallthru
    _
  // Predicated region
  $region66: #{bert_classifier_forward.1} parent=0 // pred_check
    _
  $region67: #{bert_classifier_forward.1} parent=0 // pred_check_branch
    %61 = sbr.rel (0) target = $region69
  $region68: #{bert_classifier_forward.1} parent=0 // pred_region
    _
  $region69: #{bert_classifier_forward.1} parent=0 // pred_fallthru
    _
  // Predicated region
  $region70: #{bert_classifier_forward.1} parent=0 // pred_check
    _
  $region71: #{bert_classifier_forward.1} parent=0 // pred_check_branch
    %63 = sbr.rel (0) target = $region73
  $region72: #{bert_classifier_forward.1} parent=0 // pred_region
    _
  $region73: #{bert_classifier_forward.1} parent=0 // pred_fallthru
    _
  // Predicated region
  $region74: #{bert_classifier_forward.1} parent=0 // pred_check
    _
  $region75: #{bert_classifier_forward.1} parent=0 // pred_check_branch
    %65 = sbr.rel (0) target = $region77
  $region76: #{bert_classifier_forward.1} parent=0 // pred_region
    _
  $region77: #{bert_classifier_forward.1} parent=0 // pred_fallthru
    _
  // Predicated region
  $region78: #{bert_classifier_forward.1} parent=0 // pred_check
    _
  $region79: #{bert_classifier_forward.1} parent=0 // pred_check_branch
    %67 = sbr.rel (0) target = $region81
  $region80: #{bert_classifier_forward.1} parent=0 // pred_region
    _
  $region81: #{bert_classifier_forward.1} parent=0 // pred_fallthru
    _
  // Predicated region
  $region82: #{bert_classifier_forward.1} parent=0 // pred_check
    _
  $region83: #{bert_classifier_forward.1} parent=0 // pred_check_branch
    %69 = sbr.rel (0) target = $region85
  $region84: #{bert_classifier_forward.1} parent=0 // pred_region
    _
  $region85: #{bert_classifier_forward.1} parent=0 // pred_fallthru
    _
  // Predicated region
  $region86: #{bert_classifier_forward.1} parent=0 // pred_check
    _
  $region87: #{bert_classifier_forward.1} parent=0 // pred_check_branch
    %71 = sbr.rel (0) target = $region89
  $region88: #{bert_classifier_forward.1} parent=0 // pred_region
    _
  $region89: #{bert_classifier_forward.1} parent=0 // pred_fallthru
    _
  // Predicated region
  $region90: #{bert_classifier_forward.1} parent=0 // pred_check
    _
  $region91: #{bert_classifier_forward.1} parent=0 // pred_check_branch
    %73 = sbr.rel (0) target = $region93
  $region92: #{bert_classifier_forward.1} parent=0 // pred_region
    _
  $region93: #{bert_classifier_forward.1} parent=0 // pred_fallthru
    _
  %v74 = vld [vmem:[%s0] sm:$0xff]
  %v75 = vld [vmem:[%s0 + $0x8] sm:$0xff]
  %v76 = vlaneseq
  %v77 = vand.u32 %v76, 127
  %78 = vset.pattern.permute.xlu0 0
  %79 = vperm.xlu0 %78, %v74
  %v80 = vpop.permute.xlu0 %79
  %81 = vset.pattern.permute.xlu0 0
  %82 = vperm.xlu0 %81, %v75
  %v83 = vpop.permute.xlu0 %82
  %vm84 = vcmp.eq.s32.totalorder %v80, %v77
  %vm85 = vcmp.eq.s32.totalorder %v83, %v77
  %v86 = vsel %vm84, 1, 0
  %v87 = vsel %vm85, 1, 0
  %v88 = vcvt.s32.f32 %v86
  %v89 = vcvt.s32.f32 %v87
  %v90 = vld [vmem:[%s2] sm:$0xff]
  %v91 = vld [vmem:[%s2 + $0x8] sm:$0xff]
  %v92 = vld [vmem:[%s2 + $0x10] sm:$0xff]
  %v93 = vld [vmem:[%s2 + $0x18] sm:$0xff]
  %v94 = vld [vmem:[%s2 + $0x20] sm:$0xff]
  %v95 = vld [vmem:[%s2 + $0x28] sm:$0xff]
  %v96 = vld [vmem:[%s2 + $0x30] sm:$0xff]
  %v97 = vld [vmem:[%s2 + $0x38] sm:$0xff]
  %v98 = vld [vmem:[%s2 + $0x40] sm:$0xff]
  %v99 = vld [vmem:[%s2 + $0x48] sm:$0xff]
  %v100 = vld [vmem:[%s2 + $0x50] sm:$0xff]
  %v101 = vld [vmem:[%s2 + $0x58] sm:$0xff]
  %v102 = vld [vmem:[%s2 + $0x60] sm:$0xff]
  %v103 = vld [vmem:[%s2 + $0x68] sm:$0xff]
  %v104 = vld [vmem:[%s2 + $0x70] sm:$0xff]
  %v105 = vld [vmem:[%s2 + $0x78] sm:$0xff]
  %v106 = vld [vmem:[%s3] sm:$0xff]
  %107 = vmatprep.subr.mxu0 0.0
  %108 = vmatpush1.msra.mxu0 %v105
  %109 = vmatprep.subr.mxu0 0.0
  %110 = vmatpush1.msra.mxu0 %v104
  %111 = vmatprep.subr.mxu0 0.0
  %112 = vmatpush1.msra.mxu0 %v103
  %113 = vmatprep.subr.mxu0 0.0
  %114 = vmatpush1.msra.mxu0 %v102
  %115 = vmatprep.subr.mxu0 0.0
  %116 = vmatpush1.msra.mxu0 %v101
  %117 = vmatprep.subr.mxu0 0.0
  %118 = vmatpush1.msra.mxu0 %v100
  %119 = vmatprep.subr.mxu0 0.0
  %120 = vmatpush1.msra.mxu0 %v99
  %121 = vmatprep.subr.mxu0 0.0
  %122 = vmatpush1.msra.mxu0 %v98
  %123 = vmatprep.subr.mxu0 0.0
  %124 = vmatpush1.msra.mxu0 %v97
  %125 = vmatprep.subr.mxu0 0.0
  %126 = vmatpush1.msra.mxu0 %v96
  %127 = vmatprep.subr.mxu0 0.0
  %128 = vmatpush1.msra.mxu0 %v95
  %129 = vmatprep.subr.mxu0 0.0
  %130 = vmatpush1.msra.mxu0 %v94
  %131 = vmatprep.subr.mxu0 0.0
  %132 = vmatpush1.msra.mxu0 %v93
  %133 = vmatprep.subr.mxu0 0.0
  %134 = vmatpush1.msra.mxu0 %v92
  %135 = vmatprep.subr.mxu0 0.0
  %136 = vmatpush1.msra.mxu0 %v91
  %137 = vmatprep.subr.mxu0 0.0
  %138 = vmatpush1.msra.mxu0 %v90
  %139 = vmatprep.subr.mxu0 0.0
  %140 = vmatpush2.msra.mxu0 0.0
  %141 = vmatprep.subr.mxu0 0.0
  %142 = vmatpush2.msra.mxu0 0.0
  %143 = vmatprep.subr.mxu0 0.0
  %144 = vmatpush2.msra.mxu0 0.0
  %145 = vmatprep.subr.mxu0 0.0
  %146 = vmatpush2.msra.mxu0 0.0
  %147 = vmatprep.subr.mxu0 0.0
  %148 = vmatpush2.msra.mxu0 0.0
  %149 = vmatprep.subr.mxu0 0.0
  %150 = vmatpush2.msra.mxu0 0.0
  %151 = vmatprep.subr.mxu0 0.0
  %152 = vmatpush2.msra.mxu0 0.0
  %153 = vmatprep.subr.mxu0 0.0
  %154 = vmatpush2.msra.mxu0 0.0
  %155 = vmatprep.subr.mxu0 0.0
  %156 = vmatpush2.msra.mxu0 0.0
  %157 = vmatprep.subr.mxu0 0.0
  %158 = vmatpush2.msra.mxu0 0.0
  %159 = vmatprep.subr.mxu0 0.0
  %160 = vmatpush2.msra.mxu0 0.0
  %161 = vmatprep.subr.mxu0 0.0
  %162 = vmatpush2.msra.mxu0 0.0
  %163 = vmatprep.subr.mxu0 0.0
  %164 = vmatpush2.msra.mxu0 0.0
  %165 = vmatprep.subr.mxu0 0.0
  %166 = vmatpush2.msra.mxu0 0.0
  %167 = vmatprep.subr.mxu0 0.0
  %168 = vmatpush2.msra.mxu0 0.0
  %169 = vmatprep.subr.mxu0 0.0
  %170 = vmatpush2.msra.mxu0 0.0
  %171 = vmatprep.mubr.f32.mxu0 0.0
  %172 = vmatmul.mubr.f32.gmra.mxu0 %v88
  %v173 = vpop.f32.mrf.mxu0
  %v174 = vadd.f32 %v106, %v173
  %v175 = vpop.f32.mrf.mxu0
  %176 = vmatprep.mubr.f32.mxu0 0.0
  %177 = vmatmul.mubr.f32.gmra.mxu0 %v89
  %v178 = vpop.f32.mrf.mxu0
  %v179 = vadd.f32 %v106, %v178
  %v180 = vpop.f32.mrf.mxu0
  %181 = vdwg.mxu0
  %v182 = vld [vmem:[%s4] sm:$0x1]
  %v183 = vlaneseq
  %v184 = vshrl.u32 %v183, 7
  %v185 = vsub.s32 0, %v184
  %v186 = vrot.slane %v182, %v185
  %v187 = vadd.f32 %v174, %v186
  %v188 = vadd.f32 %v179, %v186
  %v189 = vld [vmem:[%s5] sm:$0x1]
  %v190 = vld [vmem:[%s6] sm:$0x1]
  %vm191 = vcmask 261120
  %v192 = vsel %vm191, %v187, 0.0
  %193 = vadd.xlane.f32.xlu0 %v192
  %v194 = vpop.xlane.xlu0 %193
  %v195 = vsel %vm191, %v188, 0.0
  %196 = vadd.xlane.f32.xlu0 %v195
  %v197 = vpop.xlane.xlu0 %196
  %v198 = vrcp.pop 32.0
  %v199 = vmul.f32 %v194, %v198
  %v200 = vmul.f32 %v197, %v198
  %v201 = vsub.f32 %v187, %v199
  %v202 = vsub.f32 %v188, %v200
  %v203 = vmul.f32 %v201, %v201
  %v204 = vmul.f32 %v202, %v202
  %v205 = vsel %vm191, %v203, 0.0
  %206 = vadd.xlane.f32.xlu0 %v205
  %v207 = vpop.xlane.xlu0 %206
  %v208 = vsel %vm191, %v204, 0.0
  %209 = vadd.xlane.f32.xlu0 %v208
  %v210 = vpop.xlane.xlu0 %209
  %v211 = vmul.f32 %v207, %v198
  %v212 = vmul.f32 %v210, %v198
  %v213 = vadd.f32 %v211, 1e-12
  %v214 = vadd.f32 %v212, 1e-12
  %v215 = vrsqrt.pop %v213
  %v216 = vrsqrt.pop %v214
  %v217 = vmul.f32 %v201, %v215
  %v218 = vmul.f32 %v202, %v216
  %v220 = vlaneseq
  %v221 = vshrl.u32 %v220, 7
  %v222 = vsub.s32 0, %v221
  %v223 = vrot.slane %v189, %v222
  %v225 = vmul.f32 %v217, %v223
  %v226 = vmul.f32 %v218, %v223
  %v228 = vlaneseq
  %v229 = vshrl.u32 %v228, 7
  %v230 = vsub.s32 0, %v229
  %v231 = vrot.slane %v190, %v230
  %v233 = vadd.f32 %v225, %v231
  %v234 = vadd.f32 %v226, %v231
  %v235 = vld [vmem:[%s1] sm:$0x1]
  %v236 = vld [vmem:[%s1 + $0x1] sm:$0x1]
  %v237 = vsub.f32 1.0, %v235
  %v238 = vsub.f32 1.0, %v236
  %v239 = vmul.f32 %v237, -1e+09
  %v240 = vmul.f32 %v238, -1e+09
  %v241 = vld [vmem:[%s7] sm:$0xff]
  %v242 = vld [vmem:[%s7 + $0x8] sm:$0xff]
  %v243 = vld [vmem:[%s7 + $0x10] sm:$0xff]
  %v244 = vld [vmem:[%s7 + $0x18] sm:$0xff]
  %v245 = vld [vmem:[%s8] sm:$0x1]
  %v247 = vlaneseq
  %v248 = vshrl.u32 %v247, 7
  %v249 = vsub.s32 0, %v248
  %v250 = vrot.slane %v245, %v249
  %v253 = vsel %vm191, %v233, 0
  %v256 = vsel %vm191, %v234, 0
  %258 = vmatprep.subr.mxu0 0.0
  %259 = vmatpush1.msra.mxu0 0.0
  %260 = vmatprep.subr.mxu0 0.0
  %261 = vmatpush1.msra.mxu0 0.0
  %262 = vmatprep.subr.mxu0 0.0
  %263 = vmatpush1.msra.mxu0 0.0
  %264 = vmatprep.subr.mxu0 0.0
  %265 = vmatpush1.msra.mxu0 0.0
  %266 = vmatprep.subr.mxu0 0.0
  %267 = vmatpush1.msra.mxu0 0.0
  %268 = vmatprep.subr.mxu0 0.0
  %269 = vmatpush1.msra.mxu0 0.0
  %270 = vmatprep.subr.mxu0 0.0
  %271 = vmatpush1.msra.mxu0 0.0
  %272 = vmatprep.subr.mxu0 0.0
  %273 = vmatpush1.msra.mxu0 0.0
  %274 = vmatprep.subr.mxu0 0.0
  %275 = vmatpush1.msra.mxu0 0.0
  %276 = vmatprep.subr.mxu0 0.0
  %277 = vmatpush1.msra.mxu0 0.0
  %278 = vmatprep.subr.mxu0 0.0
  %279 = vmatpush1.msra.mxu0 0.0
  %280 = vmatprep.subr.mxu0 0.0
  %281 = vmatpush1.msra.mxu0 0.0
  %282 = vmatprep.subr.mxu0 0.0
  %283 = vmatpush1.msra.mxu0 %v244
  %284 = vmatprep.subr.mxu0 0.0
  %285 = vmatpush1.msra.mxu0 %v243
  %286 = vmatprep.subr.mxu0 0.0
  %287 = vmatpush1.msra.mxu0 %v242
  %288 = vmatprep.subr.mxu0 0.0
  %289 = vmatpush1.msra.mxu0 %v241
  %290 = vmatprep.subr.mxu0 0.0
  %291 = vmatpush2.msra.mxu0 0.0
  %292 = vmatprep.subr.mxu0 0.0
  %293 = vmatpush2.msra.mxu0 0.0
  %294 = vmatprep.subr.mxu0 0.0
  %295 = vmatpush2.msra.mxu0 0.0
  %296 = vmatprep.subr.mxu0 0.0
  %297 = vmatpush2.msra.mxu0 0.0
  %298 = vmatprep.subr.mxu0 0.0
  %299 = vmatpush2.msra.mxu0 0.0
  %300 = vmatprep.subr.mxu0 0.0
  %301 = vmatpush2.msra.mxu0 0.0
  %302 = vmatprep.subr.mxu0 0.0
  %303 = vmatpush2.msra.mxu0 0.0
  %304 = vmatprep.subr.mxu0 0.0
  %305 = vmatpush2.msra.mxu0 0.0
  %306 = vmatprep.subr.mxu0 0.0
  %307 = vmatpush2.msra.mxu0 0.0
  %308 = vmatprep.subr.mxu0 0.0
  %309 = vmatpush2.msra.mxu0 0.0
  %310 = vmatprep.subr.mxu0 0.0
  %311 = vmatpush2.msra.mxu0 0.0
  %312 = vmatprep.subr.mxu0 0.0
  %313 = vmatpush2.msra.mxu0 0.0
  %314 = vmatprep.subr.mxu0 0.0
  %315 = vmatpush2.msra.mxu0 0.0
  %316 = vmatprep.subr.mxu0 0.0
  %317 = vmatpush2.msra.mxu0 0.0
  %318 = vmatprep.subr.mxu0 0.0
  %319 = vmatpush2.msra.mxu0 0.0
  %320 = vmatprep.subr.mxu0 0.0
  %321 = vmatpush2.msra.mxu0 0.0
  %322 = vmatprep.mubr.f32.mxu0 0.0
  %323 = vmatmul.mubr.f32.gmra.mxu0 %v253
  %v324 = vpop.f32.mrf.mxu0
  %v325 = vadd.f32 %v250, %v324
  %v326 = vpop.f32.mrf.mxu0
  %327 = vmatprep.mubr.f32.mxu0 0.0
  %328 = vmatmul.mubr.f32.gmra.mxu0 %v256
  %v329 = vpop.f32.mrf.mxu0
  %v330 = vadd.f32 %v250, %v329
  %v331 = vpop.f32.mrf.mxu0
  %332 = vdwg.mxu0
  %335 = vrot.lane.b32.xlu0 %v325, 112
  %v336 = vpop.permute.xlu0 %335
  %337 = vrot.lane.b32.xlu0 %v330, 112
  %v338 = vpop.permute.xlu0 %337
  %339 = vrot.lane.b32.xlu0 %v325, 96
  %v340 = vpop.permute.xlu0 %339
  %vm341 = vcmask 130048
  %v342 = vsel %vm341, %v325, 0
  %v344 = vsel %vm341, %v340, 0
  %346 = vmatprep.subr.mxu0 0.0
  %347 = vmatpush1.xpose.msra.mxu0 0.0
  %348 = vmatprep.subr.mxu0 0.0
  %349 = vmatpush1.xpose.msra.mxu0 0.0
  %350 = vmatprep.subr.mxu0 0.0
  %351 = vmatpush1.xpose.msra.mxu0 0.0
  %352 = vmatprep.subr.mxu0 0.0
  %353 = vmatpush1.xpose.msra.mxu0 0.0
  %354 = vmatprep.subr.mxu0 0.0
  %355 = vmatpush1.xpose.msra.mxu0 0.0
  %356 = vmatprep.subr.mxu0 0.0
  %357 = vmatpush1.xpose.msra.mxu0 0.0
  %358 = vmatprep.subr.mxu0 0.0
  %359 = vmatpush1.xpose.msra.mxu0 0.0
  %360 = vmatprep.subr.mxu0 0.0
  %361 = vmatpush1.xpose.msra.mxu0 0.0
  %362 = vmatprep.subr.mxu0 0.0
  %363 = vmatpush1.xpose.msra.mxu0 0.0
  %364 = vmatprep.subr.mxu0 0.0
  %365 = vmatpush1.xpose.msra.mxu0 0.0
  %366 = vmatprep.subr.mxu0 0.0
  %367 = vmatpush1.xpose.msra.mxu0 0.0
  %368 = vmatprep.subr.mxu0 0.0
  %369 = vmatpush1.xpose.msra.mxu0 0.0
  %370 = vmatprep.subr.mxu0 0.0
  %371 = vmatpush1.xpose.msra.mxu0 0.0
  %372 = vmatprep.subr.mxu0 0.0
  %373 = vmatpush1.xpose.msra.mxu0 0.0
  %374 = vmatprep.subr.mxu0 0.0
  %375 = vmatpush1.xpose.msra.mxu0 0.0
  %376 = vmatprep.subr.mxu0 0.0
  %377 = vmatpush1.xpose.msra.mxu0 %v344
  %378 = vmatprep.subr.mxu0 0.0
  %379 = vmatpush2.xpose.msra.mxu0 0.0
  %380 = vmatprep.subr.mxu0 0.0
  %381 = vmatpush2.xpose.msra.mxu0 0.0
  %382 = vmatprep.subr.mxu0 0.0
  %383 = vmatpush2.xpose.msra.mxu0 0.0
  %384 = vmatprep.subr.mxu0 0.0
  %385 = vmatpush2.xpose.msra.mxu0 0.0
  %386 = vmatprep.subr.mxu0 0.0
  %387 = vmatpush2.xpose.msra.mxu0 0.0
  %388 = vmatprep.subr.mxu0 0.0
  %389 = vmatpush2.xpose.msra.mxu0 0.0
  %390 = vmatprep.subr.mxu0 0.0
  %391 = vmatpush2.xpose.msra.mxu0 0.0
  %392 = vmatprep.subr.mxu0 0.0
  %393 = vmatpush2.xpose.msra.mxu0 0.0
  %394 = vmatprep.subr.mxu0 0.0
  %395 = vmatpush2.xpose.msra.mxu0 0.0
  %396 = vmatprep.subr.mxu0 0.0
  %397 = vmatpush2.xpose.msra.mxu0 0.0
  %398 = vmatprep.subr.mxu0 0.0
  %399 = vmatpush2.xpose.msra.mxu0 0.0
  %400 = vmatprep.subr.mxu0 0.0
  %401 = vmatpush2.xpose.msra.mxu0 0.0
  %402 = vmatprep.subr.mxu0 0.0
  %403 = vmatpush2.xpose.msra.mxu0 0.0
  %404 = vmatprep.subr.mxu0 0.0
  %405 = vmatpush2.xpose.msra.mxu0 0.0
  %406 = vmatprep.subr.mxu0 0.0
  %407 = vmatpush2.xpose.msra.mxu0 0.0
  %408 = vmatprep.subr.mxu0 0.0
  %409 = vmatpush2.xpose.msra.mxu0 0.0
  %410 = vmatprep.mubr.f32.mxu0 0.0
  %411 = vmatmul.mubr.f32.gmra.mxu0 %v342
  %v412 = vpop.f32.mrf.mxu0
  %v413 = vadd.f32 0.0, %v412
  %v414 = vpop.f32.mrf.mxu0
  %415 = vdwg.mxu0
  %416 = vrot.lane.b32.xlu0 %v330, 96
  %v417 = vpop.permute.xlu0 %416
  %v418 = vsel %vm341, %v330, 0
  %v420 = vsel %vm341, %v417, 0
  %422 = vmatprep.subr.mxu0 0.0
  %423 = vmatpush1.xpose.msra.mxu0 0.0
  %424 = vmatprep.subr.mxu0 0.0
  %425 = vmatpush1.xpose.msra.mxu0 0.0
  %426 = vmatprep.subr.mxu0 0.0
  %427 = vmatpush1.xpose.msra.mxu0 0.0
  %428 = vmatprep.subr.mxu0 0.0
  %429 = vmatpush1.xpose.msra.mxu0 0.0
  %430 = vmatprep.subr.mxu0 0.0
  %431 = vmatpush1.xpose.msra.mxu0 0.0
  %432 = vmatprep.subr.mxu0 0.0
  %433 = vmatpush1.xpose.msra.mxu0 0.0
  %434 = vmatprep.subr.mxu0 0.0
  %435 = vmatpush1.xpose.msra.mxu0 0.0
  %436 = vmatprep.subr.mxu0 0.0
  %437 = vmatpush1.xpose.msra.mxu0 0.0
  %438 = vmatprep.subr.mxu0 0.0
  %439 = vmatpush1.xpose.msra.mxu0 0.0
  %440 = vmatprep.subr.mxu0 0.0
  %441 = vmatpush1.xpose.msra.mxu0 0.0
  %442 = vmatprep.subr.mxu0 0.0
  %443 = vmatpush1.xpose.msra.mxu0 0.0
  %444 = vmatprep.subr.mxu0 0.0
  %445 = vmatpush1.xpose.msra.mxu0 0.0
  %446 = vmatprep.subr.mxu0 0.0
  %447 = vmatpush1.xpose.msra.mxu0 0.0
  %448 = vmatprep.subr.mxu0 0.0
  %449 = vmatpush1.xpose.msra.mxu0 0.0
  %450 = vmatprep.subr.mxu0 0.0
  %451 = vmatpush1.xpose.msra.mxu0 0.0
  %452 = vmatprep.subr.mxu0 0.0
  %453 = vmatpush1.xpose.msra.mxu0 %v420
  %454 = vmatprep.subr.mxu0 0.0
  %455 = vmatpush2.xpose.msra.mxu0 0.0
  %456 = vmatprep.subr.mxu0 0.0
  %457 = vmatpush2.xpose.msra.mxu0 0.0
  %458 = vmatprep.subr.mxu0 0.0
  %459 = vmatpush2.xpose.msra.mxu0 0.0
  %460 = vmatprep.subr.mxu0 0.0
  %461 = vmatpush2.xpose.msra.mxu0 0.0
  %462 = vmatprep.subr.mxu0 0.0
  %463 = vmatpush2.xpose.msra.mxu0 0.0
  %464 = vmatprep.subr.mxu0 0.0
  %465 = vmatpush2.xpose.msra.mxu0 0.0
  %466 = vmatprep.subr.mxu0 0.0
  %467 = vmatpush2.xpose.msra.mxu0 0.0
  %468 = vmatprep.subr.mxu0 0.0
  %469 = vmatpush2.xpose.msra.mxu0 0.0
  %470 = vmatprep.subr.mxu0 0.0
  %471 = vmatpush2.xpose.msra.mxu0 0.0
  %472 = vmatprep.subr.mxu0 0.0
  %473 = vmatpush2.xpose.msra.mxu0 0.0
  %474 = vmatprep.subr.mxu0 0.0
  %475 = vmatpush2.xpose.msra.mxu0 0.0
  %476 = vmatprep.subr.mxu0 0.0
  %477 = vmatpush2.xpose.msra.mxu0 0.0
  %478 = vmatprep.subr.mxu0 0.0
  %479 = vmatpush2.xpose.msra.mxu0 0.0
  %480 = vmatprep.subr.mxu0 0.0
  %481 = vmatpush2.xpose.msra.mxu0 0.0
  %482 = vmatprep.subr.mxu0 0.0
  %483 = vmatpush2.xpose.msra.mxu0 0.0
  %484 = vmatprep.subr.mxu0 0.0
  %485 = vmatpush2.xpose.msra.mxu0 0.0
  %486 = vmatprep.mubr.f32.mxu0 0.0
  %487 = vmatmul.mubr.f32.gmra.mxu0 %v418
  %v488 = vpop.f32.mrf.mxu0
  %v489 = vadd.f32 0.0, %v488
  %v490 = vpop.f32.mrf.mxu0
  %491 = vdwg.mxu0
  %492 = vrot.lane.b32.xlu0 %v336, 96
  %v493 = vpop.permute.xlu0 %492
  %v494 = vsel %vm341, %v336, 0
  %v496 = vsel %vm341, %v493, 0
  %498 = vmatprep.subr.mxu0 0.0
  %499 = vmatpush1.xpose.msra.mxu0 0.0
  %500 = vmatprep.subr.mxu0 0.0
  %501 = vmatpush1.xpose.msra.mxu0 0.0
  %502 = vmatprep.subr.mxu0 0.0
  %503 = vmatpush1.xpose.msra.mxu0 0.0
  %504 = vmatprep.subr.mxu0 0.0
  %505 = vmatpush1.xpose.msra.mxu0 0.0
  %506 = vmatprep.subr.mxu0 0.0
  %507 = vmatpush1.xpose.msra.mxu0 0.0
  %508 = vmatprep.subr.mxu0 0.0
  %509 = vmatpush1.xpose.msra.mxu0 0.0
  %510 = vmatprep.subr.mxu0 0.0
  %511 = vmatpush1.xpose.msra.mxu0 0.0
  %512 = vmatprep.subr.mxu0 0.0
  %513 = vmatpush1.xpose.msra.mxu0 0.0
  %514 = vmatprep.subr.mxu0 0.0
  %515 = vmatpush1.xpose.msra.mxu0 0.0
  %516 = vmatprep.subr.mxu0 0.0
  %517 = vmatpush1.xpose.msra.mxu0 0.0
  %518 = vmatprep.subr.mxu0 0.0
  %519 = vmatpush1.xpose.msra.mxu0 0.0
  %520 = vmatprep.subr.mxu0 0.0
  %521 = vmatpush1.xpose.msra.mxu0 0.0
  %522 = vmatprep.subr.mxu0 0.0
  %523 = vmatpush1.xpose.msra.mxu0 0.0
  %524 = vmatprep.subr.mxu0 0.0
  %525 = vmatpush1.xpose.msra.mxu0 0.0
  %526 = vmatprep.subr.mxu0 0.0
  %527 = vmatpush1.xpose.msra.mxu0 0.0
  %528 = vmatprep.subr.mxu0 0.0
  %529 = vmatpush1.xpose.msra.mxu0 %v496
  %530 = vmatprep.subr.mxu0 0.0
  %531 = vmatpush2.xpose.msra.mxu0 0.0
  %532 = vmatprep.subr.mxu0 0.0
  %533 = vmatpush2.xpose.msra.mxu0 0.0
  %534 = vmatprep.subr.mxu0 0.0
  %535 = vmatpush2.xpose.msra.mxu0 0.0
  %536 = vmatprep.subr.mxu0 0.0
  %537 = vmatpush2.xpose.msra.mxu0 0.0
  %538 = vmatprep.subr.mxu0 0.0
  %539 = vmatpush2.xpose.msra.mxu0 0.0
  %540 = vmatprep.subr.mxu0 0.0
  %541 = vmatpush2.xpose.msra.mxu0 0.0
  %542 = vmatprep.subr.mxu0 0.0
  %543 = vmatpush2.xpose.msra.mxu0 0.0
  %544 = vmatprep.subr.mxu0 0.0
  %545 = vmatpush2.xpose.msra.mxu0 0.0
  %546 = vmatprep.subr.mxu0 0.0
  %547 = vmatpush2.xpose.msra.mxu0 0.0
  %548 = vmatprep.subr.mxu0 0.0
  %549 = vmatpush2.xpose.msra.mxu0 0.0
  %550 = vmatprep.subr.mxu0 0.0
  %551 = vmatpush2.xpose.msra.mxu0 0.0
  %552 = vmatprep.subr.mxu0 0.0
  %553 = vmatpush2.xpose.msra.mxu0 0.0
  %554 = vmatprep.subr.mxu0 0.0
  %555 = vmatpush2.xpose.msra.mxu0 0.0
  %556 = vmatprep.subr.mxu0 0.0
  %557 = vmatpush2.xpose.msra.mxu0 0.0
  %558 = vmatprep.subr.mxu0 0.0
  %559 = vmatpush2.xpose.msra.mxu0 0.0
  %560 = vmatprep.subr.mxu0 0.0
  %561 = vmatpush2.xpose.msra.mxu0 0.0
  %562 = vmatprep.mubr.f32.mxu0 0.0
  %563 = vmatmul.mubr.f32.gmra.mxu0 %v494
  %v564 = vpop.f32.mrf.mxu0
  %v565 = vadd.f32 0.0, %v564
  %v566 = vpop.f32.mrf.mxu0
  %567 = vdwg.mxu0
  %568 = vrot.lane.b32.xlu0 %v338, 96
  %v569 = vpop.permute.xlu0 %568
  %v570 = vsel %vm341, %v338, 0
  %v572 = vsel %vm341, %v569, 0
  %574 = vmatprep.subr.mxu0 0.0
  %575 = vmatpush1.xpose.msra.mxu0 0.0
  %576 = vmatprep.subr.mxu0 0.0
  %577 = vmatpush1.xpose.msra.mxu0 0.0
  %578 = vmatprep.subr.mxu0 0.0
  %579 = vmatpush1.xpose.msra.mxu0 0.0
  %580 = vmatprep.subr.mxu0 0.0
  %581 = vmatpush1.xpose.msra.mxu0 0.0
  %582 = vmatprep.subr.mxu0 0.0
  %583 = vmatpush1.xpose.msra.mxu0 0.0
  %584 = vmatprep.subr.mxu0 0.0
  %585 = vmatpush1.xpose.msra.mxu0 0.0
  %586 = vmatprep.subr.mxu0 0.0
  %587 = vmatpush1.xpose.msra.mxu0 0.0
  %588 = vmatprep.subr.mxu0 0.0
  %589 = vmatpush1.xpose.msra.mxu0 0.0
  %590 = vmatprep.subr.mxu0 0.0
  %591 = vmatpush1.xpose.msra.mxu0 0.0
  %592 = vmatprep.subr.mxu0 0.0
  %593 = vmatpush1.xpose.msra.mxu0 0.0
  %594 = vmatprep.subr.mxu0 0.0
  %595 = vmatpush1.xpose.msra.mxu0 0.0
  %596 = vmatprep.subr.mxu0 0.0
  %597 = vmatpush1.xpose.msra.mxu0 0.0
  %598 = vmatprep.subr.mxu0 0.0
  %599 = vmatpush1.xpose.msra.mxu0 0.0
  %600 = vmatprep.subr.mxu0 0.0
  %601 = vmatpush1.xpose.msra.mxu0 0.0
  %602 = vmatprep.subr.mxu0 0.0
  %603 = vmatpush1.xpose.msra.mxu0 0.0
  %604 = vmatprep.subr.mxu0 0.0
  %605 = vmatpush1.xpose.msra.mxu0 %v572
  %606 = vmatprep.subr.mxu0 0.0
  %607 = vmatpush2.xpose.msra.mxu0 0.0
  %608 = vmatprep.subr.mxu0 0.0
  %609 = vmatpush2.xpose.msra.mxu0 0.0
  %610 = vmatprep.subr.mxu0 0.0
  %611 = vmatpush2.xpose.msra.mxu0 0.0
  %612 = vmatprep.subr.mxu0 0.0
  %613 = vmatpush2.xpose.msra.mxu0 0.0
  %614 = vmatprep.subr.mxu0 0.0
  %615 = vmatpush2.xpose.msra.mxu0 0.0
  %616 = vmatprep.subr.mxu0 0.0
  %617 = vmatpush2.xpose.msra.mxu0 0.0
  %618 = vmatprep.subr.mxu0 0.0
  %619 = vmatpush2.xpose.msra.mxu0 0.0
  %620 = vmatprep.subr.mxu0 0.0
  %621 = vmatpush2.xpose.msra.mxu0 0.0
  %622 = vmatprep.subr.mxu0 0.0
  %623 = vmatpush2.xpose.msra.mxu0 0.0
  %624 = vmatprep.subr.mxu0 0.0
  %625 = vmatpush2.xpose.msra.mxu0 0.0
  %626 = vmatprep.subr.mxu0 0.0
  %627 = vmatpush2.xpose.msra.mxu0 0.0
  %628 = vmatprep.subr.mxu0 0.0
  %629 = vmatpush2.xpose.msra.mxu0 0.0
  %630 = vmatprep.subr.mxu0 0.0
  %631 = vmatpush2.xpose.msra.mxu0 0.0
  %632 = vmatprep.subr.mxu0 0.0
  %633 = vmatpush2.xpose.msra.mxu0 0.0
  %634 = vmatprep.subr.mxu0 0.0
  %635 = vmatpush2.xpose.msra.mxu0 0.0
  %636 = vmatprep.subr.mxu0 0.0
  %637 = vmatpush2.xpose.msra.mxu0 0.0
  %638 = vmatprep.mubr.f32.mxu0 0.0
  %639 = vmatmul.mubr.f32.gmra.mxu0 %v570
  %v640 = vpop.f32.mrf.mxu0
  %v641 = vadd.f32 0.0, %v640
  %v642 = vpop.f32.mrf.mxu0
  %643 = vdwg.mxu0
  %v644 = vmul.f32 %v413, 0.25
  %v645 = vmul.f32 %v489, 0.25
  %v646 = vmul.f32 %v565, 0.25
  %v647 = vmul.f32 %v641, 0.25
  %v650 = vlaneseq
  %v651 = vshrl.u32 %v650, 7
  %v652 = vsub.s32 0, %v651
  %v653 = vrot.slane %v239, %v652
  %v654 = vlaneseq
  %v655 = vshrl.u32 %v654, 7
  %v656 = vsub.s32 0, %v655
  %v657 = vrot.slane %v240, %v656
  %v660 = vadd.f32 %v644, %v653
  %v661 = vadd.f32 %v645, %v657
  %v662 = vadd.f32 %v646, %v653
  %v663 = vadd.f32 %v647, %v657
  %vm664 = vcmask 64512
  %v665 = vsel %vm664, %v660, -inf
  %666 = vmax.xlane.f32.xlu0 %v665
  %v667 = vpop.xlane.xlu0 %666
  %v668 = vsel %vm664, %v661, -inf
  %669 = vmax.xlane.f32.xlu0 %v668
  %v670 = vpop.xlane.xlu0 %669
  %v671 = vsel %vm664, %v662, -inf
  %672 = vmax.xlane.f32.xlu0 %v671
  %v673 = vpop.xlane.xlu0 %672
  %v674 = vsel %vm664, %v663, -inf
  %675 = vmax.xlane.f32.xlu0 %v674
  %v676 = vpop.xlane.xlu0 %675
  %v677 = vsub.f32 %v660, %v667
  %v678 = vsub.f32 %v661, %v670
  %v679 = vsub.f32 %v662, %v673
  %v680 = vsub.f32 %v663, %v676
  %v681 = vmul.f32 %v677, 1.442695
  %v682 = vpow.pop %v681
  %v683 = vmul.f32 %v678, 1.442695
  %v684 = vpow.pop %v683
  %v685 = vmul.f32 %v679, 1.442695
  %v686 = vpow.pop %v685
  %v687 = vmul.f32 %v680, 1.442695
  %v688 = vpow.pop %v687
  %v689 = vsel %vm664, %v682, 0.0
  %690 = vadd.xlane.f32.xlu0 %v689
  %v691 = vpop.xlane.xlu0 %690
  %v692 = vsel %vm664, %v684, 0.0
  %693 = vadd.xlane.f32.xlu0 %v692
  %v694 = vpop.xlane.xlu0 %693
  %v695 = vsel %vm664, %v686, 0.0
  %696 = vadd.xlane.f32.xlu0 %v695
  %v697 = vpop.xlane.xlu0 %696
  %v698 = vsel %vm664, %v688, 0.0
  %699 = vadd.xlane.f32.xlu0 %v698
  %v700 = vpop.xlane.xlu0 %699
  %v701 = vrcp.pop %v691
  %v702 = vrcp.pop %v694
  %v703 = vrcp.pop %v697
  %v704 = vrcp.pop %v700
  %v705 = vmul.f32 %v682, %v701
  %v706 = vmul.f32 %v684, %v702
  %v707 = vmul.f32 %v686, %v703
  %v708 = vmul.f32 %v688, %v704
  %709 = vrot.lane.b32.xlu0 %v325, 64
  %v710 = vpop.permute.xlu0 %709
  %v713 = vsel %vm664, %v705, 0
  %715 = vmatprep.subr.mxu0 0.0
  %716 = vmatpush1.msra.mxu0 0.0
  %717 = vmatprep.subr.mxu0 0.0
  %718 = vmatpush1.msra.mxu0 0.0
  %719 = vmatprep.subr.mxu0 0.0
  %720 = vmatpush1.msra.mxu0 0.0
  %721 = vmatprep.subr.mxu0 0.0
  %722 = vmatpush1.msra.mxu0 0.0
  %723 = vmatprep.subr.mxu0 0.0
  %724 = vmatpush1.msra.mxu0 0.0
  %725 = vmatprep.subr.mxu0 0.0
  %726 = vmatpush1.msra.mxu0 0.0
  %727 = vmatprep.subr.mxu0 0.0
  %728 = vmatpush1.msra.mxu0 0.0
  %729 = vmatprep.subr.mxu0 0.0
  %730 = vmatpush1.msra.mxu0 0.0
  %731 = vmatprep.subr.mxu0 0.0
  %732 = vmatpush1.msra.mxu0 0.0
  %733 = vmatprep.subr.mxu0 0.0
  %734 = vmatpush1.msra.mxu0 0.0
  %735 = vmatprep.subr.mxu0 0.0
  %736 = vmatpush1.msra.mxu0 0.0
  %737 = vmatprep.subr.mxu0 0.0
  %738 = vmatpush1.msra.mxu0 0.0
  %739 = vmatprep.subr.mxu0 0.0
  %740 = vmatpush1.msra.mxu0 0.0
  %741 = vmatprep.subr.mxu0 0.0
  %742 = vmatpush1.msra.mxu0 0.0
  %743 = vmatprep.subr.mxu0 0.0
  %744 = vmatpush1.msra.mxu0 0.0
  %745 = vmatprep.subr.mxu0 0.0
  %746 = vmatpush1.msra.mxu0 %v710
  %747 = vmatprep.subr.mxu0 0.0
  %748 = vmatpush2.msra.mxu0 0.0
  %749 = vmatprep.subr.mxu0 0.0
  %750 = vmatpush2.msra.mxu0 0.0
  %751 = vmatprep.subr.mxu0 0.0
  %752 = vmatpush2.msra.mxu0 0.0
  %753 = vmatprep.subr.mxu0 0.0
  %754 = vmatpush2.msra.mxu0 0.0
  %755 = vmatprep.subr.mxu0 0.0
  %756 = vmatpush2.msra.mxu0 0.0
  %757 = vmatprep.subr.mxu0 0.0
  %758 = vmatpush2.msra.mxu0 0.0
  %759 = vmatprep.subr.mxu0 0.0
  %760 = vmatpush2.msra.mxu0 0.0
  %761 = vmatprep.subr.mxu0 0.0
  %762 = vmatpush2.msra.mxu0 0.0
  %763 = vmatprep.subr.mxu0 0.0
  %764 = vmatpush2.msra.mxu0 0.0
  %765 = vmatprep.subr.mxu0 0.0
  %766 = vmatpush2.msra.mxu0 0.0
  %767 = vmatprep.subr.mxu0 0.0
  %768 = vmatpush2.msra.mxu0 0.0
  %769 = vmatprep.subr.mxu0 0.0
  %770 = vmatpush2.msra.mxu0 0.0
  %771 = vmatprep.subr.mxu0 0.0
  %772 = vmatpush2.msra.mxu0 0.0
  %773 = vmatprep.subr.mxu0 0.0
  %774 = vmatpush2.msra.mxu0 0.0
  %775 = vmatprep.subr.mxu0 0.0
  %776 = vmatpush2.msra.mxu0 0.0
  %777 = vmatprep.subr.mxu0 0.0
  %778 = vmatpush2.msra.mxu0 0.0
  %779 = vmatprep.mubr.f32.mxu0 0.0
  %780 = vmatmul.mubr.f32.gmra.mxu0 %v713
  %v781 = vpop.f32.mrf.mxu0
  %v782 = vadd.f32 0.0, %v781
  %v783 = vpop.f32.mrf.mxu0
  %784 = vdwg.mxu0
  %785 = vrot.lane.b32.xlu0 %v330, 64
  %v786 = vpop.permute.xlu0 %785
  %v789 = vsel %vm664, %v706, 0
  %791 = vmatprep.subr.mxu0 0.0
  %792 = vmatpush1.msra.mxu0 0.0
  %793 = vmatprep.subr.mxu0 0.0
  %794 = vmatpush1.msra.mxu0 0.0
  %795 = vmatprep.subr.mxu0 0.0
  %796 = vmatpush1.msra.mxu0 0.0
  %797 = vmatprep.subr.mxu0 0.0
  %798 = vmatpush1.msra.mxu0 0.0
  %799 = vmatprep.subr.mxu0 0.0
  %800 = vmatpush1.msra.mxu0 0.0
  %801 = vmatprep.subr.mxu0 0.0
  %802 = vmatpush1.msra.mxu0 0.0
  %803 = vmatprep.subr.mxu0 0.0
  %804 = vmatpush1.msra.mxu0 0.0
  %805 = vmatprep.subr.mxu0 0.0
  %806 = vmatpush1.msra.mxu0 0.0
  %807 = vmatprep.subr.mxu0 0.0
  %808 = vmatpush1.msra.mxu0 0.0
  %809 = vmatprep.subr.mxu0 0.0
  %810 = vmatpush1.msra.mxu0 0.0
  %811 = vmatprep.subr.mxu0 0.0
  %812 = vmatpush1.msra.mxu0 0.0
  %813 = vmatprep.subr.mxu0 0.0
  %814 = vmatpush1.msra.mxu0 0.0
  %815 = vmatprep.subr.mxu0 0.0
  %816 = vmatpush1.msra.mxu0 0.0
  %817 = vmatprep.subr.mxu0 0.0
  %818 = vmatpush1.msra.mxu0 0.0
  %819 = vmatprep.subr.mxu0 0.0
  %820 = vmatpush1.msra.mxu0 0.0
  %821 = vmatprep.subr.mxu0 0.0
  %822 = vmatpush1.msra.mxu0 %v786
  %823 = vmatprep.subr.mxu0 0.0
  %824 = vmatpush2.msra.mxu0 0.0
  %825 = vmatprep.subr.mxu0 0.0
  %826 = vmatpush2.msra.mxu0 0.0
  %827 = vmatprep.subr.mxu0 0.0
  %828 = vmatpush2.msra.mxu0 0.0
  %829 = vmatprep.subr.mxu0 0.0
  %830 = vmatpush2.msra.mxu0 0.0
  %831 = vmatprep.subr.mxu0 0.0
  %832 = vmatpush2.msra.mxu0 0.0
  %833 = vmatprep.subr.mxu0 0.0
  %834 = vmatpush2.msra.mxu0 0.0
  %835 = vmatprep.subr.mxu0 0.0
  %836 = vmatpush2.msra.mxu0 0.0
  %837 = vmatprep.subr.mxu0 0.0
  %838 = vmatpush2.msra.mxu0 0.0
  %839 = vmatprep.subr.mxu0 0.0
  %840 = vmatpush2.msra.mxu0 0.0
  %841 = vmatprep.subr.mxu0 0.0
  %842 = vmatpush2.msra.mxu0 0.0
  %843 = vmatprep.subr.mxu0 0.0
  %844 = vmatpush2.msra.mxu0 0.0
  %845 = vmatprep.subr.mxu0 0.0
  %846 = vmatpush2.msra.mxu0 0.0
  %847 = vmatprep.subr.mxu0 0.0
  %848 = vmatpush2.msra.mxu0 0.0
  %849 = vmatprep.subr.mxu0 0.0
  %850 = vmatpush2.msra.mxu0 0.0
  %851 = vmatprep.subr.mxu0 0.0
  %852 = vmatpush2.msra.mxu0 0.0
  %853 = vmatprep.subr.mxu0 0.0
  %854 = vmatpush2.msra.mxu0 0.0
  %855 = vmatprep.mubr.f32.mxu0 0.0
  %856 = vmatmul.mubr.f32.gmra.mxu0 %v789
  %v857 = vpop.f32.mrf.mxu0
  %v858 = vadd.f32 0.0, %v857
  %v859 = vpop.f32.mrf.mxu0
  %860 = vdwg.mxu0
  %861 = vrot.lane.b32.xlu0 %v336, 64
  %v862 = vpop.permute.xlu0 %861
  %v865 = vsel %vm664, %v707, 0
  %867 = vmatprep.subr.mxu0 0.0
  %868 = vmatpush1.msra.mxu0 0.0
  %869 = vmatprep.subr.mxu0 0.0
  %870 = vmatpush1.msra.mxu0 0.0
  %871 = vmatprep.subr.mxu0 0.0
  %872 = vmatpush1.msra.mxu0 0.0
  %873 = vmatprep.subr.mxu0 0.0
  %874 = vmatpush1.msra.mxu0 0.0
  %875 = vmatprep.subr.mxu0 0.0
  %876 = vmatpush1.msra.mxu0 0.0
  %877 = vmatprep.subr.mxu0 0.0
  %878 = vmatpush1.msra.mxu0 0.0
  %879 = vmatprep.subr.mxu0 0.0
  %880 = vmatpush1.msra.mxu0 0.0
  %881 = vmatprep.subr.mxu0 0.0
  %882 = vmatpush1.msra.mxu0 0.0
  %883 = vmatprep.subr.mxu0 0.0
  %884 = vmatpush1.msra.mxu0 0.0
  %885 = vmatprep.subr.mxu0 0.0
  %886 = vmatpush1.msra.mxu0 0.0
  %887 = vmatprep.subr.mxu0 0.0
  %888 = vmatpush1.msra.mxu0 0.0
  %889 = vmatprep.subr.mxu0 0.0
  %890 = vmatpush1.msra.mxu0 0.0
  %891 = vmatprep.subr.mxu0 0.0
  %892 = vmatpush1.msra.mxu0 0.0
  %893 = vmatprep.subr.mxu0 0.0
  %894 = vmatpush1.msra.mxu0 0.0
  %895 = vmatprep.subr.mxu0 0.0
  %896 = vmatpush1.msra.mxu0 0.0
  %897 = vmatprep.subr.mxu0 0.0
  %898 = vmatpush1.msra.mxu0 %v862
  %899 = vmatprep.subr.mxu0 0.0
  %900 = vmatpush2.msra.mxu0 0.0
  %901 = vmatprep.subr.mxu0 0.0
  %902 = vmatpush2.msra.mxu0 0.0
  %903 = vmatprep.subr.mxu0 0.0
  %904 = vmatpush2.msra.mxu0 0.0
  %905 = vmatprep.subr.mxu0 0.0
  %906 = vmatpush2.msra.mxu0 0.0
  %907 = vmatprep.subr.mxu0 0.0
  %908 = vmatpush2.msra.mxu0 0.0
  %909 = vmatprep.subr.mxu0 0.0
  %910 = vmatpush2.msra.mxu0 0.0
  %911 = vmatprep.subr.mxu0 0.0
  %912 = vmatpush2.msra.mxu0 0.0
  %913 = vmatprep.subr.mxu0 0.0
  %914 = vmatpush2.msra.mxu0 0.0
  %915 = vmatprep.subr.mxu0 0.0
  %916 = vmatpush2.msra.mxu0 0.0
  %917 = vmatprep.subr.mxu0 0.0
  %918 = vmatpush2.msra.mxu0 0.0
  %919 = vmatprep.subr.mxu0 0.0
  %920 = vmatpush2.msra.mxu0 0.0
  %921 = vmatprep.subr.mxu0 0.0
  %922 = vmatpush2.msra.mxu0 0.0
  %923 = vmatprep.subr.mxu0 0.0
  %924 = vmatpush2.msra.mxu0 0.0
  %925 = vmatprep.subr.mxu0 0.0
  %926 = vmatpush2.msra.mxu0 0.0
  %927 = vmatprep.subr.mxu0 0.0
  %928 = vmatpush2.msra.mxu0 0.0
  %929 = vmatprep.subr.mxu0 0.0
  %930 = vmatpush2.msra.mxu0 0.0
  %931 = vmatprep.mubr.f32.mxu0 0.0
  %932 = vmatmul.mubr.f32.gmra.mxu0 %v865
  %v933 = vpop.f32.mrf.mxu0
  %v934 = vadd.f32 0.0, %v933
  %v935 = vpop.f32.mrf.mxu0
  %936 = vdwg.mxu0
  %937 = vrot.lane.b32.xlu0 %v338, 64
  %v938 = vpop.permute.xlu0 %937
  %v941 = vsel %vm664, %v708, 0
  %943 = vmatprep.subr.mxu0 0.0
  %944 = vmatpush1.msra.mxu0 0.0
  %945 = vmatprep.subr.mxu0 0.0
  %946 = vmatpush1.msra.mxu0 0.0
  %947 = vmatprep.subr.mxu0 0.0
  %948 = vmatpush1.msra.mxu0 0.0
  %949 = vmatprep.subr.mxu0 0.0
  %950 = vmatpush1.msra.mxu0 0.0
  %951 = vmatprep.subr.mxu0 0.0
  %952 = vmatpush1.msra.mxu0 0.0
  %953 = vmatprep.subr.mxu0 0.0
  %954 = vmatpush1.msra.mxu0 0.0
  %955 = vmatprep.subr.mxu0 0.0
  %956 = vmatpush1.msra.mxu0 0.0
  %957 = vmatprep.subr.mxu0 0.0
  %958 = vmatpush1.msra.mxu0 0.0
  %959 = vmatprep.subr.mxu0 0.0
  %960 = vmatpush1.msra.mxu0 0.0
  %961 = vmatprep.subr.mxu0 0.0
  %962 = vmatpush1.msra.mxu0 0.0
  %963 = vmatprep.subr.mxu0 0.0
  %964 = vmatpush1.msra.mxu0 0.0
  %965 = vmatprep.subr.mxu0 0.0
  %966 = vmatpush1.msra.mxu0 0.0
  %967 = vmatprep.subr.mxu0 0.0
  %968 = vmatpush1.msra.mxu0 0.0
  %969 = vmatprep.subr.mxu0 0.0
  %970 = vmatpush1.msra.mxu0 0.0
  %971 = vmatprep.subr.mxu0 0.0
  %972 = vmatpush1.msra.mxu0 0.0
  %973 = vmatprep.subr.mxu0 0.0
  %974 = vmatpush1.msra.mxu0 %v938
  %975 = vmatprep.subr.mxu0 0.0
  %976 = vmatpush2.msra.mxu0 0.0
  %977 = vmatprep.subr.mxu0 0.0
  %978 = vmatpush2.msra.mxu0 0.0
  %979 = vmatprep.subr.mxu0 0.0
  %980 = vmatpush2.msra.mxu0 0.0
  %981 = vmatprep.subr.mxu0 0.0
  %982 = vmatpush2.msra.mxu0 0.0
  %983 = vmatprep.subr.mxu0 0.0
  %984 = vmatpush2.msra.mxu0 0.0
  %985 = vmatprep.subr.mxu0 0.0
  %986 = vmatpush2.msra.mxu0 0.0
  %987 = vmatprep.subr.mxu0 0.0
  %988 = vmatpush2.msra.mxu0 0.0
  %989 = vmatprep.subr.mxu0 0.0
  %990 = vmatpush2.msra.mxu0 0.0
  %991 = vmatprep.subr.mxu0 0.0
  %992 = vmatpush2.msra.mxu0 0.0
  %993 = vmatprep.subr.mxu0 0.0
  %994 = vmatpush2.msra.mxu0 0.0
  %995 = vmatprep.subr.mxu0 0.0
  %996 = vmatpush2.msra.mxu0 0.0
  %997 = vmatprep.subr.mxu0 0.0
  %998 = vmatpush2.msra.mxu0 0.0
  %999 = vmatprep.subr.mxu0 0.0
  %1000 = vmatpush2.msra.mxu0 0.0
  %1001 = vmatprep.subr.mxu0 0.0
  %1002 = vmatpush2.msra.mxu0 0.0
  %1003 = vmatprep.subr.mxu0 0.0
  %1004 = vmatpush2.msra.mxu0 0.0
  %1005 = vmatprep.subr.mxu0 0.0
  %1006 = vmatpush2.msra.mxu0 0.0
  %1007 = vmatprep.mubr.f32.mxu0 0.0
  %1008 = vmatmul.mubr.f32.gmra.mxu0 %v941
  %v1009 = vpop.f32.mrf.mxu0
  %v1010 = vadd.f32 0.0, %v1009
  %v1011 = vpop.f32.mrf.mxu0
  %1012 = vdwg.mxu0
  %1015 = vrot.lane.b32.xlu0 %v934, 16
  %v1016 = vpop.permute.xlu0 %1015
  %1017 = vrot.lane.b32.xlu0 %v1010, 16
  %v1018 = vpop.permute.xlu0 %1017
  %v1021 = vsel %vm341, %v782, %v1016
  %v1022 = vsel %vm341, %v858, %v1018
  %v1023 = vld [vmem:[%s9] sm:$0xff]
  %v1024 = vld [vmem:[%s9 + $0x8] sm:$0xff]
  %v1025 = vld [vmem:[%s9 + $0x10] sm:$0xff]
  %v1026 = vld [vmem:[%s9 + $0x18] sm:$0xff]
  %v1027 = vld [vmem:[%s10] sm:$0x1]
  %v1029 = vlaneseq
  %v1030 = vshrl.u32 %v1029, 7
  %v1031 = vsub.s32 0, %v1030
  %v1032 = vrot.slane %v1027, %v1031
  %v1035 = vsel %vm191, %v1021, 0
  %v1038 = vsel %vm191, %v1022, 0
  %1040 = vmatprep.subr.mxu0 0.0
  %1041 = vmatpush1.msra.mxu0 0.0
  %1042 = vmatprep.subr.mxu0 0.0
  %1043 = vmatpush1.msra.mxu0 0.0
  %1044 = vmatprep.subr.mxu0 0.0
  %1045 = vmatpush1.msra.mxu0 0.0
  %1046 = vmatprep.subr.mxu0 0.0
  %1047 = vmatpush1.msra.mxu0 0.0
  %1048 = vmatprep.subr.mxu0 0.0
  %1049 = vmatpush1.msra.mxu0 0.0
  %1050 = vmatprep.subr.mxu0 0.0
  %1051 = vmatpush1.msra.mxu0 0.0
  %1052 = vmatprep.subr.mxu0 0.0
  %1053 = vmatpush1.msra.mxu0 0.0
  %1054 = vmatprep.subr.mxu0 0.0
  %1055 = vmatpush1.msra.mxu0 0.0
  %1056 = vmatprep.subr.mxu0 0.0
  %1057 = vmatpush1.msra.mxu0 0.0
  %1058 = vmatprep.subr.mxu0 0.0
  %1059 = vmatpush1.msra.mxu0 0.0
  %1060 = vmatprep.subr.mxu0 0.0
  %1061 = vmatpush1.msra.mxu0 0.0
  %1062 = vmatprep.subr.mxu0 0.0
  %1063 = vmatpush1.msra.mxu0 0.0
  %1064 = vmatprep.subr.mxu0 0.0
  %1065 = vmatpush1.msra.mxu0 %v1026
  %1066 = vmatprep.subr.mxu0 0.0
  %1067 = vmatpush1.msra.mxu0 %v1025
  %1068 = vmatprep.subr.mxu0 0.0
  %1069 = vmatpush1.msra.mxu0 %v1024
  %1070 = vmatprep.subr.mxu0 0.0
  %1071 = vmatpush1.msra.mxu0 %v1023
  %1072 = vmatprep.subr.mxu0 0.0
  %1073 = vmatpush2.msra.mxu0 0.0
  %1074 = vmatprep.subr.mxu0 0.0
  %1075 = vmatpush2.msra.mxu0 0.0
  %1076 = vmatprep.subr.mxu0 0.0
  %1077 = vmatpush2.msra.mxu0 0.0
  %1078 = vmatprep.subr.mxu0 0.0
  %1079 = vmatpush2.msra.mxu0 0.0
  %1080 = vmatprep.subr.mxu0 0.0
  %1081 = vmatpush2.msra.mxu0 0.0
  %1082 = vmatprep.subr.mxu0 0.0
  %1083 = vmatpush2.msra.mxu0 0.0
  %1084 = vmatprep.subr.mxu0 0.0
  %1085 = vmatpush2.msra.mxu0 0.0
  %1086 = vmatprep.subr.mxu0 0.0
  %1087 = vmatpush2.msra.mxu0 0.0
  %1088 = vmatprep.subr.mxu0 0.0
  %1089 = vmatpush2.msra.mxu0 0.0
  %1090 = vmatprep.subr.mxu0 0.0
  %1091 = vmatpush2.msra.mxu0 0.0
  %1092 = vmatprep.subr.mxu0 0.0
  %1093 = vmatpush2.msra.mxu0 0.0
  %1094 = vmatprep.subr.mxu0 0.0
  %1095 = vmatpush2.msra.mxu0 0.0
  %1096 = vmatprep.subr.mxu0 0.0
  %1097 = vmatpush2.msra.mxu0 0.0
  %1098 = vmatprep.subr.mxu0 0.0
  %1099 = vmatpush2.msra.mxu0 0.0
  %1100 = vmatprep.subr.mxu0 0.0
  %1101 = vmatpush2.msra.mxu0 0.0
  %1102 = vmatprep.subr.mxu0 0.0
  %1103 = vmatpush2.msra.mxu0 0.0
  %1104 = vmatprep.mubr.f32.mxu0 0.0
  %1105 = vmatmul.mubr.f32.gmra.mxu0 %v1035
  %v1106 = vpop.f32.mrf.mxu0
  %v1107 = vadd.f32 %v1032, %v1106
  %v1108 = vpop.f32.mrf.mxu0
  %1109 = vmatprep.mubr.f32.mxu0 0.0
  %1110 = vmatmul.mubr.f32.gmra.mxu0 %v1038
  %v1111 = vpop.f32.mrf.mxu0
  %v1112 = vadd.f32 %v1032, %v1111
  %v1113 = vpop.f32.mrf.mxu0
  %1114 = vdwg.mxu0
  %v1115 = vadd.f32 %v1107, %v233
  %v1116 = vadd.f32 %v1112, %v234
  %v1117 = vld [vmem:[%s11] sm:$0x1]
  %v1118 = vld [vmem:[%s12] sm:$0x1]
  %v1119 = vsel %vm191, %v1115, 0.0
  %1120 = vadd.xlane.f32.xlu0 %v1119
  %v1121 = vpop.xlane.xlu0 %1120
  %v1122 = vsel %vm191, %v1116, 0.0
  %1123 = vadd.xlane.f32.xlu0 %v1122
  %v1124 = vpop.xlane.xlu0 %1123
  %v1125 = vmul.f32 %v1121, %v198
  %v1126 = vmul.f32 %v1124, %v198
  %v1127 = vsub.f32 %v1115, %v1125
  %v1128 = vsub.f32 %v1116, %v1126
  %v1129 = vmul.f32 %v1127, %v1127
  %v1130 = vmul.f32 %v1128, %v1128
  %v1131 = vsel %vm191, %v1129, 0.0
  %1132 = vadd.xlane.f32.xlu0 %v1131
  %v1133 = vpop.xlane.xlu0 %1132
  %v1134 = vsel %vm191, %v1130, 0.0
  %1135 = vadd.xlane.f32.xlu0 %v1134
  %v1136 = vpop.xlane.xlu0 %1135
  %v1137 = vmul.f32 %v1133, %v198
  %v1138 = vmul.f32 %v1136, %v198
  %v1139 = vadd.f32 %v1137, 1e-12
  %v1140 = vadd.f32 %v1138, 1e-12
  %v1141 = vrsqrt.pop %v1139
  %v1142 = vrsqrt.pop %v1140
  %v1143 = vmul.f32 %v1127, %v1141
  %v1144 = vmul.f32 %v1128, %v1142
  %v1146 = vlaneseq
  %v1147 = vshrl.u32 %v1146, 7
  %v1148 = vsub.s32 0, %v1147
  %v1149 = vrot.slane %v1117, %v1148
  %v1151 = vmul.f32 %v1143, %v1149
  %v1152 = vmul.f32 %v1144, %v1149
  %v1154 = vlaneseq
  %v1155 = vshrl.u32 %v1154, 7
  %v1156 = vsub.s32 0, %v1155
  %v1157 = vrot.slane %v1118, %v1156
  %v1159 = vadd.f32 %v1151, %v1157
  %v1160 = vadd.f32 %v1152, %v1157
  %v1161 = vld [vmem:[%s13] sm:$0xff]
  %v1162 = vld [vmem:[%s13 + $0x8] sm:$0xff]
  %v1163 = vld [vmem:[%s13 + $0x10] sm:$0xff]
  %v1164 = vld [vmem:[%s13 + $0x18] sm:$0xff]
  %v1165 = vld [vmem:[%s14] sm:$0x1]
  %v1167 = vlaneseq
  %v1168 = vshrl.u32 %v1167, 7
  %v1169 = vsub.s32 0, %v1168
  %v1170 = vrot.slane %v1165, %v1169
  %v1173 = vsel %vm191, %v1159, 0
  %v1176 = vsel %vm191, %v1160, 0
  %1178 = vmatprep.subr.mxu0 0.0
  %1179 = vmatpush1.msra.mxu0 0.0
  %1180 = vmatprep.subr.mxu0 0.0
  %1181 = vmatpush1.msra.mxu0 0.0
  %1182 = vmatprep.subr.mxu0 0.0
  %1183 = vmatpush1.msra.mxu0 0.0
  %1184 = vmatprep.subr.mxu0 0.0
  %1185 = vmatpush1.msra.mxu0 0.0
  %1186 = vmatprep.subr.mxu0 0.0
  %1187 = vmatpush1.msra.mxu0 0.0
  %1188 = vmatprep.subr.mxu0 0.0
  %1189 = vmatpush1.msra.mxu0 0.0
  %1190 = vmatprep.subr.mxu0 0.0
  %1191 = vmatpush1.msra.mxu0 0.0
  %1192 = vmatprep.subr.mxu0 0.0
  %1193 = vmatpush1.msra.mxu0 0.0
  %1194 = vmatprep.subr.mxu0 0.0
  %1195 = vmatpush1.msra.mxu0 0.0
  %1196 = vmatprep.subr.mxu0 0.0
  %1197 = vmatpush1.msra.mxu0 0.0
  %1198 = vmatprep.subr.mxu0 0.0
  %1199 = vmatpush1.msra.mxu0 0.0
  %1200 = vmatprep.subr.mxu0 0.0
  %1201 = vmatpush1.msra.mxu0 0.0
  %1202 = vmatprep.subr.mxu0 0.0
  %1203 = vmatpush1.msra.mxu0 %v1164
  %1204 = vmatprep.subr.mxu0 0.0
  %1205 = vmatpush1.msra.mxu0 %v1163
  %1206 = vmatprep.subr.mxu0 0.0
  %1207 = vmatpush1.msra.mxu0 %v1162
  %1208 = vmatprep.subr.mxu0 0.0
  %1209 = vmatpush1.msra.mxu0 %v1161
  %1210 = vmatprep.subr.mxu0 0.0
  %1211 = vmatpush2.msra.mxu0 0.0
  %1212 = vmatprep.subr.mxu0 0.0
  %1213 = vmatpush2.msra.mxu0 0.0
  %1214 = vmatprep.subr.mxu0 0.0
  %1215 = vmatpush2.msra.mxu0 0.0
  %1216 = vmatprep.subr.mxu0 0.0
  %1217 = vmatpush2.msra.mxu0 0.0
  %1218 = vmatprep.subr.mxu0 0.0
  %1219 = vmatpush2.msra.mxu0 0.0
  %1220 = vmatprep.subr.mxu0 0.0
  %1221 = vmatpush2.msra.mxu0 0.0
  %1222 = vmatprep.subr.mxu0 0.0
  %1223 = vmatpush2.msra.mxu0 0.0
  %1224 = vmatprep.subr.mxu0 0.0
  %1225 = vmatpush2.msra.mxu0 0.0
  %1226 = vmatprep.subr.mxu0 0.0
  %1227 = vmatpush2.msra.mxu0 0.0
  %1228 = vmatprep.subr.mxu0 0.0
  %1229 = vmatpush2.msra.mxu0 0.0
  %1230 = vmatprep.subr.mxu0 0.0
  %1231 = vmatpush2.msra.mxu0 0.0
  %1232 = vmatprep.subr.mxu0 0.0
  %1233 = vmatpush2.msra.mxu0 0.0
  %1234 = vmatprep.subr.mxu0 0.0
  %1235 = vmatpush2.msra.mxu0 0.0
  %1236 = vmatprep.subr.mxu0 0.0
  %1237 = vmatpush2.msra.mxu0 0.0
  %1238 = vmatprep.subr.mxu0 0.0
  %1239 = vmatpush2.msra.mxu0 0.0
  %1240 = vmatprep.subr.mxu0 0.0
  %1241 = vmatpush2.msra.mxu0 0.0
  %1242 = vmatprep.mubr.f32.mxu0 0.0
  %1243 = vmatmul.mubr.f32.gmra.mxu0 %v1173
  %v1244 = vpop.f32.mrf.mxu0
  %v1245 = vadd.f32 %v1170, %v1244
  %v1246 = vpop.f32.mrf.mxu0
  %1247 = vmatprep.mubr.f32.mxu0 0.0
  %1248 = vmatmul.mubr.f32.gmra.mxu0 %v1176
  %v1249 = vpop.f32.mrf.mxu0
  %v1250 = vadd.f32 %v1170, %v1249
  %v1251 = vpop.f32.mrf.mxu0
  %1252 = vdwg.mxu0
  %v1253 = vmul.f32 %v1245, 0.5
  %v1254 = vmul.f32 %v1250, 0.5
  %v1255 = vmul.f32 %v1245, 0.044715
  %v1256 = vmul.f32 %v1250, 0.044715
  %v1257 = vmul.f32 %v1255, %v1245
  %v1258 = vmul.f32 %v1256, %v1250
  %v1259 = vmul.f32 %v1257, %v1245
  %v1260 = vmul.f32 %v1258, %v1250
  %v1261 = vadd.f32 %v1245, %v1259
  %v1262 = vadd.f32 %v1250, %v1260
  %v1263 = vmul.f32 %v1261, 0.7978846
  %v1264 = vmul.f32 %v1262, 0.7978846
  %v1265 = vtanh.pop %v1263
  %v1266 = vtanh.pop %v1264
  %v1267 = vadd.f32 %v1265, 1.0
  %v1268 = vadd.f32 %v1266, 1.0
  %v1269 = vmul.f32 %v1253, %v1267
  %v1270 = vmul.f32 %v1254, %v1268
  %v1271 = vld [vmem:[%s15] sm:$0xff]
  %v1272 = vld [vmem:[%s15 + $0x8] sm:$0xff]
  %v1273 = vld [vmem:[%s15 + $0x10] sm:$0xff]
  %v1274 = vld [vmem:[%s15 + $0x18] sm:$0xff]
  %v1275 = vld [vmem:[%s15 + $0x20] sm:$0xff]
  %v1276 = vld [vmem:[%s15 + $0x28] sm:$0xff]
  %v1277 = vld [vmem:[%s15 + $0x30] sm:$0xff]
  %v1278 = vld [vmem:[%s15 + $0x38] sm:$0xff]
  %v1279 = vld [vmem:[%s16] sm:$0x1]
  %v1281 = vlaneseq
  %v1282 = vshrl.u32 %v1281, 7
  %v1283 = vsub.s32 0, %v1282
  %v1284 = vrot.slane %v1279, %v1283
  %vm1286 = vcmask 523264
  %v1288 = vsel %vm1286, %v1269, 0
  %v1291 = vsel %vm1286, %v1270, 0
  %1293 = vmatprep.subr.mxu0 0.0
  %1294 = vmatpush1.msra.mxu0 0.0
  %1295 = vmatprep.subr.mxu0 0.0
  %1296 = vmatpush1.msra.mxu0 0.0
  %1297 = vmatprep.subr.mxu0 0.0
  %1298 = vmatpush1.msra.mxu0 0.0
  %1299 = vmatprep.subr.mxu0 0.0
  %1300 = vmatpush1.msra.mxu0 0.0
  %1301 = vmatprep.subr.mxu0 0.0
  %1302 = vmatpush1.msra.mxu0 0.0
  %1303 = vmatprep.subr.mxu0 0.0
  %1304 = vmatpush1.msra.mxu0 0.0
  %1305 = vmatprep.subr.mxu0 0.0
  %1306 = vmatpush1.msra.mxu0 0.0
  %1307 = vmatprep.subr.mxu0 0.0
  %1308 = vmatpush1.msra.mxu0 0.0
  %1309 = vmatprep.subr.mxu0 0.0
  %1310 = vmatpush1.msra.mxu0 %v1278
  %1311 = vmatprep.subr.mxu0 0.0
  %1312 = vmatpush1.msra.mxu0 %v1277
  %1313 = vmatprep.subr.mxu0 0.0
  %1314 = vmatpush1.msra.mxu0 %v1276
  %1315 = vmatprep.subr.mxu0 0.0
  %1316 = vmatpush1.msra.mxu0 %v1275
  %1317 = vmatprep.subr.mxu0 0.0
  %1318 = vmatpush1.msra.mxu0 %v1274
  %1319 = vmatprep.subr.mxu0 0.0
  %1320 = vmatpush1.msra.mxu0 %v1273
  %1321 = vmatprep.subr.mxu0 0.0
  %1322 = vmatpush1.msra.mxu0 %v1272
  %1323 = vmatprep.subr.mxu0 0.0
  %1324 = vmatpush1.msra.mxu0 %v1271
  %1325 = vmatprep.subr.mxu0 0.0
  %1326 = vmatpush2.msra.mxu0 0.0
  %1327 = vmatprep.subr.mxu0 0.0
  %1328 = vmatpush2.msra.mxu0 0.0
  %1329 = vmatprep.subr.mxu0 0.0
  %1330 = vmatpush2.msra.mxu0 0.0
  %1331 = vmatprep.subr.mxu0 0.0
  %1332 = vmatpush2.msra.mxu0 0.0
  %1333 = vmatprep.subr.mxu0 0.0
  %1334 = vmatpush2.msra.mxu0 0.0
  %1335 = vmatprep.subr.mxu0 0.0
  %1336 = vmatpush2.msra.mxu0 0.0
  %1337 = vmatprep.subr.mxu0 0.0
  %1338 = vmatpush2.msra.mxu0 0.0
  %1339 = vmatprep.subr.mxu0 0.0
  %1340 = vmatpush2.msra.mxu0 0.0
  %1341 = vmatprep.subr.mxu0 0.0
  %1342 = vmatpush2.msra.mxu0 0.0
  %1343 = vmatprep.subr.mxu0 0.0
  %1344 = vmatpush2.msra.mxu0 0.0
  %1345 = vmatprep.subr.mxu0 0.0
  %1346 = vmatpush2.msra.mxu0 0.0
  %1347 = vmatprep.subr.mxu0 0.0
  %1348 = vmatpush2.msra.mxu0 0.0
  %1349 = vmatprep.subr.mxu0 0.0
  %1350 = vmatpush2.msra.mxu0 0.0
  %1351 = vmatprep.subr.mxu0 0.0
  %1352 = vmatpush2.msra.mxu0 0.0
  %1353 = vmatprep.subr.mxu0 0.0
  %1354 = vmatpush2.msra.mxu0 0.0
  %1355 = vmatprep.subr.mxu0 0.0
  %1356 = vmatpush2.msra.mxu0 0.0
  %1357 = vmatprep.mubr.f32.mxu0 0.0
  %1358 = vmatmul.mubr.f32.gmra.mxu0 %v1288
  %v1359 = vpop.f32.mrf.mxu0
  %v1360 = vadd.f32 %v1284, %v1359
  %v1361 = vpop.f32.mrf.mxu0
  %1362 = vmatprep.mubr.f32.mxu0 0.0
  %1363 = vmatmul.mubr.f32.gmra.mxu0 %v1291
  %v1364 = vpop.f32.mrf.mxu0
  %v1365 = vadd.f32 %v1284, %v1364
  %v1366 = vpop.f32.mrf.mxu0
  %1367 = vdwg.mxu0
  %v1368 = vadd.f32 %v1360, %v1159
  %v1369 = vadd.f32 %v1365, %v1160
  %v1370 = vld [vmem:[%s17] sm:$0x1]
  %v1371 = vld [vmem:[%s18] sm:$0x1]
  %v1372 = vsel %vm191, %v1368, 0.0
  %1373 = vadd.xlane.f32.xlu0 %v1372
  %v1374 = vpop.xlane.xlu0 %1373
  %v1375 = vsel %vm191, %v1369, 0.0
  %1376 = vadd.xlane.f32.xlu0 %v1375
  %v1377 = vpop.xlane.xlu0 %1376
  %v1378 = vmul.f32 %v1374, %v198
  %v1379 = vmul.f32 %v1377, %v198
  %v1380 = vsub.f32 %v1368, %v1378
  %v1381 = vsub.f32 %v1369, %v1379
  %v1382 = vmul.f32 %v1380, %v1380
  %v1383 = vmul.f32 %v1381, %v1381
  %v1384 = vsel %vm191, %v1382, 0.0
  %1385 = vadd.xlane.f32.xlu0 %v1384
  %v1386 = vpop.xlane.xlu0 %1385
  %v1387 = vsel %vm191, %v1383, 0.0
  %1388 = vadd.xlane.f32.xlu0 %v1387
  %v1389 = vpop.xlane.xlu0 %1388
  %v1390 = vmul.f32 %v1386, %v198
  %v1391 = vmul.f32 %v1389, %v198
  %v1392 = vadd.f32 %v1390, 1e-12
  %v1393 = vadd.f32 %v1391, 1e-12
  %v1394 = vrsqrt.pop %v1392
  %v1395 = vrsqrt.pop %v1393
  %v1396 = vmul.f32 %v1380, %v1394
  %v1397 = vmul.f32 %v1381, %v1395
  %v1399 = vlaneseq
  %v1400 = vshrl.u32 %v1399, 7
  %v1401 = vsub.s32 0, %v1400
  %v1402 = vrot.slane %v1370, %v1401
  %v1404 = vmul.f32 %v1396, %v1402
  %v1405 = vmul.f32 %v1397, %v1402
  %v1407 = vlaneseq
  %v1408 = vshrl.u32 %v1407, 7
  %v1409 = vsub.s32 0, %v1408
  %v1410 = vrot.slane %v1371, %v1409
  %v1412 = vadd.f32 %v1404, %v1410
  %v1413 = vadd.f32 %v1405, %v1410
  %s1414 = scalar_lea.vmem %s7, 32
  %v1415 = vld [vmem:[%s1414] sm:$0xff]
  %v1416 = vld [vmem:[%s1414 + $0x8] sm:$0xff]
  %v1417 = vld [vmem:[%s1414 + $0x10] sm:$0xff]
  %v1418 = vld [vmem:[%s1414 + $0x18] sm:$0xff]
  %s1419 = scalar_lea.vmem %s8, 1
  %v1420 = vld [vmem:[%s1419] sm:$0x1]
  %v1422 = vlaneseq
  %v1423 = vshrl.u32 %v1422, 7
  %v1424 = vsub.s32 0, %v1423
  %v1425 = vrot.slane %v1420, %v1424
  %v1428 = vsel %vm191, %v1412, 0
  %v1431 = vsel %vm191, %v1413, 0
  %1433 = vmatprep.subr.mxu0 0.0
  %1434 = vmatpush1.msra.mxu0 0.0
  %1435 = vmatprep.subr.mxu0 0.0
  %1436 = vmatpush1.msra.mxu0 0.0
  %1437 = vmatprep.subr.mxu0 0.0
  %1438 = vmatpush1.msra.mxu0 0.0
  %1439 = vmatprep.subr.mxu0 0.0
  %1440 = vmatpush1.msra.mxu0 0.0
  %1441 = vmatprep.subr.mxu0 0.0
  %1442 = vmatpush1.msra.mxu0 0.0
  %1443 = vmatprep.subr.mxu0 0.0
  %1444 = vmatpush1.msra.mxu0 0.0
  %1445 = vmatprep.subr.mxu0 0.0
  %1446 = vmatpush1.msra.mxu0 0.0
  %1447 = vmatprep.subr.mxu0 0.0
  %1448 = vmatpush1.msra.mxu0 0.0
  %1449 = vmatprep.subr.mxu0 0.0
  %1450 = vmatpush1.msra.mxu0 0.0
  %1451 = vmatprep.subr.mxu0 0.0
  %1452 = vmatpush1.msra.mxu0 0.0
  %1453 = vmatprep.subr.mxu0 0.0
  %1454 = vmatpush1.msra.mxu0 0.0
  %1455 = vmatprep.subr.mxu0 0.0
  %1456 = vmatpush1.msra.mxu0 0.0
  %1457 = vmatprep.subr.mxu0 0.0
  %1458 = vmatpush1.msra.mxu0 %v1418
  %1459 = vmatprep.subr.mxu0 0.0
  %1460 = vmatpush1.msra.mxu0 %v1417
  %1461 = vmatprep.subr.mxu0 0.0
  %1462 = vmatpush1.msra.mxu0 %v1416
  %1463 = vmatprep.subr.mxu0 0.0
  %1464 = vmatpush1.msra.mxu0 %v1415
  %1465 = vmatprep.subr.mxu0 0.0
  %1466 = vmatpush2.msra.mxu0 0.0
  %1467 = vmatprep.subr.mxu0 0.0
  %1468 = vmatpush2.msra.mxu0 0.0
  %1469 = vmatprep.subr.mxu0 0.0
  %1470 = vmatpush2.msra.mxu0 0.0
  %1471 = vmatprep.subr.mxu0 0.0
  %1472 = vmatpush2.msra.mxu0 0.0
  %1473 = vmatprep.subr.mxu0 0.0
  %1474 = vmatpush2.msra.mxu0 0.0
  %1475 = vmatprep.subr.mxu0 0.0
  %1476 = vmatpush2.msra.mxu0 0.0
  %1477 = vmatprep.subr.mxu0 0.0
  %1478 = vmatpush2.msra.mxu0 0.0
  %1479 = vmatprep.subr.mxu0 0.0
  %1480 = vmatpush2.msra.mxu0 0.0
  %1481 = vmatprep.subr.mxu0 0.0
  %1482 = vmatpush2.msra.mxu0 0.0
  %1483 = vmatprep.subr.mxu0 0.0
  %1484 = vmatpush2.msra.mxu0 0.0
  %1485 = vmatprep.subr.mxu0 0.0
  %1486 = vmatpush2.msra.mxu0 0.0
  %1487 = vmatprep.subr.mxu0 0.0
  %1488 = vmatpush2.msra.mxu0 0.0
  %1489 = vmatprep.subr.mxu0 0.0
  %1490 = vmatpush2.msra.mxu0 0.0
  %1491 = vmatprep.subr.mxu0 0.0
  %1492 = vmatpush2.msra.mxu0 0.0
  %1493 = vmatprep.subr.mxu0 0.0
  %1494 = vmatpush2.msra.mxu0 0.0
  %1495 = vmatprep.subr.mxu0 0.0
  %1496 = vmatpush2.msra.mxu0 0.0
  %1497 = vmatprep.mubr.f32.mxu0 0.0
  %1498 = vmatmul.mubr.f32.gmra.mxu0 %v1428
  %v1499 = vpop.f32.mrf.mxu0
  %v1500 = vadd.f32 %v1425, %v1499
  %v1501 = vpop.f32.mrf.mxu0
  %1502 = vmatprep.mubr.f32.mxu0 0.0
  %1503 = vmatmul.mubr.f32.gmra.mxu0 %v1431
  %v1504 = vpop.f32.mrf.mxu0
  %v1505 = vadd.f32 %v1425, %v1504
  %v1506 = vpop.f32.mrf.mxu0
  %1507 = vdwg.mxu0
  %1510 = vrot.lane.b32.xlu0 %v1500, 112
  %v1511 = vpop.permute.xlu0 %1510
  %1512 = vrot.lane.b32.xlu0 %v1505, 112
  %v1513 = vpop.permute.xlu0 %1512
  %1514 = vrot.lane.b32.xlu0 %v1500, 96
  %v1515 = vpop.permute.xlu0 %1514
  %v1516 = vsel %vm341, %v1500, 0
  %v1518 = vsel %vm341, %v1515, 0
  %1520 = vmatprep.subr.mxu0 0.0
  %1521 = vmatpush1.xpose.msra.mxu0 0.0
  %1522 = vmatprep.subr.mxu0 0.0
  %1523 = vmatpush1.xpose.msra.mxu0 0.0
  %1524 = vmatprep.subr.mxu0 0.0
  %1525 = vmatpush1.xpose.msra.mxu0 0.0
  %1526 = vmatprep.subr.mxu0 0.0
  %1527 = vmatpush1.xpose.msra.mxu0 0.0
  %1528 = vmatprep.subr.mxu0 0.0
  %1529 = vmatpush1.xpose.msra.mxu0 0.0
  %1530 = vmatprep.subr.mxu0 0.0
  %1531 = vmatpush1.xpose.msra.mxu0 0.0
  %1532 = vmatprep.subr.mxu0 0.0
  %1533 = vmatpush1.xpose.msra.mxu0 0.0
  %1534 = vmatprep.subr.mxu0 0.0
  %1535 = vmatpush1.xpose.msra.mxu0 0.0
  %1536 = vmatprep.subr.mxu0 0.0
  %1537 = vmatpush1.xpose.msra.mxu0 0.0
  %1538 = vmatprep.subr.mxu0 0.0
  %1539 = vmatpush1.xpose.msra.mxu0 0.0
  %1540 = vmatprep.subr.mxu0 0.0
  %1541 = vmatpush1.xpose.msra.mxu0 0.0
  %1542 = vmatprep.subr.mxu0 0.0
  %1543 = vmatpush1.xpose.msra.mxu0 0.0
  %1544 = vmatprep.subr.mxu0 0.0
  %1545 = vmatpush1.xpose.msra.mxu0 0.0
  %1546 = vmatprep.subr.mxu0 0.0
  %1547 = vmatpush1.xpose.msra.mxu0 0.0
  %1548 = vmatprep.subr.mxu0 0.0
  %1549 = vmatpush1.xpose.msra.mxu0 0.0
  %1550 = vmatprep.subr.mxu0 0.0
  %1551 = vmatpush1.xpose.msra.mxu0 %v1518
  %1552 = vmatprep.subr.mxu0 0.0
  %1553 = vmatpush2.xpose.msra.mxu0 0.0
  %1554 = vmatprep.subr.mxu0 0.0
  %1555 = vmatpush2.xpose.msra.mxu0 0.0
  %1556 = vmatprep.subr.mxu0 0.0
  %1557 = vmatpush2.xpose.msra.mxu0 0.0
  %1558 = vmatprep.subr.mxu0 0.0
  %1559 = vmatpush2.xpose.msra.mxu0 0.0
  %1560 = vmatprep.subr.mxu0 0.0
  %1561 = vmatpush2.xpose.msra.mxu0 0.0
  %1562 = vmatprep.subr.mxu0 0.0
  %1563 = vmatpush2.xpose.msra.mxu0 0.0
  %1564 = vmatprep.subr.mxu0 0.0
  %1565 = vmatpush2.xpose.msra.mxu0 0.0
  %1566 = vmatprep.subr.mxu0 0.0
  %1567 = vmatpush2.xpose.msra.mxu0 0.0
  %1568 = vmatprep.subr.mxu0 0.0
  %1569 = vmatpush2.xpose.msra.mxu0 0.0
  %1570 = vmatprep.subr.mxu0 0.0
  %1571 = vmatpush2.xpose.msra.mxu0 0.0
  %1572 = vmatprep.subr.mxu0 0.0
  %1573 = vmatpush2.xpose.msra.mxu0 0.0
  %1574 = vmatprep.subr.mxu0 0.0
  %1575 = vmatpush2.xpose.msra.mxu0 0.0
  %1576 = vmatprep.subr.mxu0 0.0
  %1577 = vmatpush2.xpose.msra.mxu0 0.0
  %1578 = vmatprep.subr.mxu0 0.0
  %1579 = vmatpush2.xpose.msra.mxu0 0.0
  %1580 = vmatprep.subr.mxu0 0.0
  %1581 = vmatpush2.xpose.msra.mxu0 0.0
  %1582 = vmatprep.subr.mxu0 0.0
  %1583 = vmatpush2.xpose.msra.mxu0 0.0
  %1584 = vmatprep.mubr.f32.mxu0 0.0
  %1585 = vmatmul.mubr.f32.gmra.mxu0 %v1516
  %v1586 = vpop.f32.mrf.mxu0
  %v1587 = vadd.f32 0.0, %v1586
  %v1588 = vpop.f32.mrf.mxu0
  %1589 = vdwg.mxu0
  %1590 = vrot.lane.b32.xlu0 %v1505, 96
  %v1591 = vpop.permute.xlu0 %1590
  %v1592 = vsel %vm341, %v1505, 0
  %v1594 = vsel %vm341, %v1591, 0
  %1596 = vmatprep.subr.mxu0 0.0
  %1597 = vmatpush1.xpose.msra.mxu0 0.0
  %1598 = vmatprep.subr.mxu0 0.0
  %1599 = vmatpush1.xpose.msra.mxu0 0.0
  %1600 = vmatprep.subr.mxu0 0.0
  %1601 = vmatpush1.xpose.msra.mxu0 0.0
  %1602 = vmatprep.subr.mxu0 0.0
  %1603 = vmatpush1.xpose.msra.mxu0 0.0
  %1604 = vmatprep.subr.mxu0 0.0
  %1605 = vmatpush1.xpose.msra.mxu0 0.0
  %1606 = vmatprep.subr.mxu0 0.0
  %1607 = vmatpush1.xpose.msra.mxu0 0.0
  %1608 = vmatprep.subr.mxu0 0.0
  %1609 = vmatpush1.xpose.msra.mxu0 0.0
  %1610 = vmatprep.subr.mxu0 0.0
  %1611 = vmatpush1.xpose.msra.mxu0 0.0
  %1612 = vmatprep.subr.mxu0 0.0
  %1613 = vmatpush1.xpose.msra.mxu0 0.0
  %1614 = vmatprep.subr.mxu0 0.0
  %1615 = vmatpush1.xpose.msra.mxu0 0.0
  %1616 = vmatprep.subr.mxu0 0.0
  %1617 = vmatpush1.xpose.msra.mxu0 0.0
  %1618 = vmatprep.subr.mxu0 0.0
  %1619 = vmatpush1.xpose.msra.mxu0 0.0
  %1620 = vmatprep.subr.mxu0 0.0
  %1621 = vmatpush1.xpose.msra.mxu0 0.0
  %1622 = vmatprep.subr.mxu0 0.0
  %1623 = vmatpush1.xpose.msra.mxu0 0.0
  %1624 = vmatprep.subr.mxu0 0.0
  %1625 = vmatpush1.xpose.msra.mxu0 0.0
  %1626 = vmatprep.subr.mxu0 0.0
  %1627 = vmatpush1.xpose.msra.mxu0 %v1594
  %1628 = vmatprep.subr.mxu0 0.0
  %1629 = vmatpush2.xpose.msra.mxu0 0.0
  %1630 = vmatprep.subr.mxu0 0.0
  %1631 = vmatpush2.xpose.msra.mxu0 0.0
  %1632 = vmatprep.subr.mxu0 0.0
  %1633 = vmatpush2.xpose.msra.mxu0 0.0
  %1634 = vmatprep.subr.mxu0 0.0
  %1635 = vmatpush2.xpose.msra.mxu0 0.0
  %1636 = vmatprep.subr.mxu0 0.0
  %1637 = vmatpush2.xpose.msra.mxu0 0.0
  %1638 = vmatprep.subr.mxu0 0.0
  %1639 = vmatpush2.xpose.msra.mxu0 0.0
  %1640 = vmatprep.subr.mxu0 0.0
  %1641 = vmatpush2.xpose.msra.mxu0 0.0
  %1642 = vmatprep.subr.mxu0 0.0
  %1643 = vmatpush2.xpose.msra.mxu0 0.0
  %1644 = vmatprep.subr.mxu0 0.0
  %1645 = vmatpush2.xpose.msra.mxu0 0.0
  %1646 = vmatprep.subr.mxu0 0.0
  %1647 = vmatpush2.xpose.msra.mxu0 0.0
  %1648 = vmatprep.subr.mxu0 0.0
  %1649 = vmatpush2.xpose.msra.mxu0 0.0
  %1650 = vmatprep.subr.mxu0 0.0
  %1651 = vmatpush2.xpose.msra.mxu0 0.0
  %1652 = vmatprep.subr.mxu0 0.0
  %1653 = vmatpush2.xpose.msra.mxu0 0.0
  %1654 = vmatprep.subr.mxu0 0.0
  %1655 = vmatpush2.xpose.msra.mxu0 0.0
  %1656 = vmatprep.subr.mxu0 0.0
  %1657 = vmatpush2.xpose.msra.mxu0 0.0
  %1658 = vmatprep.subr.mxu0 0.0
  %1659 = vmatpush2.xpose.msra.mxu0 0.0
  %1660 = vmatprep.mubr.f32.mxu0 0.0
  %1661 = vmatmul.mubr.f32.gmra.mxu0 %v1592
  %v1662 = vpop.f32.mrf.mxu0
  %v1663 = vadd.f32 0.0, %v1662
  %v1664 = vpop.f32.mrf.mxu0
  %1665 = vdwg.mxu0
  %1666 = vrot.lane.b32.xlu0 %v1511, 96
  %v1667 = vpop.permute.xlu0 %1666
  %v1668 = vsel %vm341, %v1511, 0
  %v1670 = vsel %vm341, %v1667, 0
  %1672 = vmatprep.subr.mxu0 0.0
  %1673 = vmatpush1.xpose.msra.mxu0 0.0
  %1674 = vmatprep.subr.mxu0 0.0
  %1675 = vmatpush1.xpose.msra.mxu0 0.0
  %1676 = vmatprep.subr.mxu0 0.0
  %1677 = vmatpush1.xpose.msra.mxu0 0.0
  %1678 = vmatprep.subr.mxu0 0.0
  %1679 = vmatpush1.xpose.msra.mxu0 0.0
  %1680 = vmatprep.subr.mxu0 0.0
  %1681 = vmatpush1.xpose.msra.mxu0 0.0
  %1682 = vmatprep.subr.mxu0 0.0
  %1683 = vmatpush1.xpose.msra.mxu0 0.0
  %1684 = vmatprep.subr.mxu0 0.0
  %1685 = vmatpush1.xpose.msra.mxu0 0.0
  %1686 = vmatprep.subr.mxu0 0.0
  %1687 = vmatpush1.xpose.msra.mxu0 0.0
  %1688 = vmatprep.subr.mxu0 0.0
  %1689 = vmatpush1.xpose.msra.mxu0 0.0
  %1690 = vmatprep.subr.mxu0 0.0
  %1691 = vmatpush1.xpose.msra.mxu0 0.0
  %1692 = vmatprep.subr.mxu0 0.0
  %1693 = vmatpush1.xpose.msra.mxu0 0.0
  %1694 = vmatprep.subr.mxu0 0.0
  %1695 = vmatpush1.xpose.msra.mxu0 0.0
  %1696 = vmatprep.subr.mxu0 0.0
  %1697 = vmatpush1.xpose.msra.mxu0 0.0
  %1698 = vmatprep.subr.mxu0 0.0
  %1699 = vmatpush1.xpose.msra.mxu0 0.0
  %1700 = vmatprep.subr.mxu0 0.0
  %1701 = vmatpush1.xpose.msra.mxu0 0.0
  %1702 = vmatprep.subr.mxu0 0.0
  %1703 = vmatpush1.xpose.msra.mxu0 %v1670
  %1704 = vmatprep.subr.mxu0 0.0
  %1705 = vmatpush2.xpose.msra.mxu0 0.0
  %1706 = vmatprep.subr.mxu0 0.0
  %1707 = vmatpush2.xpose.msra.mxu0 0.0
  %1708 = vmatprep.subr.mxu0 0.0
  %1709 = vmatpush2.xpose.msra.mxu0 0.0
  %1710 = vmatprep.subr.mxu0 0.0
  %1711 = vmatpush2.xpose.msra.mxu0 0.0
  %1712 = vmatprep.subr.mxu0 0.0
  %1713 = vmatpush2.xpose.msra.mxu0 0.0
  %1714 = vmatprep.subr.mxu0 0.0
  %1715 = vmatpush2.xpose.msra.mxu0 0.0
  %1716 = vmatprep.subr.mxu0 0.0
  %1717 = vmatpush2.xpose.msra.mxu0 0.0
  %1718 = vmatprep.subr.mxu0 0.0
  %1719 = vmatpush2.xpose.msra.mxu0 0.0
  %1720 = vmatprep.subr.mxu0 0.0
  %1721 = vmatpush2.xpose.msra.mxu0 0.0
  %1722 = vmatprep.subr.mxu0 0.0
  %1723 = vmatpush2.xpose.msra.mxu0 0.0
  %1724 = vmatprep.subr.mxu0 0.0
  %1725 = vmatpush2.xpose.msra.mxu0 0.0
  %1726 = vmatprep.subr.mxu0 0.0
  %1727 = vmatpush2.xpose.msra.mxu0 0.0
  %1728 = vmatprep.subr.mxu0 0.0
  %1729 = vmatpush2.xpose.msra.mxu0 0.0
  %1730 = vmatprep.subr.mxu0 0.0
  %1731 = vmatpush2.xpose.msra.mxu0 0.0
  %1732 = vmatprep.subr.mxu0 0.0
  %1733 = vmatpush2.xpose.msra.mxu0 0.0
  %1734 = vmatprep.subr.mxu0 0.0
  %1735 = vmatpush2.xpose.msra.mxu0 0.0
  %1736 = vmatprep.mubr.f32.mxu0 0.0
  %1737 = vmatmul.mubr.f32.gmra.mxu0 %v1668
  %v1738 = vpop.f32.mrf.mxu0
  %v1739 = vadd.f32 0.0, %v1738
  %v1740 = vpop.f32.mrf.mxu0
  %1741 = vdwg.mxu0
  %1742 = vrot.lane.b32.xlu0 %v1513, 96
  %v1743 = vpop.permute.xlu0 %1742
  %v1744 = vsel %vm341, %v1513, 0
  %v1746 = vsel %vm341, %v1743, 0
  %1748 = vmatprep.subr.mxu0 0.0
  %1749 = vmatpush1.xpose.msra.mxu0 0.0
  %1750 = vmatprep.subr.mxu0 0.0
  %1751 = vmatpush1.xpose.msra.mxu0 0.0
  %1752 = vmatprep.subr.mxu0 0.0
  %1753 = vmatpush1.xpose.msra.mxu0 0.0
  %1754 = vmatprep.subr.mxu0 0.0
  %1755 = vmatpush1.xpose.msra.mxu0 0.0
  %1756 = vmatprep.subr.mxu0 0.0
  %1757 = vmatpush1.xpose.msra.mxu0 0.0
  %1758 = vmatprep.subr.mxu0 0.0
  %1759 = vmatpush1.xpose.msra.mxu0 0.0
  %1760 = vmatprep.subr.mxu0 0.0
  %1761 = vmatpush1.xpose.msra.mxu0 0.0
  %1762 = vmatprep.subr.mxu0 0.0
  %1763 = vmatpush1.xpose.msra.mxu0 0.0
  %1764 = vmatprep.subr.mxu0 0.0
  %1765 = vmatpush1.xpose.msra.mxu0 0.0
  %1766 = vmatprep.subr.mxu0 0.0
  %1767 = vmatpush1.xpose.msra.mxu0 0.0
  %1768 = vmatprep.subr.mxu0 0.0
  %1769 = vmatpush1.xpose.msra.mxu0 0.0
  %1770 = vmatprep.subr.mxu0 0.0
  %1771 = vmatpush1.xpose.msra.mxu0 0.0
  %1772 = vmatprep.subr.mxu0 0.0
  %1773 = vmatpush1.xpose.msra.mxu0 0.0
  %1774 = vmatprep.subr.mxu0 0.0
  %1775 = vmatpush1.xpose.msra.mxu0 0.0
  %1776 = vmatprep.subr.mxu0 0.0
  %1777 = vmatpush1.xpose.msra.mxu0 0.0
  %1778 = vmatprep.subr.mxu0 0.0
  %1779 = vmatpush1.xpose.msra.mxu0 %v1746
  %1780 = vmatprep.subr.mxu0 0.0
  %1781 = vmatpush2.xpose.msra.mxu0 0.0
  %1782 = vmatprep.subr.mxu0 0.0
  %1783 = vmatpush2.xpose.msra.mxu0 0.0
  %1784 = vmatprep.subr.mxu0 0.0
  %1785 = vmatpush2.xpose.msra.mxu0 0.0
  %1786 = vmatprep.subr.mxu0 0.0
  %1787 = vmatpush2.xpose.msra.mxu0 0.0
  %1788 = vmatprep.subr.mxu0 0.0
  %1789 = vmatpush2.xpose.msra.mxu0 0.0
  %1790 = vmatprep.subr.mxu0 0.0
  %1791 = vmatpush2.xpose.msra.mxu0 0.0
  %1792 = vmatprep.subr.mxu0 0.0
  %1793 = vmatpush2.xpose.msra.mxu0 0.0
  %1794 = vmatprep.subr.mxu0 0.0
  %1795 = vmatpush2.xpose.msra.mxu0 0.0
  %1796 = vmatprep.subr.mxu0 0.0
  %1797 = vmatpush2.xpose.msra.mxu0 0.0
  %1798 = vmatprep.subr.mxu0 0.0
  %1799 = vmatpush2.xpose.msra.mxu0 0.0
  %1800 = vmatprep.subr.mxu0 0.0
  %1801 = vmatpush2.xpose.msra.mxu0 0.0
  %1802 = vmatprep.subr.mxu0 0.0
  %1803 = vmatpush2.xpose.msra.mxu0 0.0
  %1804 = vmatprep.subr.mxu0 0.0
  %1805 = vmatpush2.xpose.msra.mxu0 0.0
  %1806 = vmatprep.subr.mxu0 0.0
  %1807 = vmatpush2.xpose.msra.mxu0 0.0
  %1808 = vmatprep.subr.mxu0 0.0
  %1809 = vmatpush2.xpose.msra.mxu0 0.0
  %1810 = vmatprep.subr.mxu0 0.0
  %1811 = vmatpush2.xpose.msra.mxu0 0.0
  %1812 = vmatprep.mubr.f32.mxu0 0.0
  %1813 = vmatmul.mubr.f32.gmra.mxu0 %v1744
  %v1814 = vpop.f32.mrf.mxu0
  %v1815 = vadd.f32 0.0, %v1814
  %v1816 = vpop.f32.mrf.mxu0
  %1817 = vdwg.mxu0
  %v1818 = vmul.f32 %v1587, 0.25
  %v1819 = vmul.f32 %v1663, 0.25
  %v1820 = vmul.f32 %v1739, 0.25
  %v1821 = vmul.f32 %v1815, 0.25
  %v1822 = vadd.f32 %v1818, %v653
  %v1823 = vadd.f32 %v1819, %v657
  %v1824 = vadd.f32 %v1820, %v653
  %v1825 = vadd.f32 %v1821, %v657
  %v1826 = vsel %vm664, %v1822, -inf
  %1827 = vmax.xlane.f32.xlu0 %v1826
  %v1828 = vpop.xlane.xlu0 %1827
  %v1829 = vsel %vm664, %v1823, -inf
  %1830 = vmax.xlane.f32.xlu0 %v1829
  %v1831 = vpop.xlane.xlu0 %1830
  %v1832 = vsel %vm664, %v1824, -inf
  %1833 = vmax.xlane.f32.xlu0 %v1832
  %v1834 = vpop.xlane.xlu0 %1833
  %v1835 = vsel %vm664, %v1825, -inf
  %1836 = vmax.xlane.f32.xlu0 %v1835
  %v1837 = vpop.xlane.xlu0 %1836
  %v1838 = vsub.f32 %v1822, %v1828
  %v1839 = vsub.f32 %v1823, %v1831
  %v1840 = vsub.f32 %v1824, %v1834
  %v1841 = vsub.f32 %v1825, %v1837
  %v1842 = vmul.f32 %v1838, 1.442695
  %v1843 = vpow.pop %v1842
  %v1844 = vmul.f32 %v1839, 1.442695
  %v1845 = vpow.pop %v1844
  %v1846 = vmul.f32 %v1840, 1.442695
  %v1847 = vpow.pop %v1846
  %v1848 = vmul.f32 %v1841, 1.442695
  %v1849 = vpow.pop %v1848
  %v1850 = vsel %vm664, %v1843, 0.0
  %1851 = vadd.xlane.f32.xlu0 %v1850
  %v1852 = vpop.xlane.xlu0 %1851
  %v1853 = vsel %vm664, %v1845, 0.0
  %1854 = vadd.xlane.f32.xlu0 %v1853
  %v1855 = vpop.xlane.xlu0 %1854
  %v1856 = vsel %vm664, %v1847, 0.0
  %1857 = vadd.xlane.f32.xlu0 %v1856
  %v1858 = vpop.xlane.xlu0 %1857
  %v1859 = vsel %vm664, %v1849, 0.0
  %1860 = vadd.xlane.f32.xlu0 %v1859
  %v1861 = vpop.xlane.xlu0 %1860
  %v1862 = vrcp.pop %v1852
  %v1863 = vrcp.pop %v1855
  %v1864 = vrcp.pop %v1858
  %v1865 = vrcp.pop %v1861
  %v1866 = vmul.f32 %v1843, %v1862
  %v1867 = vmul.f32 %v1845, %v1863
  %v1868 = vmul.f32 %v1847, %v1864
  %v1869 = vmul.f32 %v1849, %v1865
  %1870 = vrot.lane.b32.xlu0 %v1500, 64
  %v1871 = vpop.permute.xlu0 %1870
  %v1874 = vsel %vm664, %v1866, 0
  %1876 = vmatprep.subr.mxu0 0.0
  %1877 = vmatpush1.msra.mxu0 0.0
  %1878 = vmatprep.subr.mxu0 0.0
  %1879 = vmatpush1.msra.mxu0 0.0
  %1880 = vmatprep.subr.mxu0 0.0
  %1881 = vmatpush1.msra.mxu0 0.0
  %1882 = vmatprep.subr.mxu0 0.0
  %1883 = vmatpush1.msra.mxu0 0.0
  %1884 = vmatprep.subr.mxu0 0.0
  %1885 = vmatpush1.msra.mxu0 0.0
  %1886 = vmatprep.subr.mxu0 0.0
  %1887 = vmatpush1.msra.mxu0 0.0
  %1888 = vmatprep.subr.mxu0 0.0
  %1889 = vmatpush1.msra.mxu0 0.0
  %1890 = vmatprep.subr.mxu0 0.0
  %1891 = vmatpush1.msra.mxu0 0.0
  %1892 = vmatprep.subr.mxu0 0.0
  %1893 = vmatpush1.msra.mxu0 0.0
  %1894 = vmatprep.subr.mxu0 0.0
  %1895 = vmatpush1.msra.mxu0 0.0
  %1896 = vmatprep.subr.mxu0 0.0
  %1897 = vmatpush1.msra.mxu0 0.0
  %1898 = vmatprep.subr.mxu0 0.0
  %1899 = vmatpush1.msra.mxu0 0.0
  %1900 = vmatprep.subr.mxu0 0.0
  %1901 = vmatpush1.msra.mxu0 0.0
  %1902 = vmatprep.subr.mxu0 0.0
  %1903 = vmatpush1.msra.mxu0 0.0
  %1904 = vmatprep.subr.mxu0 0.0
  %1905 = vmatpush1.msra.mxu0 0.0
  %1906 = vmatprep.subr.mxu0 0.0
  %1907 = vmatpush1.msra.mxu0 %v1871
  %1908 = vmatprep.subr.mxu0 0.0
  %1909 = vmatpush2.msra.mxu0 0.0
  %1910 = vmatprep.subr.mxu0 0.0
  %1911 = vmatpush2.msra.mxu0 0.0
  %1912 = vmatprep.subr.mxu0 0.0
  %1913 = vmatpush2.msra.mxu0 0.0
  %1914 = vmatprep.subr.mxu0 0.0
  %1915 = vmatpush2.msra.mxu0 0.0
  %1916 = vmatprep.subr.mxu0 0.0
  %1917 = vmatpush2.msra.mxu0 0.0
  %1918 = vmatprep.subr.mxu0 0.0
  %1919 = vmatpush2.msra.mxu0 0.0
  %1920 = vmatprep.subr.mxu0 0.0
  %1921 = vmatpush2.msra.mxu0 0.0
  %1922 = vmatprep.subr.mxu0 0.0
  %1923 = vmatpush2.msra.mxu0 0.0
  %1924 = vmatprep.subr.mxu0 0.0
  %1925 = vmatpush2.msra.mxu0 0.0
  %1926 = vmatprep.subr.mxu0 0.0
  %1927 = vmatpush2.msra.mxu0 0.0
  %1928 = vmatprep.subr.mxu0 0.0
  %1929 = vmatpush2.msra.mxu0 0.0
  %1930 = vmatprep.subr.mxu0 0.0
  %1931 = vmatpush2.msra.mxu0 0.0
  %1932 = vmatprep.subr.mxu0 0.0
  %1933 = vmatpush2.msra.mxu0 0.0
  %1934 = vmatprep.subr.mxu0 0.0
  %1935 = vmatpush2.msra.mxu0 0.0
  %1936 = vmatprep.subr.mxu0 0.0
  %1937 = vmatpush2.msra.mxu0 0.0
  %1938 = vmatprep.subr.mxu0 0.0
  %1939 = vmatpush2.msra.mxu0 0.0
  %1940 = vmatprep.mubr.f32.mxu0 0.0
  %1941 = vmatmul.mubr.f32.gmra.mxu0 %v1874
  %v1942 = vpop.f32.mrf.mxu0
  %v1943 = vadd.f32 0.0, %v1942
  %v1944 = vpop.f32.mrf.mxu0
  %1945 = vdwg.mxu0
  %1946 = vrot.lane.b32.xlu0 %v1505, 64
  %v1947 = vpop.permute.xlu0 %1946
  %v1950 = vsel %vm664, %v1867, 0
  %1952 = vmatprep.subr.mxu0 0.0
  %1953 = vmatpush1.msra.mxu0 0.0
  %1954 = vmatprep.subr.mxu0 0.0
  %1955 = vmatpush1.msra.mxu0 0.0
  %1956 = vmatprep.subr.mxu0 0.0
  %1957 = vmatpush1.msra.mxu0 0.0
  %1958 = vmatprep.subr.mxu0 0.0
  %1959 = vmatpush1.msra.mxu0 0.0
  %1960 = vmatprep.subr.mxu0 0.0
  %1961 = vmatpush1.msra.mxu0 0.0
  %1962 = vmatprep.subr.mxu0 0.0
  %1963 = vmatpush1.msra.mxu0 0.0
  %1964 = vmatprep.subr.mxu0 0.0
  %1965 = vmatpush1.msra.mxu0 0.0
  %1966 = vmatprep.subr.mxu0 0.0
  %1967 = vmatpush1.msra.mxu0 0.0
  %1968 = vmatprep.subr.mxu0 0.0
  %1969 = vmatpush1.msra.mxu0 0.0
  %1970 = vmatprep.subr.mxu0 0.0
  %1971 = vmatpush1.msra.mxu0 0.0
  %1972 = vmatprep.subr.mxu0 0.0
  %1973 = vmatpush1.msra.mxu0 0.0
  %1974 = vmatprep.subr.mxu0 0.0
  %1975 = vmatpush1.msra.mxu0 0.0
  %1976 = vmatprep.subr.mxu0 0.0
  %1977 = vmatpush1.msra.mxu0 0.0
  %1978 = vmatprep.subr.mxu0 0.0
  %1979 = vmatpush1.msra.mxu0 0.0
  %1980 = vmatprep.subr.mxu0 0.0
  %1981 = vmatpush1.msra.mxu0 0.0
  %1982 = vmatprep.subr.mxu0 0.0
  %1983 = vmatpush1.msra.mxu0 %v1947
  %1984 = vmatprep.subr.mxu0 0.0
  %1985 = vmatpush2.msra.mxu0 0.0
  %1986 = vmatprep.subr.mxu0 0.0
  %1987 = vmatpush2.msra.mxu0 0.0
  %1988 = vmatprep.subr.mxu0 0.0
  %1989 = vmatpush2.msra.mxu0 0.0
  %1990 = vmatprep.subr.mxu0 0.0
  %1991 = vmatpush2.msra.mxu0 0.0
  %1992 = vmatprep.subr.mxu0 0.0
  %1993 = vmatpush2.msra.mxu0 0.0
  %1994 = vmatprep.subr.mxu0 0.0
  %1995 = vmatpush2.msra.mxu0 0.0
  %1996 = vmatprep.subr.mxu0 0.0
  %1997 = vmatpush2.msra.mxu0 0.0
  %1998 = vmatprep.subr.mxu0 0.0
  %1999 = vmatpush2.msra.mxu0 0.0
  %2000 = vmatprep.subr.mxu0 0.0
  %2001 = vmatpush2.msra.mxu0 0.0
  %2002 = vmatprep.subr.mxu0 0.0
  %2003 = vmatpush2.msra.mxu0 0.0
  %2004 = vmatprep.subr.mxu0 0.0
  %2005 = vmatpush2.msra.mxu0 0.0
  %2006 = vmatprep.subr.mxu0 0.0
  %2007 = vmatpush2.msra.mxu0 0.0
  %2008 = vmatprep.subr.mxu0 0.0
  %2009 = vmatpush2.msra.mxu0 0.0
  %2010 = vmatprep.subr.mxu0 0.0
  %2011 = vmatpush2.msra.mxu0 0.0
  %2012 = vmatprep.subr.mxu0 0.0
  %2013 = vmatpush2.msra.mxu0 0.0
  %2014 = vmatprep.subr.mxu0 0.0
  %2015 = vmatpush2.msra.mxu0 0.0
  %2016 = vmatprep.mubr.f32.mxu0 0.0
  %2017 = vmatmul.mubr.f32.gmra.mxu0 %v1950
  %v2018 = vpop.f32.mrf.mxu0
  %v2019 = vadd.f32 0.0, %v2018
  %v2020 = vpop.f32.mrf.mxu0
  %2021 = vdwg.mxu0
  %2022 = vrot.lane.b32.xlu0 %v1511, 64
  %v2023 = vpop.permute.xlu0 %2022
  %v2026 = vsel %vm664, %v1868, 0
  %2028 = vmatprep.subr.mxu0 0.0
  %2029 = vmatpush1.msra.mxu0 0.0
  %2030 = vmatprep.subr.mxu0 0.0
  %2031 = vmatpush1.msra.mxu0 0.0
  %2032 = vmatprep.subr.mxu0 0.0
  %2033 = vmatpush1.msra.mxu0 0.0
  %2034 = vmatprep.subr.mxu0 0.0
  %2035 = vmatpush1.msra.mxu0 0.0
  %2036 = vmatprep.subr.mxu0 0.0
  %2037 = vmatpush1.msra.mxu0 0.0
  %2038 = vmatprep.subr.mxu0 0.0
  %2039 = vmatpush1.msra.mxu0 0.0
  %2040 = vmatprep.subr.mxu0 0.0
  %2041 = vmatpush1.msra.mxu0 0.0
  %2042 = vmatprep.subr.mxu0 0.0
  %2043 = vmatpush1.msra.mxu0 0.0
  %2044 = vmatprep.subr.mxu0 0.0
  %2045 = vmatpush1.msra.mxu0 0.0
  %2046 = vmatprep.subr.mxu0 0.0
  %2047 = vmatpush1.msra.mxu0 0.0
  %2048 = vmatprep.subr.mxu0 0.0
  %2049 = vmatpush1.msra.mxu0 0.0
  %2050 = vmatprep.subr.mxu0 0.0
  %2051 = vmatpush1.msra.mxu0 0.0
  %2052 = vmatprep.subr.mxu0 0.0
  %2053 = vmatpush1.msra.mxu0 0.0
  %2054 = vmatprep.subr.mxu0 0.0
  %2055 = vmatpush1.msra.mxu0 0.0
  %2056 = vmatprep.subr.mxu0 0.0
  %2057 = vmatpush1.msra.mxu0 0.0
  %2058 = vmatprep.subr.mxu0 0.0
  %2059 = vmatpush1.msra.mxu0 %v2023
  %2060 = vmatprep.subr.mxu0 0.0
  %2061 = vmatpush2.msra.mxu0 0.0
  %2062 = vmatprep.subr.mxu0 0.0
  %2063 = vmatpush2.msra.mxu0 0.0
  %2064 = vmatprep.subr.mxu0 0.0
  %2065 = vmatpush2.msra.mxu0 0.0
  %2066 = vmatprep.subr.mxu0 0.0
  %2067 = vmatpush2.msra.mxu0 0.0
  %2068 = vmatprep.subr.mxu0 0.0
  %2069 = vmatpush2.msra.mxu0 0.0
  %2070 = vmatprep.subr.mxu0 0.0
  %2071 = vmatpush2.msra.mxu0 0.0
  %2072 = vmatprep.subr.mxu0 0.0
  %2073 = vmatpush2.msra.mxu0 0.0
  %2074 = vmatprep.subr.mxu0 0.0
  %2075 = vmatpush2.msra.mxu0 0.0
  %2076 = vmatprep.subr.mxu0 0.0
  %2077 = vmatpush2.msra.mxu0 0.0
  %2078 = vmatprep.subr.mxu0 0.0
  %2079 = vmatpush2.msra.mxu0 0.0
  %2080 = vmatprep.subr.mxu0 0.0
  %2081 = vmatpush2.msra.mxu0 0.0
  %2082 = vmatprep.subr.mxu0 0.0
  %2083 = vmatpush2.msra.mxu0 0.0
  %2084 = vmatprep.subr.mxu0 0.0
  %2085 = vmatpush2.msra.mxu0 0.0
  %2086 = vmatprep.subr.mxu0 0.0
  %2087 = vmatpush2.msra.mxu0 0.0
  %2088 = vmatprep.subr.mxu0 0.0
  %2089 = vmatpush2.msra.mxu0 0.0
  %2090 = vmatprep.subr.mxu0 0.0
  %2091 = vmatpush2.msra.mxu0 0.0
  %2092 = vmatprep.mubr.f32.mxu0 0.0
  %2093 = vmatmul.mubr.f32.gmra.mxu0 %v2026
  %v2094 = vpop.f32.mrf.mxu0
  %v2095 = vadd.f32 0.0, %v2094
  %v2096 = vpop.f32.mrf.mxu0
  %2097 = vdwg.mxu0
  %2098 = vrot.lane.b32.xlu0 %v1513, 64
  %v2099 = vpop.permute.xlu0 %2098
  %v2102 = vsel %vm664, %v1869, 0
  %2104 = vmatprep.subr.mxu0 0.0
  %2105 = vmatpush1.msra.mxu0 0.0
  %2106 = vmatprep.subr.mxu0 0.0
  %2107 = vmatpush1.msra.mxu0 0.0
  %2108 = vmatprep.subr.mxu0 0.0
  %2109 = vmatpush1.msra.mxu0 0.0
  %2110 = vmatprep.subr.mxu0 0.0
  %2111 = vmatpush1.msra.mxu0 0.0
  %2112 = vmatprep.subr.mxu0 0.0
  %2113 = vmatpush1.msra.mxu0 0.0
  %2114 = vmatprep.subr.mxu0 0.0
  %2115 = vmatpush1.msra.mxu0 0.0
  %2116 = vmatprep.subr.mxu0 0.0
  %2117 = vmatpush1.msra.mxu0 0.0
  %2118 = vmatprep.subr.mxu0 0.0
  %2119 = vmatpush1.msra.mxu0 0.0
  %2120 = vmatprep.subr.mxu0 0.0
  %2121 = vmatpush1.msra.mxu0 0.0
  %2122 = vmatprep.subr.mxu0 0.0
  %2123 = vmatpush1.msra.mxu0 0.0
  %2124 = vmatprep.subr.mxu0 0.0
  %2125 = vmatpush1.msra.mxu0 0.0
  %2126 = vmatprep.subr.mxu0 0.0
  %2127 = vmatpush1.msra.mxu0 0.0
  %2128 = vmatprep.subr.mxu0 0.0
  %2129 = vmatpush1.msra.mxu0 0.0
  %2130 = vmatprep.subr.mxu0 0.0
  %2131 = vmatpush1.msra.mxu0 0.0
  %2132 = vmatprep.subr.mxu0 0.0
  %2133 = vmatpush1.msra.mxu0 0.0
  %2134 = vmatprep.subr.mxu0 0.0
  %2135 = vmatpush1.msra.mxu0 %v2099
  %2136 = vmatprep.subr.mxu0 0.0
  %2137 = vmatpush2.msra.mxu0 0.0
  %2138 = vmatprep.subr.mxu0 0.0
  %2139 = vmatpush2.msra.mxu0 0.0
  %2140 = vmatprep.subr.mxu0 0.0
  %2141 = vmatpush2.msra.mxu0 0.0
  %2142 = vmatprep.subr.mxu0 0.0
  %2143 = vmatpush2.msra.mxu0 0.0
  %2144 = vmatprep.subr.mxu0 0.0
  %2145 = vmatpush2.msra.mxu0 0.0
  %2146 = vmatprep.subr.mxu0 0.0
  %2147 = vmatpush2.msra.mxu0 0.0
  %2148 = vmatprep.subr.mxu0 0.0
  %2149 = vmatpush2.msra.mxu0 0.0
  %2150 = vmatprep.subr.mxu0 0.0
  %2151 = vmatpush2.msra.mxu0 0.0
  %2152 = vmatprep.subr.mxu0 0.0
  %2153 = vmatpush2.msra.mxu0 0.0
  %2154 = vmatprep.subr.mxu0 0.0
  %2155 = vmatpush2.msra.mxu0 0.0
  %2156 = vmatprep.subr.mxu0 0.0
  %2157 = vmatpush2.msra.mxu0 0.0
  %2158 = vmatprep.subr.mxu0 0.0
  %2159 = vmatpush2.msra.mxu0 0.0
  %2160 = vmatprep.subr.mxu0 0.0
  %2161 = vmatpush2.msra.mxu0 0.0
  %2162 = vmatprep.subr.mxu0 0.0
  %2163 = vmatpush2.msra.mxu0 0.0
  %2164 = vmatprep.subr.mxu0 0.0
  %2165 = vmatpush2.msra.mxu0 0.0
  %2166 = vmatprep.subr.mxu0 0.0
  %2167 = vmatpush2.msra.mxu0 0.0
  %2168 = vmatprep.mubr.f32.mxu0 0.0
  %2169 = vmatmul.mubr.f32.gmra.mxu0 %v2102
  %v2170 = vpop.f32.mrf.mxu0
  %v2171 = vadd.f32 0.0, %v2170
  %v2172 = vpop.f32.mrf.mxu0
  %2173 = vdwg.mxu0
  %2176 = vrot.lane.b32.xlu0 %v2095, 16
  %v2177 = vpop.permute.xlu0 %2176
  %2178 = vrot.lane.b32.xlu0 %v2171, 16
  %v2179 = vpop.permute.xlu0 %2178
  %v2182 = vsel %vm341, %v1943, %v2177
  %v2183 = vsel %vm341, %v2019, %v2179
  %s2184 = scalar_lea.vmem %s9, 32
  %v2185 = vld [vmem:[%s2184] sm:$0xff]
  %v2186 = vld [vmem:[%s2184 + $0x8] sm:$0xff]
  %v2187 = vld [vmem:[%s2184 + $0x10] sm:$0xff]
  %v2188 = vld [vmem:[%s2184 + $0x18] sm:$0xff]
  %s2189 = scalar_lea.vmem %s10, 1
  %v2190 = vld [vmem:[%s2189] sm:$0x1]
  %v2192 = vlaneseq
  %v2193 = vshrl.u32 %v2192, 7
  %v2194 = vsub.s32 0, %v2193
  %v2195 = vrot.slane %v2190, %v2194
  %v2198 = vsel %vm191, %v2182, 0
  %v2201 = vsel %vm191, %v2183, 0
  %2203 = vmatprep.subr.mxu0 0.0
  %2204 = vmatpush1.msra.mxu0 0.0
  %2205 = vmatprep.subr.mxu0 0.0
  %2206 = vmatpush1.msra.mxu0 0.0
  %2207 = vmatprep.subr.mxu0 0.0
  %2208 = vmatpush1.msra.mxu0 0.0
  %2209 = vmatprep.subr.mxu0 0.0
  %2210 = vmatpush1.msra.mxu0 0.0
  %2211 = vmatprep.subr.mxu0 0.0
  %2212 = vmatpush1.msra.mxu0 0.0
  %2213 = vmatprep.subr.mxu0 0.0
  %2214 = vmatpush1.msra.mxu0 0.0
  %2215 = vmatprep.subr.mxu0 0.0
  %2216 = vmatpush1.msra.mxu0 0.0
  %2217 = vmatprep.subr.mxu0 0.0
  %2218 = vmatpush1.msra.mxu0 0.0
  %2219 = vmatprep.subr.mxu0 0.0
  %2220 = vmatpush1.msra.mxu0 0.0
  %2221 = vmatprep.subr.mxu0 0.0
  %2222 = vmatpush1.msra.mxu0 0.0
  %2223 = vmatprep.subr.mxu0 0.0
  %2224 = vmatpush1.msra.mxu0 0.0
  %2225 = vmatprep.subr.mxu0 0.0
  %2226 = vmatpush1.msra.mxu0 0.0
  %2227 = vmatprep.subr.mxu0 0.0
  %2228 = vmatpush1.msra.mxu0 %v2188
  %2229 = vmatprep.subr.mxu0 0.0
  %2230 = vmatpush1.msra.mxu0 %v2187
  %2231 = vmatprep.subr.mxu0 0.0
  %2232 = vmatpush1.msra.mxu0 %v2186
  %2233 = vmatprep.subr.mxu0 0.0
  %2234 = vmatpush1.msra.mxu0 %v2185
  %2235 = vmatprep.subr.mxu0 0.0
  %2236 = vmatpush2.msra.mxu0 0.0
  %2237 = vmatprep.subr.mxu0 0.0
  %2238 = vmatpush2.msra.mxu0 0.0
  %2239 = vmatprep.subr.mxu0 0.0
  %2240 = vmatpush2.msra.mxu0 0.0
  %2241 = vmatprep.subr.mxu0 0.0
  %2242 = vmatpush2.msra.mxu0 0.0
  %2243 = vmatprep.subr.mxu0 0.0
  %2244 = vmatpush2.msra.mxu0 0.0
  %2245 = vmatprep.subr.mxu0 0.0
  %2246 = vmatpush2.msra.mxu0 0.0
  %2247 = vmatprep.subr.mxu0 0.0
  %2248 = vmatpush2.msra.mxu0 0.0
  %2249 = vmatprep.subr.mxu0 0.0
  %2250 = vmatpush2.msra.mxu0 0.0
  %2251 = vmatprep.subr.mxu0 0.0
  %2252 = vmatpush2.msra.mxu0 0.0
  %2253 = vmatprep.subr.mxu0 0.0
  %2254 = vmatpush2.msra.mxu0 0.0
  %2255 = vmatprep.subr.mxu0 0.0
  %2256 = vmatpush2.msra.mxu0 0.0
  %2257 = vmatprep.subr.mxu0 0.0
  %2258 = vmatpush2.msra.mxu0 0.0
  %2259 = vmatprep.subr.mxu0 0.0
  %2260 = vmatpush2.msra.mxu0 0.0
  %2261 = vmatprep.subr.mxu0 0.0
  %2262 = vmatpush2.msra.mxu0 0.0
  %2263 = vmatprep.subr.mxu0 0.0
  %2264 = vmatpush2.msra.mxu0 0.0
  %2265 = vmatprep.subr.mxu0 0.0
  %2266 = vmatpush2.msra.mxu0 0.0
  %2267 = vmatprep.mubr.f32.mxu0 0.0
  %2268 = vmatmul.mubr.f32.gmra.mxu0 %v2198
  %v2269 = vpop.f32.mrf.mxu0
  %v2270 = vadd.f32 %v2195, %v2269
  %v2271 = vpop.f32.mrf.mxu0
  %2272 = vmatprep.mubr.f32.mxu0 0.0
  %2273 = vmatmul.mubr.f32.gmra.mxu0 %v2201
  %v2274 = vpop.f32.mrf.mxu0
  %v2275 = vadd.f32 %v2195, %v2274
  %v2276 = vpop.f32.mrf.mxu0
  %2277 = vdwg.mxu0
  %v2278 = vadd.f32 %v2270, %v1412
  %v2279 = vadd.f32 %v2275, %v1413
  %s2280 = scalar_lea.vmem %s11, 1
  %v2281 = vld [vmem:[%s2280] sm:$0x1]
  %s2282 = scalar_lea.vmem %s12, 1
  %v2283 = vld [vmem:[%s2282] sm:$0x1]
  %v2284 = vsel %vm191, %v2278, 0.0
  %2285 = vadd.xlane.f32.xlu0 %v2284
  %v2286 = vpop.xlane.xlu0 %2285
  %v2287 = vsel %vm191, %v2279, 0.0
  %2288 = vadd.xlane.f32.xlu0 %v2287
  %v2289 = vpop.xlane.xlu0 %2288
  %v2290 = vmul.f32 %v2286, %v198
  %v2291 = vmul.f32 %v2289, %v198
  %v2292 = vsub.f32 %v2278, %v2290
  %v2293 = vsub.f32 %v2279, %v2291
  %v2294 = vmul.f32 %v2292, %v2292
  %v2295 = vmul.f32 %v2293, %v2293
  %v2296 = vsel %vm191, %v2294, 0.0
  %2297 = vadd.xlane.f32.xlu0 %v2296
  %v2298 = vpop.xlane.xlu0 %2297
  %v2299 = vsel %vm191, %v2295, 0.0
  %2300 = vadd.xlane.f32.xlu0 %v2299
  %v2301 = vpop.xlane.xlu0 %2300
  %v2302 = vmul.f32 %v2298, %v198
  %v2303 = vmul.f32 %v2301, %v198
  %v2304 = vadd.f32 %v2302, 1e-12
  %v2305 = vadd.f32 %v2303, 1e-12
  %v2306 = vrsqrt.pop %v2304
  %v2307 = vrsqrt.pop %v2305
  %v2308 = vmul.f32 %v2292, %v2306
  %v2309 = vmul.f32 %v2293, %v2307
  %v2311 = vlaneseq
  %v2312 = vshrl.u32 %v2311, 7
  %v2313 = vsub.s32 0, %v2312
  %v2314 = vrot.slane %v2281, %v2313
  %v2316 = vmul.f32 %v2308, %v2314
  %v2317 = vmul.f32 %v2309, %v2314
  %v2319 = vlaneseq
  %v2320 = vshrl.u32 %v2319, 7
  %v2321 = vsub.s32 0, %v2320
  %v2322 = vrot.slane %v2283, %v2321
  %v2324 = vadd.f32 %v2316, %v2322
  %v2325 = vadd.f32 %v2317, %v2322
  %s2326 = scalar_lea.vmem %s13, 32
  %v2327 = vld [vmem:[%s2326] sm:$0xff]
  %v2328 = vld [vmem:[%s2326 + $0x8] sm:$0xff]
  %v2329 = vld [vmem:[%s2326 + $0x10] sm:$0xff]
  %v2330 = vld [vmem:[%s2326 + $0x18] sm:$0xff]
  %s2331 = scalar_lea.vmem %s14, 1
  %v2332 = vld [vmem:[%s2331] sm:$0x1]
  %v2334 = vlaneseq
  %v2335 = vshrl.u32 %v2334, 7
  %v2336 = vsub.s32 0, %v2335
  %v2337 = vrot.slane %v2332, %v2336
  %v2340 = vsel %vm191, %v2324, 0
  %v2343 = vsel %vm191, %v2325, 0
  %2345 = vmatprep.subr.mxu0 0.0
  %2346 = vmatpush1.msra.mxu0 0.0
  %2347 = vmatprep.subr.mxu0 0.0
  %2348 = vmatpush1.msra.mxu0 0.0
  %2349 = vmatprep.subr.mxu0 0.0
  %2350 = vmatpush1.msra.mxu0 0.0
  %2351 = vmatprep.subr.mxu0 0.0
  %2352 = vmatpush1.msra.mxu0 0.0
  %2353 = vmatprep.subr.mxu0 0.0
  %2354 = vmatpush1.msra.mxu0 0.0
  %2355 = vmatprep.subr.mxu0 0.0
  %2356 = vmatpush1.msra.mxu0 0.0
  %2357 = vmatprep.subr.mxu0 0.0
  %2358 = vmatpush1.msra.mxu0 0.0
  %2359 = vmatprep.subr.mxu0 0.0
  %2360 = vmatpush1.msra.mxu0 0.0
  %2361 = vmatprep.subr.mxu0 0.0
  %2362 = vmatpush1.msra.mxu0 0.0
  %2363 = vmatprep.subr.mxu0 0.0
  %2364 = vmatpush1.msra.mxu0 0.0
  %2365 = vmatprep.subr.mxu0 0.0
  %2366 = vmatpush1.msra.mxu0 0.0
  %2367 = vmatprep.subr.mxu0 0.0
  %2368 = vmatpush1.msra.mxu0 0.0
  %2369 = vmatprep.subr.mxu0 0.0
  %2370 = vmatpush1.msra.mxu0 %v2330
  %2371 = vmatprep.subr.mxu0 0.0
  %2372 = vmatpush1.msra.mxu0 %v2329
  %2373 = vmatprep.subr.mxu0 0.0
  %2374 = vmatpush1.msra.mxu0 %v2328
  %2375 = vmatprep.subr.mxu0 0.0
  %2376 = vmatpush1.msra.mxu0 %v2327
  %2377 = vmatprep.subr.mxu0 0.0
  %2378 = vmatpush2.msra.mxu0 0.0
  %2379 = vmatprep.subr.mxu0 0.0
  %2380 = vmatpush2.msra.mxu0 0.0
  %2381 = vmatprep.subr.mxu0 0.0
  %2382 = vmatpush2.msra.mxu0 0.0
  %2383 = vmatprep.subr.mxu0 0.0
  %2384 = vmatpush2.msra.mxu0 0.0
  %2385 = vmatprep.subr.mxu0 0.0
  %2386 = vmatpush2.msra.mxu0 0.0
  %2387 = vmatprep.subr.mxu0 0.0
  %2388 = vmatpush2.msra.mxu0 0.0
  %2389 = vmatprep.subr.mxu0 0.0
  %2390 = vmatpush2.msra.mxu0 0.0
  %2391 = vmatprep.subr.mxu0 0.0
  %2392 = vmatpush2.msra.mxu0 0.0
  %2393 = vmatprep.subr.mxu0 0.0
  %2394 = vmatpush2.msra.mxu0 0.0
  %2395 = vmatprep.subr.mxu0 0.0
  %2396 = vmatpush2.msra.mxu0 0.0
  %2397 = vmatprep.subr.mxu0 0.0
  %2398 = vmatpush2.msra.mxu0 0.0
  %2399 = vmatprep.subr.mxu0 0.0
  %2400 = vmatpush2.msra.mxu0 0.0
  %2401 = vmatprep.subr.mxu0 0.0
  %2402 = vmatpush2.msra.mxu0 0.0
  %2403 = vmatprep.subr.mxu0 0.0
  %2404 = vmatpush2.msra.mxu0 0.0
  %2405 = vmatprep.subr.mxu0 0.0
  %2406 = vmatpush2.msra.mxu0 0.0
  %2407 = vmatprep.subr.mxu0 0.0
  %2408 = vmatpush2.msra.mxu0 0.0
  %2409 = vmatprep.mubr.f32.mxu0 0.0
  %2410 = vmatmul.mubr.f32.gmra.mxu0 %v2340
  %v2411 = vpop.f32.mrf.mxu0
  %v2412 = vadd.f32 %v2337, %v2411
  %v2413 = vpop.f32.mrf.mxu0
  %2414 = vmatprep.mubr.f32.mxu0 0.0
  %2415 = vmatmul.mubr.f32.gmra.mxu0 %v2343
  %v2416 = vpop.f32.mrf.mxu0
  %v2417 = vadd.f32 %v2337, %v2416
  %v2418 = vpop.f32.mrf.mxu0
  %2419 = vdwg.mxu0
  %v2420 = vmul.f32 %v2412, 0.5
  %v2421 = vmul.f32 %v2417, 0.5
  %v2422 = vmul.f32 %v2412, 0.044715
  %v2423 = vmul.f32 %v2417, 0.044715
  %v2424 = vmul.f32 %v2422, %v2412
  %v2425 = vmul.f32 %v2423, %v2417
  %v2426 = vmul.f32 %v2424, %v2412
  %v2427 = vmul.f32 %v2425, %v2417
  %v2428 = vadd.f32 %v2412, %v2426
  %v2429 = vadd.f32 %v2417, %v2427
  %v2430 = vmul.f32 %v2428, 0.7978846
  %v2431 = vmul.f32 %v2429, 0.7978846
  %v2432 = vtanh.pop %v2430
  %v2433 = vtanh.pop %v2431
  %v2434 = vadd.f32 %v2432, 1.0
  %v2435 = vadd.f32 %v2433, 1.0
  %v2436 = vmul.f32 %v2420, %v2434
  %v2437 = vmul.f32 %v2421, %v2435
  %s2438 = scalar_lea.vmem %s15, 64
  %v2439 = vld [vmem:[%s2438] sm:$0xff]
  %v2440 = vld [vmem:[%s2438 + $0x8] sm:$0xff]
  %v2441 = vld [vmem:[%s2438 + $0x10] sm:$0xff]
  %v2442 = vld [vmem:[%s2438 + $0x18] sm:$0xff]
  %v2443 = vld [vmem:[%s2438 + $0x20] sm:$0xff]
  %v2444 = vld [vmem:[%s2438 + $0x28] sm:$0xff]
  %v2445 = vld [vmem:[%s2438 + $0x30] sm:$0xff]
  %v2446 = vld [vmem:[%s2438 + $0x38] sm:$0xff]
  %s2447 = scalar_lea.vmem %s16, 1
  %v2448 = vld [vmem:[%s2447] sm:$0x1]
  %v2450 = vlaneseq
  %v2451 = vshrl.u32 %v2450, 7
  %v2452 = vsub.s32 0, %v2451
  %v2453 = vrot.slane %v2448, %v2452
  %v2456 = vsel %vm1286, %v2436, 0
  %v2459 = vsel %vm1286, %v2437, 0
  %2461 = vmatprep.subr.mxu0 0.0
  %2462 = vmatpush1.msra.mxu0 0.0
  %2463 = vmatprep.subr.mxu0 0.0
  %2464 = vmatpush1.msra.mxu0 0.0
  %2465 = vmatprep.subr.mxu0 0.0
  %2466 = vmatpush1.msra.mxu0 0.0
  %2467 = vmatprep.subr.mxu0 0.0
  %2468 = vmatpush1.msra.mxu0 0.0
  %2469 = vmatprep.subr.mxu0 0.0
  %2470 = vmatpush1.msra.mxu0 0.0
  %2471 = vmatprep.subr.mxu0 0.0
  %2472 = vmatpush1.msra.mxu0 0.0
  %2473 = vmatprep.subr.mxu0 0.0
  %2474 = vmatpush1.msra.mxu0 0.0
  %2475 = vmatprep.subr.mxu0 0.0
  %2476 = vmatpush1.msra.mxu0 0.0
  %2477 = vmatprep.subr.mxu0 0.0
  %2478 = vmatpush1.msra.mxu0 %v2446
  %2479 = vmatprep.subr.mxu0 0.0
  %2480 = vmatpush1.msra.mxu0 %v2445
  %2481 = vmatprep.subr.mxu0 0.0
  %2482 = vmatpush1.msra.mxu0 %v2444
  %2483 = vmatprep.subr.mxu0 0.0
  %2484 = vmatpush1.msra.mxu0 %v2443
  %2485 = vmatprep.subr.mxu0 0.0
  %2486 = vmatpush1.msra.mxu0 %v2442
  %2487 = vmatprep.subr.mxu0 0.0
  %2488 = vmatpush1.msra.mxu0 %v2441
  %2489 = vmatprep.subr.mxu0 0.0
  %2490 = vmatpush1.msra.mxu0 %v2440
  %2491 = vmatprep.subr.mxu0 0.0
  %2492 = vmatpush1.msra.mxu0 %v2439
  %2493 = vmatprep.subr.mxu0 0.0
  %2494 = vmatpush2.msra.mxu0 0.0
  %2495 = vmatprep.subr.mxu0 0.0
  %2496 = vmatpush2.msra.mxu0 0.0
  %2497 = vmatprep.subr.mxu0 0.0
  %2498 = vmatpush2.msra.mxu0 0.0
  %2499 = vmatprep.subr.mxu0 0.0
  %2500 = vmatpush2.msra.mxu0 0.0
  %2501 = vmatprep.subr.mxu0 0.0
  %2502 = vmatpush2.msra.mxu0 0.0
  %2503 = vmatprep.subr.mxu0 0.0
  %2504 = vmatpush2.msra.mxu0 0.0
  %2505 = vmatprep.subr.mxu0 0.0
  %2506 = vmatpush2.msra.mxu0 0.0
  %2507 = vmatprep.subr.mxu0 0.0
  %2508 = vmatpush2.msra.mxu0 0.0
  %2509 = vmatprep.subr.mxu0 0.0
  %2510 = vmatpush2.msra.mxu0 0.0
  %2511 = vmatprep.subr.mxu0 0.0
  %2512 = vmatpush2.msra.mxu0 0.0
  %2513 = vmatprep.subr.mxu0 0.0
  %2514 = vmatpush2.msra.mxu0 0.0
  %2515 = vmatprep.subr.mxu0 0.0
  %2516 = vmatpush2.msra.mxu0 0.0
  %2517 = vmatprep.subr.mxu0 0.0
  %2518 = vmatpush2.msra.mxu0 0.0
  %2519 = vmatprep.subr.mxu0 0.0
  %2520 = vmatpush2.msra.mxu0 0.0
  %2521 = vmatprep.subr.mxu0 0.0
  %2522 = vmatpush2.msra.mxu0 0.0
  %2523 = vmatprep.subr.mxu0 0.0
  %2524 = vmatpush2.msra.mxu0 0.0
  %2525 = vmatprep.mubr.f32.mxu0 0.0
  %2526 = vmatmul.mubr.f32.gmra.mxu0 %v2456
  %v2527 = vpop.f32.mrf.mxu0
  %v2528 = vadd.f32 %v2453, %v2527
  %v2529 = vpop.f32.mrf.mxu0
  %2530 = vmatprep.mubr.f32.mxu0 0.0
  %2531 = vmatmul.mubr.f32.gmra.mxu0 %v2459
  %v2532 = vpop.f32.mrf.mxu0
  %v2533 = vadd.f32 %v2453, %v2532
  %v2534 = vpop.f32.mrf.mxu0
  %2535 = vdwg.mxu0
  %v2536 = vadd.f32 %v2528, %v2324
  %v2537 = vadd.f32 %v2533, %v2325
  %s2538 = scalar_lea.vmem %s17, 1
  %v2539 = vld [vmem:[%s2538] sm:$0x1]
  %s2540 = scalar_lea.vmem %s18, 1
  %v2541 = vld [vmem:[%s2540] sm:$0x1]
  %v2542 = vsel %vm191, %v2536, 0.0
  %2543 = vadd.xlane.f32.xlu0 %v2542
  %v2544 = vpop.xlane.xlu0 %2543
  %v2545 = vsel %vm191, %v2537, 0.0
  %2546 = vadd.xlane.f32.xlu0 %v2545
  %v2547 = vpop.xlane.xlu0 %2546
  %v2548 = vmul.f32 %v2544, %v198
  %v2549 = vmul.f32 %v2547, %v198
  %v2550 = vsub.f32 %v2536, %v2548
  %v2551 = vsub.f32 %v2537, %v2549
  %v2552 = vmul.f32 %v2550, %v2550
  %v2553 = vmul.f32 %v2551, %v2551
  %v2554 = vsel %vm191, %v2552, 0.0
  %2555 = vadd.xlane.f32.xlu0 %v2554
  %v2556 = vpop.xlane.xlu0 %2555
  %v2557 = vsel %vm191, %v2553, 0.0
  %2558 = vadd.xlane.f32.xlu0 %v2557
  %v2559 = vpop.xlane.xlu0 %2558
  %v2560 = vmul.f32 %v2556, %v198
  %v2561 = vmul.f32 %v2559, %v198
  %v2562 = vadd.f32 %v2560, 1e-12
  %v2563 = vadd.f32 %v2561, 1e-12
  %v2564 = vrsqrt.pop %v2562
  %v2565 = vrsqrt.pop %v2563
  %v2566 = vmul.f32 %v2550, %v2564
  %v2567 = vmul.f32 %v2551, %v2565
  %v2569 = vlaneseq
  %v2570 = vshrl.u32 %v2569, 7
  %v2571 = vsub.s32 0, %v2570
  %v2572 = vrot.slane %v2539, %v2571
  %v2574 = vmul.f32 %v2566, %v2572
  %v2575 = vmul.f32 %v2567, %v2572
  %v2577 = vlaneseq
  %v2578 = vshrl.u32 %v2577, 7
  %v2579 = vsub.s32 0, %v2578
  %v2580 = vrot.slane %v2541, %v2579
  %v2582 = vadd.f32 %v2574, %v2580
  %v2583 = vadd.f32 %v2575, %v2580
  %v2584 = vld [vmem:[%s19] sm:$0xff]
  %v2585 = vld [vmem:[%s19 + $0x8] sm:$0xff]
  %v2586 = vld [vmem:[%s19 + $0x10] sm:$0xff]
  %v2587 = vld [vmem:[%s19 + $0x18] sm:$0xff]
  %v2588 = vld [vmem:[%s20] sm:$0x1]
  %v2590 = vlaneseq
  %v2591 = vshrl.u32 %v2590, 7
  %v2592 = vsub.s32 0, %v2591
  %v2593 = vrot.slane %v2588, %v2592
  %v2596 = vsel %vm191, %v2582, 0
  %v2599 = vsel %vm191, %v2583, 0
  %2601 = vmatprep.subr.mxu0 0.0
  %2602 = vmatpush1.msra.mxu0 0.0
  %2603 = vmatprep.subr.mxu0 0.0
  %2604 = vmatpush1.msra.mxu0 0.0
  %2605 = vmatprep.subr.mxu0 0.0
  %2606 = vmatpush1.msra.mxu0 0.0
  %2607 = vmatprep.subr.mxu0 0.0
  %2608 = vmatpush1.msra.mxu0 0.0
  %2609 = vmatprep.subr.mxu0 0.0
  %2610 = vmatpush1.msra.mxu0 0.0
  %2611 = vmatprep.subr.mxu0 0.0
  %2612 = vmatpush1.msra.mxu0 0.0
  %2613 = vmatprep.subr.mxu0 0.0
  %2614 = vmatpush1.msra.mxu0 0.0
  %2615 = vmatprep.subr.mxu0 0.0
  %2616 = vmatpush1.msra.mxu0 0.0
  %2617 = vmatprep.subr.mxu0 0.0
  %2618 = vmatpush1.msra.mxu0 0.0
  %2619 = vmatprep.subr.mxu0 0.0
  %2620 = vmatpush1.msra.mxu0 0.0
  %2621 = vmatprep.subr.mxu0 0.0
  %2622 = vmatpush1.msra.mxu0 0.0
  %2623 = vmatprep.subr.mxu0 0.0
  %2624 = vmatpush1.msra.mxu0 0.0
  %2625 = vmatprep.subr.mxu0 0.0
  %2626 = vmatpush1.msra.mxu0 %v2587
  %2627 = vmatprep.subr.mxu0 0.0
  %2628 = vmatpush1.msra.mxu0 %v2586
  %2629 = vmatprep.subr.mxu0 0.0
  %2630 = vmatpush1.msra.mxu0 %v2585
  %2631 = vmatprep.subr.mxu0 0.0
  %2632 = vmatpush1.msra.mxu0 %v2584
  %2633 = vmatprep.subr.mxu0 0.0
  %2634 = vmatpush2.msra.mxu0 0.0
  %2635 = vmatprep.subr.mxu0 0.0
  %2636 = vmatpush2.msra.mxu0 0.0
  %2637 = vmatprep.subr.mxu0 0.0
  %2638 = vmatpush2.msra.mxu0 0.0
  %2639 = vmatprep.subr.mxu0 0.0
  %2640 = vmatpush2.msra.mxu0 0.0
  %2641 = vmatprep.subr.mxu0 0.0
  %2642 = vmatpush2.msra.mxu0 0.0
  %2643 = vmatprep.subr.mxu0 0.0
  %2644 = vmatpush2.msra.mxu0 0.0
  %2645 = vmatprep.subr.mxu0 0.0
  %2646 = vmatpush2.msra.mxu0 0.0
  %2647 = vmatprep.subr.mxu0 0.0
  %2648 = vmatpush2.msra.mxu0 0.0
  %2649 = vmatprep.subr.mxu0 0.0
  %2650 = vmatpush2.msra.mxu0 0.0
  %2651 = vmatprep.subr.mxu0 0.0
  %2652 = vmatpush2.msra.mxu0 0.0
  %2653 = vmatprep.subr.mxu0 0.0
  %2654 = vmatpush2.msra.mxu0 0.0
  %2655 = vmatprep.subr.mxu0 0.0
  %2656 = vmatpush2.msra.mxu0 0.0
  %2657 = vmatprep.subr.mxu0 0.0
  %2658 = vmatpush2.msra.mxu0 0.0
  %2659 = vmatprep.subr.mxu0 0.0
  %2660 = vmatpush2.msra.mxu0 0.0
  %2661 = vmatprep.subr.mxu0 0.0
  %2662 = vmatpush2.msra.mxu0 0.0
  %2663 = vmatprep.subr.mxu0 0.0
  %2664 = vmatpush2.msra.mxu0 0.0
  %2665 = vmatprep.mubr.f32.mxu0 0.0
  %2666 = vmatmul.mubr.f32.gmra.mxu0 %v2596
  %v2667 = vpop.f32.mrf.mxu0
  %v2668 = vadd.f32 %v2593, %v2667
  %v2669 = vpop.f32.mrf.mxu0
  %2670 = vmatprep.mubr.f32.mxu0 0.0
  %2671 = vmatmul.mubr.f32.gmra.mxu0 %v2599
  %v2672 = vpop.f32.mrf.mxu0
  %v2673 = vadd.f32 %v2593, %v2672
  %v2674 = vpop.f32.mrf.mxu0
  %2675 = vdwg.mxu0
  %v2676 = vtanh.pop %v2668
  %v2677 = vtanh.pop %v2673
  %v2678 = vld [vmem:[%s21] sm:$0xff]
  %v2679 = vld [vmem:[%s21 + $0x8] sm:$0xff]
  %v2680 = vld [vmem:[%s21 + $0x10] sm:$0xff]
  %v2681 = vld [vmem:[%s21 + $0x18] sm:$0xff]
  %v2682 = vld [vmem:[%s22] sm:$0x1]
  %v2684 = vlaneseq
  %v2685 = vshrl.u32 %v2684, 7
  %v2686 = vsub.s32 0, %v2685
  %v2687 = vrot.slane %v2682, %v2686
  %v2690 = vsel %vm191, %v2676, 0
  %v2693 = vsel %vm191, %v2677, 0
  %2695 = vmatprep.subr.mxu0 0.0
  %2696 = vmatpush1.msra.mxu0 0.0
  %2697 = vmatprep.subr.mxu0 0.0
  %2698 = vmatpush1.msra.mxu0 0.0
  %2699 = vmatprep.subr.mxu0 0.0
  %2700 = vmatpush1.msra.mxu0 0.0
  %2701 = vmatprep.subr.mxu0 0.0
  %2702 = vmatpush1.msra.mxu0 0.0
  %2703 = vmatprep.subr.mxu0 0.0
  %2704 = vmatpush1.msra.mxu0 0.0
  %2705 = vmatprep.subr.mxu0 0.0
  %2706 = vmatpush1.msra.mxu0 0.0
  %2707 = vmatprep.subr.mxu0 0.0
  %2708 = vmatpush1.msra.mxu0 0.0
  %2709 = vmatprep.subr.mxu0 0.0
  %2710 = vmatpush1.msra.mxu0 0.0
  %2711 = vmatprep.subr.mxu0 0.0
  %2712 = vmatpush1.msra.mxu0 0.0
  %2713 = vmatprep.subr.mxu0 0.0
  %2714 = vmatpush1.msra.mxu0 0.0
  %2715 = vmatprep.subr.mxu0 0.0
  %2716 = vmatpush1.msra.mxu0 0.0
  %2717 = vmatprep.subr.mxu0 0.0
  %2718 = vmatpush1.msra.mxu0 0.0
  %2719 = vmatprep.subr.mxu0 0.0
  %2720 = vmatpush1.msra.mxu0 %v2681
  %2721 = vmatprep.subr.mxu0 0.0
  %2722 = vmatpush1.msra.mxu0 %v2680
  %2723 = vmatprep.subr.mxu0 0.0
  %2724 = vmatpush1.msra.mxu0 %v2679
  %2725 = vmatprep.subr.mxu0 0.0
  %2726 = vmatpush1.msra.mxu0 %v2678
  %2727 = vmatprep.subr.mxu0 0.0
  %2728 = vmatpush2.msra.mxu0 0.0
  %2729 = vmatprep.subr.mxu0 0.0
  %2730 = vmatpush2.msra.mxu0 0.0
  %2731 = vmatprep.subr.mxu0 0.0
  %2732 = vmatpush2.msra.mxu0 0.0
  %2733 = vmatprep.subr.mxu0 0.0
  %2734 = vmatpush2.msra.mxu0 0.0
  %2735 = vmatprep.subr.mxu0 0.0
  %2736 = vmatpush2.msra.mxu0 0.0
  %2737 = vmatprep.subr.mxu0 0.0
  %2738 = vmatpush2.msra.mxu0 0.0
  %2739 = vmatprep.subr.mxu0 0.0
  %2740 = vmatpush2.msra.mxu0 0.0
  %2741 = vmatprep.subr.mxu0 0.0
  %2742 = vmatpush2.msra.mxu0 0.0
  %2743 = vmatprep.subr.mxu0 0.0
  %2744 = vmatpush2.msra.mxu0 0.0
  %2745 = vmatprep.subr.mxu0 0.0
  %2746 = vmatpush2.msra.mxu0 0.0
  %2747 = vmatprep.subr.mxu0 0.0
  %2748 = vmatpush2.msra.mxu0 0.0
  %2749 = vmatprep.subr.mxu0 0.0
  %2750 = vmatpush2.msra.mxu0 0.0
  %2751 = vmatprep.subr.mxu0 0.0
  %2752 = vmatpush2.msra.mxu0 0.0
  %2753 = vmatprep.subr.mxu0 0.0
  %2754 = vmatpush2.msra.mxu0 0.0
  %2755 = vmatprep.subr.mxu0 0.0
  %2756 = vmatpush2.msra.mxu0 0.0
  %2757 = vmatprep.subr.mxu0 0.0
  %2758 = vmatpush2.msra.mxu0 0.0
  %2759 = vmatprep.mubr.f32.mxu0 0.0
  %2760 = vmatmul.mubr.f32.gmra.mxu0 %v2690
  %v2761 = vpop.f32.mrf.mxu0
  %v2762 = vadd.f32 %v2687, %v2761
  %v2763 = vpop.f32.mrf.mxu0
  %2764 = vmatprep.mubr.f32.mxu0 0.0
  %2765 = vmatmul.mubr.f32.gmra.mxu0 %v2693
  %v2766 = vpop.f32.mrf.mxu0
  %v2767 = vadd.f32 %v2687, %v2766
  %v2768 = vpop.f32.mrf.mxu0
  %2769 = vdwg.mxu0
  %2770 = vst [vmem:[%s23] sm:$0xff] %v2762
  %2771 = vst [vmem:[%s23 + $0x8] sm:$0xff] %v2767
  // Predicated region
  $region94: #{bert_classifier_forward.1} parent=0 // pred_check
    _
  $region95: #{bert_classifier_forward.1} parent=0 // pred_check_branch
    %2773 = sbr.rel (0) target = $region97
  $region96: #{bert_classifier_forward.1} parent=0 // pred_region
    _
  $region97: #{bert_classifier_forward.1} parent=0 // pred_fallthru
    _
  // Predicated region
  $region98: #{bert_classifier_forward.1} parent=0 // pred_check
    _
  $region99: #{bert_classifier_forward.1} parent=0 // pred_check_branch
    %2775 = sbr.rel (0) target = $region101
  $region100: #{bert_classifier_forward.1} parent=0 // pred_region
    _
  $region101: #{bert_classifier_forward.1} parent=0 // pred_fallthru
    _

</llo_original>
